<compile_context>
chip_gen: v6e
topology: v6e:2x2x1
jax: 0.10.0
libtpu: 0.0.40
codegen_flags: <defaults>
</compile_context>

<pallas_src>
import functools

import jax
import jax.numpy as jnp
from jax import lax
from jax.experimental import pallas as pl
from jax.experimental.pallas import tpu as pltpu


def _filter_predictor_kernel(c_ref, s_ref, cw_ref, cb_ref, fw_ref, fb_ref,
                             out_ref, comp_ref, cacc_ref, *, n_content, inv_hw):
    b = pl.program_id(0)                 # image index; b == n_content -> style image
    t = pl.program_id(1)                 # spatial h-tile index
    n_h = pl.num_programs(1)
    _, TH, W, _ = c_ref.shape

    @pl.when(jnp.logical_and(b == 0, t == 0))
    def _init_batch_acc():
        cacc_ref[...] = jnp.zeros_like(cacc_ref)

    @pl.when(t == 0)
    def _reset_image_components():
        comp_ref[...] = jnp.zeros_like(comp_ref)

    def accumulate(x):
        # x: (TH, W, Cin) f32, already pre-scaled by 1/(H*W).
        # comp_ref rows: 0=S  1=R0  2=RN  3=C0  4=CN  5=c00  6=c0N  7=cN0  8=cNN
        row_sum = jnp.sum(x, axis=0)                                    # (W, Cin)
        comp_ref[0:1, :] += jnp.sum(row_sum, axis=0, keepdims=True)     # total sum S
        comp_ref[3:4, :] += row_sum[0:1, :]                             # first-column sum
        comp_ref[4:5, :] += row_sum[W - 1:W, :]                         # last-column sum

        @pl.when(t == 0)
        def _first_image_row():
            r0 = x[0]                                                   # (W, Cin)
            comp_ref[1:2, :] = jnp.sum(r0, axis=0, keepdims=True)       # first-row sum
            comp_ref[5:6, :] = r0[0:1, :]                               # corner (0, 0)
            comp_ref[6:7, :] = r0[W - 1:W, :]                           # corner (0, W-1)

        @pl.when(t == n_h - 1)
        def _last_image_row():
            rN = x[TH - 1]
            comp_ref[2:3, :] = jnp.sum(rN, axis=0, keepdims=True)       # last-row sum
            comp_ref[7:8, :] = rN[0:1, :]                               # corner (H-1, 0)
            comp_ref[8:9, :] = rN[W - 1:W, :]                           # corner (H-1, W-1)

    @pl.when(b < n_content)
    def _content_tile():
        accumulate(c_ref[0].astype(jnp.float32) * inv_hw)

    @pl.when(b == n_content)
    def _style_tile():
        accumulate(s_ref[0].astype(jnp.float32) * inv_hw)

    @pl.when(t == n_h - 1)
    def _finish_image():
        S, R0, RN = comp_ref[0:1, :], comp_ref[1:2, :], comp_ref[2:3, :]
        C0, CN = comp_ref[3:4, :], comp_ref[4:5, :]
        c00, c0N = comp_ref[5:6, :], comp_ref[6:7, :]
        cN0, cNN = comp_ref[7:8, :], comp_ref[8:9, :]
        # mean_hw(conv3x3_pad1(x))[o] = sum_{tap,i} tap_mean[tap][i] * Wk[tap,i,o] + b[o].
        # Zero padding => each tap mean = full mean minus the excluded edge row/column
        # (plus the doubly-excluded corner): inclusion-exclusion.
        taps = [
            S - RN - CN + cNN,   # tap (kh=0, kw=0)
            S - RN,              # (0, 1)
            S - RN - C0 + cN0,   # (0, 2)
            S - CN,              # (1, 0)
            S,                   # (1, 1)
            S - C0,              # (1, 2)
            S - R0 - CN + c0N,   # (2, 0)
            S - R0,              # (2, 1)
            S - R0 - C0 + c00,   # (2, 2)
        ]
        tapvec = jnp.concatenate(taps, axis=1)                          # (1, 9*Cin)

        @pl.when(b < n_content)
        def _accumulate_content_mean():
            cacc_ref[...] += tapvec * (1.0 / n_content)

        @pl.when(b == n_content)
        def _finalize():
            # Single small dot for [content-mean; style] together, then the FC.
            both = jnp.concatenate([cacc_ref[...], tapvec], axis=0)     # (2, 9*Cin)
            pooled = jnp.dot(both, cw_ref[...],
                             preferred_element_type=jnp.float32) + cb_ref[...]   # (2, Cout)
            cat = jnp.concatenate([pooled[0:1, :], pooled[1:2, :]], axis=1)      # (1, 2*Cout)
            filt = jnp.dot(cat, fw_ref[...],
                           preferred_element_type=jnp.float32) + fb_ref[...]     # (1, Cout^2)
            out_ref[...] = filt.astype(out_ref.dtype)                   # lane-dense store


def _pick_tile_h(H, W, Cin, itemsize, budget_bytes=2 << 20):
    """Largest divisor of H whose (TH, W, Cin) block stays within ~budget_bytes."""
    best = 1
    for th in range(1, H + 1):
        if H % th == 0 and th * W * Cin * itemsize <= budget_bytes:
            best = th
    return best


def filter_predictor_pallas(content_nhwc, style_nhwc, conv_w_oihw, conv_b,
                            fc_w, fc_b, style_weight=1.0, tile_h=None):
    """FilterPredictor.compute(content, style, 0) followed by forward([style_weight]).

    content_nhwc: (Nc, H, W, vgg_c), style_nhwc: (1, H, W, vgg_c) — channels-last, produced
    NHWC upstream (no layout change / concat is done here).  f32 or bf16.
    Returns the filter (1, inner_c, inner_c, 1), already scaled by style_weight.
    """
    Nc, H, W, Cin = content_nhwc.shape
    Ns = style_nhwc.shape[0]
    # torch.cat([content(1,C), style(Ns,C)], dim=1) in the module requires Ns == 1
    assert Ns == 1
    assert style_nhwc.shape[1:] == (H, W, Cin)
    Cout = conv_w_oihw.shape[0]                      # inner_channel

    if tile_h is None:
        tile_h = _pick_tile_h(H, W, Cin, jnp.dtype(content_nhwc.dtype).itemsize)
    assert H % tile_h == 0
    n_h = H // tile_h

    # OIHW -> (kh*kw*Cin, Cout): tap-major / channel-minor, matching the kernel's tap order.
    conv_w_k = jnp.transpose(conv_w_oihw, (2, 3, 1, 0)).reshape(9 * Cin, Cout).astype(jnp.float32)
    conv_b_k = conv_b.reshape(1, Cout).astype(jnp.float32)
    # forward(): filter * style_weight — fold the scale into the FC weight & bias.
    sw = jnp.float32(style_weight)
    fc_w_k = (jnp.transpose(fc_w, (1, 0)) * sw).astype(jnp.float32)     # (2*Cout, Cout*Cout)
    fc_b_k = (fc_b.reshape(1, Cout * Cout) * sw).astype(jnp.float32)

    def content_map(b, t):
        # Clamp during the style phase so the content block index never changes there
        # (no redundant content DMAs while the style image streams).
        return (jnp.minimum(b, Nc - 1), jnp.where(b == Nc, n_h - 1, t), 0, 0)

    def style_map(b, t):
        # Constant during the content phase (fetched once, stays resident); sweeps its
        # h-tiles only while b == Nc.
        return (0, jnp.where(b == Nc, t, 0), 0, 0)

    const = lambda b, t: (0, 0)

    grid_spec = pltpu.PrefetchScalarGridSpec(
        num_scalar_prefetch=0,
        grid=(Nc + 1, n_h),
        in_specs=[
            pl.BlockSpec((1, tile_h, W, Cin), content_map),     # content h-tile stream
            pl.BlockSpec((1, tile_h, W, Cin), style_map),       # style h-tile stream
            pl.BlockSpec((9 * Cin, Cout), const),               # conv weight (resident)
            pl.BlockSpec((1, Cout), const),                     # conv bias
            pl.BlockSpec((2 * Cout, Cout * Cout), const),       # FC weight (resident)
            pl.BlockSpec((1, Cout * Cout), const),              # FC bias
        ],
        out_specs=pl.BlockSpec((1, Cout * Cout), const),        # lane-dense (1, 1024)
        scratch_shapes=[
            pltpu.VMEM((9, Cin), jnp.float32),                  # per-image I-E components
            pltpu.VMEM((1, 9 * Cin), jnp.float32),              # content batch-mean tapvec
        ],
    )
    # TODO(synk): on v7x the streaming phase could additionally use both TensorCores by
    # emitting per-image tap rows with a "parallel" image axis and doing the mean+FC in a
    # tiny epilogue; kept single-core here for simplicity (no effect on v5e/v6e).
    filt = pl.pallas_call(
        functools.partial(_filter_predictor_kernel,
                          n_content=Nc, inv_hw=1.0 / float(H * W)),
        out_shape=jax.ShapeDtypeStruct((1, Cout * Cout), jnp.float32),
        grid_spec=grid_spec,
        compiler_params=pltpu.CompilerParams(
            dimension_semantics=("arbitrary", "arbitrary")),
    )(content_nhwc, style_nhwc, conv_w_k, conv_b_k, fc_w_k, fc_b_k)

    # torch: filter_.view(-1, inner, inner).unsqueeze(3); forward returns filter * style_weight
    return filt.reshape(1, Cout, Cout, 1)


# ------------------------- pure-JAX reference (matches torch semantics) -------------------------
def filter_predictor_ref(content_nchw, style_nchw, conv_w, conv_b, fc_w, fc_b, style_weight=1.0):
    def down(x):
        y = lax.conv_general_dilated(
            x, conv_w, (1, 1), ((1, 1), (1, 1)),
            dimension_numbers=("NCHW", "OIHW", "NCHW"),
            precision=lax.Precision.HIGHEST)
        return y + conv_b[None, :, None, None]

    c = down(content_nchw)
    c = jnp.mean(c.reshape(c.shape[0], c.shape[1], -1), axis=2)   # (Nc, inner)
    c = jnp.mean(c, axis=0, keepdims=True)                        # (1, inner)
    s = down(style_nchw)
    s = jnp.mean(s.reshape(s.shape[0], s.shape[1], -1), axis=2)   # (1, inner)
    filt = jnp.dot(jnp.concatenate([c, s], axis=1), fc_w.T,
                   precision=lax.Precision.HIGHEST) + fc_b        # (1, inner*inner)
    inner = conv_w.shape[0]
    filt = filt.reshape(-1, inner, inner)[..., None]              # (1, inner, inner, 1)
    return filt * style_weight                                    # forward(), style_num = 1


if __name__ == "__main__":
    key = jax.random.PRNGKey(0)
    ks = jax.random.split(key, 6)

    VGG_C, INNER_C = 512, 32          # module defaults (FC is Linear(64, 1024))
    Nc, Ns, H, W = 2, 1, 16, 16       # small batch / spatial for the test

    # Feature maps arrive channels-last (NHWC) from the upstream producer — no wrapper transpose.
    content = jax.random.normal(ks[0], (Nc, H, W, VGG_C), jnp.float32)
    style = jax.random.normal(ks[1], (Ns, H, W, VGG_C), jnp.float32)
    conv_w = 0.05 * jax.random.normal(ks[2], (INNER_C, VGG_C, 3, 3), jnp.float32)
    conv_b = 0.1 * jax.random.normal(ks[3], (INNER_C,), jnp.float32)
    fc_w = 0.05 * jax.random.normal(ks[4], (INNER_C * INNER_C, 2 * INNER_C), jnp.float32)
    fc_b = 0.1 * jax.random.normal(ks[5], (INNER_C * INNER_C,), jnp.float32)
    style_weight = 1.0   # forward(None) -> style_weight = [1.0]
    # TODO(synk): style_num > 1 (weighted sum of several cached filters in forward()) is not
    # modelled; the module default style_num=1 folds the scale into the FC weights/bias.

    # tile_h=8 -> 2 spatial tiles per image, exercising the cross-tile accumulation path.
    out = filter_predictor_pallas(content, style, conv_w, conv_b, fc_w, fc_b,
                                  style_weight, tile_h=8)
    out = jax.block_until_ready(out)

    ref = filter_predictor_ref(jnp.transpose(content, (0, 3, 1, 2)),
                               jnp.transpose(style, (0, 3, 1, 2)),
                               conv_w, conv_b, fc_w, fc_b, style_weight)
    ref = jax.block_until_ready(ref)

    assert out.shape == (1, INNER_C, INNER_C, 1), out.shape
    max_err = float(jnp.max(jnp.abs(out - ref)))
    assert jnp.allclose(out, ref, rtol=2e-2, atol=2e-2), max_err
    print("KERNEL_OK")
</pallas_src>

<mosaic_0001>
module attributes {stable_mosaic.version = 11 : i64} {
  func.func @_filter_predictor_kernel(%arg0: i32, %arg1: i32, %arg2: memref<1x8x16x512xf32, #tpu.memory_space<vmem>>, %arg3: memref<1x8x16x512xf32, #tpu.memory_space<vmem>>, %arg4: memref<4608x32xf32, #tpu.memory_space<vmem>>, %arg5: memref<1x32xf32, #tpu.memory_space<vmem>>, %arg6: memref<64x1024xf32, #tpu.memory_space<vmem>>, %arg7: memref<1x1024xf32, #tpu.memory_space<vmem>>, %arg8: memref<1x1024xf32, #tpu.memory_space<vmem>>, %arg9: memref<9x512xf32, #tpu.memory_space<vmem>>, %arg10: memref<1x4608xf32, #tpu.memory_space<vmem>>) attributes {dimension_semantics = [#tpu.dimension_semantics<arbitrary>, #tpu.dimension_semantics<arbitrary>], iteration_bounds = array<i64: 3, 2>, scalar_prefetch = 0 : i64, scratch_operands = 2 : i64, tpu.core_type = #tpu.core_type<tc>, window_params = [{transform_indices = @transform_0, window_bounds = array<i64: 1, 8, 16, 512>}, {transform_indices = @transform_1, window_bounds = array<i64: 1, 8, 16, 512>}, {pipeline_mode = #tpu.pipeline_mode<synchronous>, transform_indices = @transform_2, window_bounds = array<i64: 4608, 32>}, {pipeline_mode = #tpu.pipeline_mode<synchronous>, transform_indices = @transform_3, window_bounds = array<i64: 1, 32>}, {pipeline_mode = #tpu.pipeline_mode<synchronous>, transform_indices = @transform_4, window_bounds = array<i64: 64, 1024>}, {pipeline_mode = #tpu.pipeline_mode<synchronous>, transform_indices = @transform_5, window_bounds = array<i64: 1, 1024>}, {pipeline_mode = #tpu.pipeline_mode<synchronous>, transform_indices = @transform_6, window_bounds = array<i64: 1, 1024>}]} {
    %c0_i32 = arith.constant 0 : i32
    %0 = arith.cmpi eq, %arg0, %c0_i32 : i32
    %c0_i32_0 = arith.constant 0 : i32
    %1 = arith.cmpi eq, %arg1, %c0_i32_0 : i32
    %2 = arith.andi %0, %1 : i1
    %3 = arith.extui %2 : i1 to i32
    %c0_i32_1 = arith.constant 0 : i32
    %4 = arith.cmpi ne, %3, %c0_i32_1 : i32
    scf.if %4 {
      %cst = arith.constant 0.000000e+00 : f32
      %17 = vector.broadcast %cst : f32 to vector<1x4608xf32>
      %c0 = arith.constant 0 : index
      %c0_8 = arith.constant 0 : index
      %18 = vector.load %arg10[%c0, %c0_8] : memref<1x4608xf32, #tpu.memory_space<vmem>>, vector<1x4608xf32>
      tpu.vector_store %arg10[%c0, %c0_8], %17 {strides = array<i32>} : memref<1x4608xf32, #tpu.memory_space<vmem>>, vector<1x4608xf32>,
    } else {
    }
    %c0_i32_2 = arith.constant 0 : i32
    %5 = arith.cmpi eq, %arg1, %c0_i32_2 : i32
    %6 = arith.extui %5 : i1 to i32
    %c0_i32_3 = arith.constant 0 : i32
    %7 = arith.cmpi ne, %6, %c0_i32_3 : i32
    scf.if %7 {
      %cst = arith.constant 0.000000e+00 : f32
      %17 = vector.broadcast %cst : f32 to vector<9x512xf32>
      %c0 = arith.constant 0 : index
      %c0_8 = arith.constant 0 : index
      %18 = vector.load %arg9[%c0, %c0_8] : memref<9x512xf32, #tpu.memory_space<vmem>>, vector<9x512xf32>
      tpu.vector_store %arg9[%c0, %c0_8], %17 {strides = array<i32>} : memref<9x512xf32, #tpu.memory_space<vmem>>, vector<9x512xf32>,
    } else {
    }
    %c2_i32 = arith.constant 2 : i32
    %8 = arith.cmpi slt, %arg0, %c2_i32 : i32
    %9 = arith.extui %8 : i1 to i32
    %c0_i32_4 = arith.constant 0 : i32
    %10 = arith.cmpi ne, %9, %c0_i32_4 : i32
    scf.if %10 {
      %c0 = arith.constant 0 : index
      %c0_8 = arith.constant 0 : index
      %c0_9 = arith.constant 0 : index
      %c0_10 = arith.constant 0 : index
      %17 = vector.load %arg2[%c0, %c0_8, %c0_9, %c0_10] : memref<1x8x16x512xf32, #tpu.memory_space<vmem>>, vector<1x8x16x512xf32>
      %18 = vector.shape_cast %17 : vector<1x8x16x512xf32> to vector<8x16x512xf32>
      %cst = arith.constant 3.906250e-03 : f32
      %19 = vector.broadcast %cst : f32 to vector<8x16x512xf32>
      %20 = arith.mulf %18, %19 : vector<8x16x512xf32>
      %cst_11 = arith.constant dense<0.000000e+00> : vector<16x512xf32>
      %21 = vector.multi_reduction <add>, %20, %cst_11 [0] : vector<8x16x512xf32> to vector<16x512xf32>
      %c0_12 = arith.constant 0 : index
      %c0_13 = arith.constant 0 : index
      %22 = vector.load %arg9[%c0_12, %c0_13] : memref<9x512xf32, #tpu.memory_space<vmem>>, vector<1x512xf32>
      %cst_14 = arith.constant dense<0.000000e+00> : vector<512xf32>
      %23 = vector.multi_reduction <add>, %21, %cst_14 [0] : vector<16x512xf32> to vector<512xf32>
      %24 = vector.shape_cast %23 : vector<512xf32> to vector<1x512xf32>
      %25 = arith.addf %22, %24 : vector<1x512xf32>
      %c0_15 = arith.constant 0 : index
      %c0_16 = arith.constant 0 : index
      %26 = vector.load %arg9[%c0_15, %c0_16] : memref<9x512xf32, #tpu.memory_space<vmem>>, vector<1x512xf32>
      tpu.vector_store %arg9[%c0_15, %c0_16], %25 {strides = array<i32>} : memref<9x512xf32, #tpu.memory_space<vmem>>, vector<1x512xf32>,
      %c3 = arith.constant 3 : index
      %c0_17 = arith.constant 0 : index
      %27 = vector.load %arg9[%c3, %c0_17] : memref<9x512xf32, #tpu.memory_space<vmem>>, vector<1x512xf32>
      %28 = vector.extract_strided_slice %21 {offsets = [0, 0], sizes = [1, 512], strides = [1, 1]} : vector<16x512xf32> to vector<1x512xf32>
      %29 = arith.addf %27, %28 : vector<1x512xf32>
      %c3_18 = arith.constant 3 : index
      %c0_19 = arith.constant 0 : index
      %30 = vector.load %arg9[%c3_18, %c0_19] : memref<9x512xf32, #tpu.memory_space<vmem>>, vector<1x512xf32>
      tpu.vector_store %arg9[%c3_18, %c0_19], %29 {strides = array<i32>} : memref<9x512xf32, #tpu.memory_space<vmem>>, vector<1x512xf32>,
      %c4 = arith.constant 4 : index
      %c0_20 = arith.constant 0 : index
      %31 = vector.load %arg9[%c4, %c0_20] : memref<9x512xf32, #tpu.memory_space<vmem>>, vector<1x512xf32>
      %32 = vector.extract_strided_slice %21 {offsets = [15, 0], sizes = [1, 512], strides = [1, 1]} : vector<16x512xf32> to vector<1x512xf32>
      %33 = arith.addf %31, %32 : vector<1x512xf32>
      %c4_21 = arith.constant 4 : index
      %c0_22 = arith.constant 0 : index
      %34 = vector.load %arg9[%c4_21, %c0_22] : memref<9x512xf32, #tpu.memory_space<vmem>>, vector<1x512xf32>
      tpu.vector_store %arg9[%c4_21, %c0_22], %33 {strides = array<i32>} : memref<9x512xf32, #tpu.memory_space<vmem>>, vector<1x512xf32>,
      %c0_i32_23 = arith.constant 0 : i32
      %35 = arith.cmpi eq, %arg1, %c0_i32_23 : i32
      %36 = arith.extui %35 : i1 to i32
      %c0_i32_24 = arith.constant 0 : i32
      %37 = arith.cmpi ne, %36, %c0_i32_24 : i32
      scf.if %37 {
        %41 = vector.extract_strided_slice %20 {offsets = [0, 0, 0], sizes = [1, 16, 512], strides = [1, 1, 1]} : vector<8x16x512xf32> to vector<1x16x512xf32>
        %42 = vector.shape_cast %41 : vector<1x16x512xf32> to vector<16x512xf32>
        %cst_27 = arith.constant dense<0.000000e+00> : vector<512xf32>
        %43 = vector.multi_reduction <add>, %42, %cst_27 [0] : vector<16x512xf32> to vector<512xf32>
        %44 = vector.shape_cast %43 : vector<512xf32> to vector<1x512xf32>
        %c1 = arith.constant 1 : index
        %c0_28 = arith.constant 0 : index
        %45 = vector.load %arg9[%c1, %c0_28] : memref<9x512xf32, #tpu.memory_space<vmem>>, vector<1x512xf32>
        tpu.vector_store %arg9[%c1, %c0_28], %44 {strides = array<i32>} : memref<9x512xf32, #tpu.memory_space<vmem>>, vector<1x512xf32>,
        %46 = vector.extract_strided_slice %42 {offsets = [0, 0], sizes = [1, 512], strides = [1, 1]} : vector<16x512xf32> to vector<1x512xf32>
        %c5 = arith.constant 5 : index
        %c0_29 = arith.constant 0 : index
        %47 = vector.load %arg9[%c5, %c0_29] : memref<9x512xf32, #tpu.memory_space<vmem>>, vector<1x512xf32>
        tpu.vector_store %arg9[%c5, %c0_29], %46 {strides = array<i32>} : memref<9x512xf32, #tpu.memory_space<vmem>>, vector<1x512xf32>,
        %48 = vector.extract_strided_slice %42 {offsets = [15, 0], sizes = [1, 512], strides = [1, 1]} : vector<16x512xf32> to vector<1x512xf32>
        %c6 = arith.constant 6 : index
        %c0_30 = arith.constant 0 : index
        %49 = vector.load %arg9[%c6, %c0_30] : memref<9x512xf32, #tpu.memory_space<vmem>>, vector<1x512xf32>
        tpu.vector_store %arg9[%c6, %c0_30], %48 {strides = array<i32>} : memref<9x512xf32, #tpu.memory_space<vmem>>, vector<1x512xf32>,
      } else {
      }
      %c1_i32_25 = arith.constant 1 : i32
      %38 = arith.cmpi eq, %arg1, %c1_i32_25 : i32
      %39 = arith.extui %38 : i1 to i32
      %c0_i32_26 = arith.constant 0 : i32
      %40 = arith.cmpi ne, %39, %c0_i32_26 : i32
      scf.if %40 {
        %41 = vector.extract_strided_slice %20 {offsets = [7, 0, 0], sizes = [1, 16, 512], strides = [1, 1, 1]} : vector<8x16x512xf32> to vector<1x16x512xf32>
        %42 = vector.shape_cast %41 : vector<1x16x512xf32> to vector<16x512xf32>
        %cst_27 = arith.constant dense<0.000000e+00> : vector<512xf32>
        %43 = vector.multi_reduction <add>, %42, %cst_27 [0] : vector<16x512xf32> to vector<512xf32>
        %44 = vector.shape_cast %43 : vector<512xf32> to vector<1x512xf32>
        %c2 = arith.constant 2 : index
        %c0_28 = arith.constant 0 : index
        %45 = vector.load %arg9[%c2, %c0_28] : memref<9x512xf32, #tpu.memory_space<vmem>>, vector<1x512xf32>
        tpu.vector_store %arg9[%c2, %c0_28], %44 {strides = array<i32>} : memref<9x512xf32, #tpu.memory_space<vmem>>, vector<1x512xf32>,
        %46 = vector.extract_strided_slice %42 {offsets = [0, 0], sizes = [1, 512], strides = [1, 1]} : vector<16x512xf32> to vector<1x512xf32>
        %c7 = arith.constant 7 : index
        %c0_29 = arith.constant 0 : index
        %47 = vector.load %arg9[%c7, %c0_29] : memref<9x512xf32, #tpu.memory_space<vmem>>, vector<1x512xf32>
        tpu.vector_store %arg9[%c7, %c0_29], %46 {strides = array<i32>} : memref<9x512xf32, #tpu.memory_space<vmem>>, vector<1x512xf32>,
        %48 = vector.extract_strided_slice %42 {offsets = [15, 0], sizes = [1, 512], strides = [1, 1]} : vector<16x512xf32> to vector<1x512xf32>
        %c8 = arith.constant 8 : index
        %c0_30 = arith.constant 0 : index
        %49 = vector.load %arg9[%c8, %c0_30] : memref<9x512xf32, #tpu.memory_space<vmem>>, vector<1x512xf32>
        tpu.vector_store %arg9[%c8, %c0_30], %48 {strides = array<i32>} : memref<9x512xf32, #tpu.memory_space<vmem>>, vector<1x512xf32>,
      } else {
      }
    } else {
    }
    %c2_i32_5 = arith.constant 2 : i32
    %11 = arith.cmpi eq, %arg0, %c2_i32_5 : i32
    %12 = arith.extui %11 : i1 to i32
    %c0_i32_6 = arith.constant 0 : i32
    %13 = arith.cmpi ne, %12, %c0_i32_6 : i32
    scf.if %13 {
      %c0 = arith.constant 0 : index
      %c0_8 = arith.constant 0 : index
      %c0_9 = arith.constant 0 : index
      %c0_10 = arith.constant 0 : index
      %17 = vector.load %arg3[%c0, %c0_8, %c0_9, %c0_10] : memref<1x8x16x512xf32, #tpu.memory_space<vmem>>, vector<1x8x16x512xf32>
      %18 = vector.shape_cast %17 : vector<1x8x16x512xf32> to vector<8x16x512xf32>
      %cst = arith.constant 3.906250e-03 : f32
      %19 = vector.broadcast %cst : f32 to vector<8x16x512xf32>
      %20 = arith.mulf %18, %19 : vector<8x16x512xf32>
      %cst_11 = arith.constant dense<0.000000e+00> : vector<16x512xf32>
      %21 = vector.multi_reduction <add>, %20, %cst_11 [0] : vector<8x16x512xf32> to vector<16x512xf32>
      %c0_12 = arith.constant 0 : index
      %c0_13 = arith.constant 0 : index
      %22 = vector.load %arg9[%c0_12, %c0_13] : memref<9x512xf32, #tpu.memory_space<vmem>>, vector<1x512xf32>
      %cst_14 = arith.constant dense<0.000000e+00> : vector<512xf32>
      %23 = vector.multi_reduction <add>, %21, %cst_14 [0] : vector<16x512xf32> to vector<512xf32>
      %24 = vector.shape_cast %23 : vector<512xf32> to vector<1x512xf32>
      %25 = arith.addf %22, %24 : vector<1x512xf32>
      %c0_15 = arith.constant 0 : index
      %c0_16 = arith.constant 0 : index
      %26 = vector.load %arg9[%c0_15, %c0_16] : memref<9x512xf32, #tpu.memory_space<vmem>>, vector<1x512xf32>
      tpu.vector_store %arg9[%c0_15, %c0_16], %25 {strides = array<i32>} : memref<9x512xf32, #tpu.memory_space<vmem>>, vector<1x512xf32>,
      %c3 = arith.constant 3 : index
      %c0_17 = arith.constant 0 : index
      %27 = vector.load %arg9[%c3, %c0_17] : memref<9x512xf32, #tpu.memory_space<vmem>>, vector<1x512xf32>
      %28 = vector.extract_strided_slice %21 {offsets = [0, 0], sizes = [1, 512], strides = [1, 1]} : vector<16x512xf32> to vector<1x512xf32>
      %29 = arith.addf %27, %28 : vector<1x512xf32>
      %c3_18 = arith.constant 3 : index
      %c0_19 = arith.constant 0 : index
      %30 = vector.load %arg9[%c3_18, %c0_19] : memref<9x512xf32, #tpu.memory_space<vmem>>, vector<1x512xf32>
      tpu.vector_store %arg9[%c3_18, %c0_19], %29 {strides = array<i32>} : memref<9x512xf32, #tpu.memory_space<vmem>>, vector<1x512xf32>,
      %c4 = arith.constant 4 : index
      %c0_20 = arith.constant 0 : index
      %31 = vector.load %arg9[%c4, %c0_20] : memref<9x512xf32, #tpu.memory_space<vmem>>, vector<1x512xf32>
      %32 = vector.extract_strided_slice %21 {offsets = [15, 0], sizes = [1, 512], strides = [1, 1]} : vector<16x512xf32> to vector<1x512xf32>
      %33 = arith.addf %31, %32 : vector<1x512xf32>
      %c4_21 = arith.constant 4 : index
      %c0_22 = arith.constant 0 : index
      %34 = vector.load %arg9[%c4_21, %c0_22] : memref<9x512xf32, #tpu.memory_space<vmem>>, vector<1x512xf32>
      tpu.vector_store %arg9[%c4_21, %c0_22], %33 {strides = array<i32>} : memref<9x512xf32, #tpu.memory_space<vmem>>, vector<1x512xf32>,
      %c0_i32_23 = arith.constant 0 : i32
      %35 = arith.cmpi eq, %arg1, %c0_i32_23 : i32
      %36 = arith.extui %35 : i1 to i32
      %c0_i32_24 = arith.constant 0 : i32
      %37 = arith.cmpi ne, %36, %c0_i32_24 : i32
      scf.if %37 {
        %41 = vector.extract_strided_slice %20 {offsets = [0, 0, 0], sizes = [1, 16, 512], strides = [1, 1, 1]} : vector<8x16x512xf32> to vector<1x16x512xf32>
        %42 = vector.shape_cast %41 : vector<1x16x512xf32> to vector<16x512xf32>
        %cst_27 = arith.constant dense<0.000000e+00> : vector<512xf32>
        %43 = vector.multi_reduction <add>, %42, %cst_27 [0] : vector<16x512xf32> to vector<512xf32>
        %44 = vector.shape_cast %43 : vector<512xf32> to vector<1x512xf32>
        %c1 = arith.constant 1 : index
        %c0_28 = arith.constant 0 : index
        %45 = vector.load %arg9[%c1, %c0_28] : memref<9x512xf32, #tpu.memory_space<vmem>>, vector<1x512xf32>
        tpu.vector_store %arg9[%c1, %c0_28], %44 {strides = array<i32>} : memref<9x512xf32, #tpu.memory_space<vmem>>, vector<1x512xf32>,
        %46 = vector.extract_strided_slice %42 {offsets = [0, 0], sizes = [1, 512], strides = [1, 1]} : vector<16x512xf32> to vector<1x512xf32>
        %c5 = arith.constant 5 : index
        %c0_29 = arith.constant 0 : index
        %47 = vector.load %arg9[%c5, %c0_29] : memref<9x512xf32, #tpu.memory_space<vmem>>, vector<1x512xf32>
        tpu.vector_store %arg9[%c5, %c0_29], %46 {strides = array<i32>} : memref<9x512xf32, #tpu.memory_space<vmem>>, vector<1x512xf32>,
        %48 = vector.extract_strided_slice %42 {offsets = [15, 0], sizes = [1, 512], strides = [1, 1]} : vector<16x512xf32> to vector<1x512xf32>
        %c6 = arith.constant 6 : index
        %c0_30 = arith.constant 0 : index
        %49 = vector.load %arg9[%c6, %c0_30] : memref<9x512xf32, #tpu.memory_space<vmem>>, vector<1x512xf32>
        tpu.vector_store %arg9[%c6, %c0_30], %48 {strides = array<i32>} : memref<9x512xf32, #tpu.memory_space<vmem>>, vector<1x512xf32>,
      } else {
      }
      %c1_i32_25 = arith.constant 1 : i32
      %38 = arith.cmpi eq, %arg1, %c1_i32_25 : i32
      %39 = arith.extui %38 : i1 to i32
      %c0_i32_26 = arith.constant 0 : i32
      %40 = arith.cmpi ne, %39, %c0_i32_26 : i32
      scf.if %40 {
        %41 = vector.extract_strided_slice %20 {offsets = [7, 0, 0], sizes = [1, 16, 512], strides = [1, 1, 1]} : vector<8x16x512xf32> to vector<1x16x512xf32>
        %42 = vector.shape_cast %41 : vector<1x16x512xf32> to vector<16x512xf32>
        %cst_27 = arith.constant dense<0.000000e+00> : vector<512xf32>
        %43 = vector.multi_reduction <add>, %42, %cst_27 [0] : vector<16x512xf32> to vector<512xf32>
        %44 = vector.shape_cast %43 : vector<512xf32> to vector<1x512xf32>
        %c2 = arith.constant 2 : index
        %c0_28 = arith.constant 0 : index
        %45 = vector.load %arg9[%c2, %c0_28] : memref<9x512xf32, #tpu.memory_space<vmem>>, vector<1x512xf32>
        tpu.vector_store %arg9[%c2, %c0_28], %44 {strides = array<i32>} : memref<9x512xf32, #tpu.memory_space<vmem>>, vector<1x512xf32>,
        %46 = vector.extract_strided_slice %42 {offsets = [0, 0], sizes = [1, 512], strides = [1, 1]} : vector<16x512xf32> to vector<1x512xf32>
        %c7 = arith.constant 7 : index
        %c0_29 = arith.constant 0 : index
        %47 = vector.load %arg9[%c7, %c0_29] : memref<9x512xf32, #tpu.memory_space<vmem>>, vector<1x512xf32>
        tpu.vector_store %arg9[%c7, %c0_29], %46 {strides = array<i32>} : memref<9x512xf32, #tpu.memory_space<vmem>>, vector<1x512xf32>,
        %48 = vector.extract_strided_slice %42 {offsets = [15, 0], sizes = [1, 512], strides = [1, 1]} : vector<16x512xf32> to vector<1x512xf32>
        %c8 = arith.constant 8 : index
        %c0_30 = arith.constant 0 : index
        %49 = vector.load %arg9[%c8, %c0_30] : memref<9x512xf32, #tpu.memory_space<vmem>>, vector<1x512xf32>
        tpu.vector_store %arg9[%c8, %c0_30], %48 {strides = array<i32>} : memref<9x512xf32, #tpu.memory_space<vmem>>, vector<1x512xf32>,
      } else {
      }
    } else {
    }
    %c1_i32 = arith.constant 1 : i32
    %14 = arith.cmpi eq, %arg1, %c1_i32 : i32
    %15 = arith.extui %14 : i1 to i32
    %c0_i32_7 = arith.constant 0 : i32
    %16 = arith.cmpi ne, %15, %c0_i32_7 : i32
    scf.if %16 {
      %c0 = arith.constant 0 : index
      %c0_8 = arith.constant 0 : index
      %17 = vector.load %arg9[%c0, %c0_8] : memref<9x512xf32, #tpu.memory_space<vmem>>, vector<1x512xf32>
      %c1 = arith.constant 1 : index
      %c0_9 = arith.constant 0 : index
      %18 = vector.load %arg9[%c1, %c0_9] : memref<9x512xf32, #tpu.memory_space<vmem>>, vector<1x512xf32>
      %c2 = arith.constant 2 : index
      %c0_10 = arith.constant 0 : index
      %19 = vector.load %arg9[%c2, %c0_10] : memref<9x512xf32, #tpu.memory_space<vmem>>, vector<1x512xf32>
      %c3 = arith.constant 3 : index
      %c0_11 = arith.constant 0 : index
      %20 = vector.load %arg9[%c3, %c0_11] : memref<9x512xf32, #tpu.memory_space<vmem>>, vector<1x512xf32>
      %c4 = arith.constant 4 : index
      %c0_12 = arith.constant 0 : index
      %21 = vector.load %arg9[%c4, %c0_12] : memref<9x512xf32, #tpu.memory_space<vmem>>, vector<1x512xf32>
      %c5 = arith.constant 5 : index
      %c0_13 = arith.constant 0 : index
      %22 = vector.load %arg9[%c5, %c0_13] : memref<9x512xf32, #tpu.memory_space<vmem>>, vector<1x512xf32>
      %c6 = arith.constant 6 : index
      %c0_14 = arith.constant 0 : index
      %23 = vector.load %arg9[%c6, %c0_14] : memref<9x512xf32, #tpu.memory_space<vmem>>, vector<1x512xf32>
      %c7 = arith.constant 7 : index
      %c0_15 = arith.constant 0 : index
      %24 = vector.load %arg9[%c7, %c0_15] : memref<9x512xf32, #tpu.memory_space<vmem>>, vector<1x512xf32>
      %c8 = arith.constant 8 : index
      %c0_16 = arith.constant 0 : index
      %25 = vector.load %arg9[%c8, %c0_16] : memref<9x512xf32, #tpu.memory_space<vmem>>, vector<1x512xf32>
      %26 = arith.subf %17, %19 : vector<1x512xf32>
      %27 = arith.subf %26, %21 : vector<1x512xf32>
      %28 = arith.addf %27, %25 : vector<1x512xf32>
      %29 = arith.subf %17, %19 : vector<1x512xf32>
      %30 = arith.subf %17, %19 : vector<1x512xf32>
      %31 = arith.subf %30, %20 : vector<1x512xf32>
      %32 = arith.addf %31, %24 : vector<1x512xf32>
      %33 = arith.subf %17, %21 : vector<1x512xf32>
      %34 = arith.subf %17, %20 : vector<1x512xf32>
      %35 = arith.subf %17, %18 : vector<1x512xf32>
      %36 = arith.subf %35, %21 : vector<1x512xf32>
      %37 = arith.addf %36, %23 : vector<1x512xf32>
      %38 = arith.subf %17, %18 : vector<1x512xf32>
      %39 = arith.subf %17, %18 : vector<1x512xf32>
      %40 = arith.subf %39, %20 : vector<1x512xf32>
      %41 = arith.addf %40, %22 : vector<1x512xf32>
      %42 = tpu.concatenate %28, %29, %32, %33, %17, %34, %37, %38, %41 in 1 : vector<1x512xf32>, vector<1x512xf32>, vector<1x512xf32>, vector<1x512xf32>, vector<1x512xf32>, vector<1x512xf32>, vector<1x512xf32>, vector<1x512xf32>, vector<1x512xf32> -> vector<1x4608xf32>
      %c2_i32_17 = arith.constant 2 : i32
      %43 = arith.cmpi slt, %arg0, %c2_i32_17 : i32
      %44 = arith.extui %43 : i1 to i32
      %c0_i32_18 = arith.constant 0 : i32
      %45 = arith.cmpi ne, %44, %c0_i32_18 : i32
      scf.if %45 {
        %c0_21 = arith.constant 0 : index
        %c0_22 = arith.constant 0 : index
        %49 = vector.load %arg10[%c0_21, %c0_22] : memref<1x4608xf32, #tpu.memory_space<vmem>>, vector<1x4608xf32>
        %cst = arith.constant 5.000000e-01 : f32
        %50 = vector.broadcast %cst : f32 to vector<1x4608xf32>
        %51 = arith.mulf %42, %50 : vector<1x4608xf32>
        %52 = arith.addf %49, %51 : vector<1x4608xf32>
        %c0_23 = arith.constant 0 : index
        %c0_24 = arith.constant 0 : index
        %53 = vector.load %arg10[%c0_23, %c0_24] : memref<1x4608xf32, #tpu.memory_space<vmem>>, vector<1x4608xf32>
        tpu.vector_store %arg10[%c0_23, %c0_24], %52 {strides = array<i32>} : memref<1x4608xf32, #tpu.memory_space<vmem>>, vector<1x4608xf32>,
      } else {
      }
      %c2_i32_19 = arith.constant 2 : i32
      %46 = arith.cmpi eq, %arg0, %c2_i32_19 : i32
      %47 = arith.extui %46 : i1 to i32
      %c0_i32_20 = arith.constant 0 : i32
      %48 = arith.cmpi ne, %47, %c0_i32_20 : i32
      scf.if %48 {
        %c0_21 = arith.constant 0 : index
        %c0_22 = arith.constant 0 : index
        %49 = vector.load %arg10[%c0_21, %c0_22] : memref<1x4608xf32, #tpu.memory_space<vmem>>, vector<1x4608xf32>
        %50 = tpu.concatenate %49, %42 in 0 : vector<1x4608xf32>, vector<1x4608xf32> -> vector<2x4608xf32>
        %c0_23 = arith.constant 0 : index
        %c0_24 = arith.constant 0 : index
        %51 = vector.load %arg4[%c0_23, %c0_24] : memref<4608x32xf32, #tpu.memory_space<vmem>>, vector<4608x32xf32>
        %cst = arith.constant dense<0.000000e+00> : vector<2x32xf32>
        %52 = tpu.matmul %50, %51, %cst {dimension_numbers = #tpu.dot_dimension_numbers<[1], [0], [0], [1], [0, 0, 1, 1], [], []>} : vector<2x4608xf32>, vector<4608x32xf32>, vector<2x32xf32> -> vector<2x32xf32>
        %c0_25 = arith.constant 0 : index
        %c0_26 = arith.constant 0 : index
        %53 = vector.load %arg5[%c0_25, %c0_26] : memref<1x32xf32, #tpu.memory_space<vmem>>, vector<1x32xf32>
        %54 = vector.broadcast %53 : vector<1x32xf32> to vector<2x32xf32>
        %55 = arith.addf %52, %54 : vector<2x32xf32>
        %56 = vector.extract_strided_slice %55 {offsets = [0, 0], sizes = [1, 32], strides = [1, 1]} : vector<2x32xf32> to vector<1x32xf32>
        %57 = vector.extract_strided_slice %55 {offsets = [1, 0], sizes = [1, 32], strides = [1, 1]} : vector<2x32xf32> to vector<1x32xf32>
        %58 = tpu.concatenate %56, %57 in 1 : vector<1x32xf32>, vector<1x32xf32> -> vector<1x64xf32>
        %c0_27 = arith.constant 0 : index
        %c0_28 = arith.constant 0 : index
        %59 = vector.load %arg6[%c0_27, %c0_28] : memref<64x1024xf32, #tpu.memory_space<vmem>>, vector<64x1024xf32>
        %cst_29 = arith.constant dense<0.000000e+00> : vector<1x1024xf32>
        %60 = tpu.matmul %58, %59, %cst_29 {dimension_numbers = #tpu.dot_dimension_numbers<[1], [0], [0], [1], [0, 0, 1, 1], [], []>} : vector<1x64xf32>, vector<64x1024xf32>, vector<1x1024xf32> -> vector<1x1024xf32>
        %c0_30 = arith.constant 0 : index
        %c0_31 = arith.constant 0 : index
        %61 = vector.load %arg7[%c0_30, %c0_31] : memref<1x1024xf32, #tpu.memory_space<vmem>>, vector<1x1024xf32>
        %62 = arith.addf %60, %61 : vector<1x1024xf32>
        %c0_32 = arith.constant 0 : index
        %c0_33 = arith.constant 0 : index
        %63 = vector.load %arg8[%c0_32, %c0_33] : memref<1x1024xf32, #tpu.memory_space<vmem>>, vector<1x1024xf32>
        tpu.vector_store %arg8[%c0_32, %c0_33], %62 {strides = array<i32>} : memref<1x1024xf32, #tpu.memory_space<vmem>>, vector<1x1024xf32>,
      } else {
      }
    } else {
    }
    return
  }
  func.func @transform_0(%arg0: i32, %arg1: i32) -> (i32, i32, i32, i32) {
    %c1_i32 = arith.constant 1 : i32
    %0 = arith.minsi %arg0, %c1_i32 : i32
    %c2_i32 = arith.constant 2 : i32
    %1 = arith.cmpi eq, %arg0, %c2_i32 : i32
    %c1_i32_0 = arith.constant 1 : i32
    %2 = arith.select %1, %c1_i32_0, %arg1 : i32
    %c0_i32 = arith.constant 0 : i32
    %c0_i32_1 = arith.constant 0 : i32
    %c0_i32_2 = arith.constant 0 : i32
    return %0, %2, %c0_i32, %c0_i32_1 : i32, i32, i32, i32
  }
  func.func @transform_1(%arg0: i32, %arg1: i32) -> (i32, i32, i32, i32) {
    %c2_i32 = arith.constant 2 : i32
    %0 = arith.cmpi eq, %arg0, %c2_i32 : i32
    %c0_i32 = arith.constant 0 : i32
    %1 = arith.select %0, %arg1, %c0_i32 : i32
    %c0_i32_0 = arith.constant 0 : i32
    %c0_i32_1 = arith.constant 0 : i32
    %c0_i32_2 = arith.constant 0 : i32
    %c0_i32_3 = arith.constant 0 : i32
    return %c0_i32_0, %1, %c0_i32_1, %c0_i32_2 : i32, i32, i32, i32
  }
  func.func @transform_2(%arg0: i32, %arg1: i32) -> (i32, i32) {
    %c0_i32 = arith.constant 0 : i32
    %c0_i32_0 = arith.constant 0 : i32
    %c0_i32_1 = arith.constant 0 : i32
    return %c0_i32, %c0_i32_0 : i32, i32
  }
  func.func @transform_3(%arg0: i32, %arg1: i32) -> (i32, i32) {
    %c0_i32 = arith.constant 0 : i32
    %c0_i32_0 = arith.constant 0 : i32
    %c0_i32_1 = arith.constant 0 : i32
    return %c0_i32, %c0_i32_0 : i32, i32
  }
  func.func @transform_4(%arg0: i32, %arg1: i32) -> (i32, i32) {
    %c0_i32 = arith.constant 0 : i32
    %c0_i32_0 = arith.constant 0 : i32
    %c0_i32_1 = arith.constant 0 : i32
    return %c0_i32, %c0_i32_0 : i32, i32
  }
  func.func @transform_5(%arg0: i32, %arg1: i32) -> (i32, i32) {
    %c0_i32 = arith.constant 0 : i32
    %c0_i32_0 = arith.constant 0 : i32
    %c0_i32_1 = arith.constant 0 : i32
    return %c0_i32, %c0_i32_0 : i32, i32
  }
  func.func @transform_6(%arg0: i32, %arg1: i32) -> (i32, i32) {
    %c0_i32 = arith.constant 0 : i32
    %c0_i32_0 = arith.constant 0 : i32
    %c0_i32_1 = arith.constant 0 : i32
    return %c0_i32, %c0_i32_0 : i32, i32
  }
}

</mosaic_0001>

<llo_original>
// kernel: tpu_custom_call.1
$region0: #{tpu_custom_call.1}
  #allocation0 [shape = 'u32[]', space=smem, size = 0x4, offset = 0x4, fixed_abs, tag = 'smem constant byte address 0x4 - core index']
  #allocation1 [shape = 'u32[144,128]{1,0:T(1,128)}', space=vmem, size = 0x12000, scoped, tag = 'internal scratch']
  #allocation2 [shape = 'f32[9,512]{1,0:T(8,128)}', space=vmem, size = 0x8000, scoped, tag = 'scratch operand']
  #allocation3 [shape = 'f32[1,4608]{1,0:T(1,128)}', space=vmem, size = 0x4800, scoped, tag = 'scratch operand']
  %s0 = inlined_call_operand.vmem [shape: f32[2,16,16,512], index: 0, kind: input, shape index: {}]
  %s1 = inlined_call_operand.vmem [shape: f32[1,16,16,512], index: 1, kind: input, shape index: {}]
  %s2 = inlined_call_operand.vmem [shape: f32[4608,32], index: 2, kind: input, shape index: {}]
  %s3 = inlined_call_operand.vmem [shape: f32[1,32], index: 3, kind: input, shape index: {}]
  %s4 = inlined_call_operand.vmem [shape: f32[64,1024], index: 4, kind: input, shape index: {}]
  %s5 = inlined_call_operand.vmem [shape: f32[1,1024], index: 5, kind: input, shape index: {}]
  %s6 = inlined_call_operand.hbm [shape: f32[1,1024], index: 6, kind: output, shape index: {}]
  %s7 = sld [smem:[#allocation0]]
  $region101: #{tpu_custom_call.1} parent=0
    _
  %s9 = ssub.s32 1, %s7
  %s10 = scalar_select 0, %s9, %s7
  $region1: #{tpu_custom_call.1} parent=0
    #allocation4 [shape = 'u8[4096]{0}', space=vmem, size = 0x1000, scoped, tag = 'output window, operand 0, single buffered']
    #allocation5 [shape = 's32[2]{0}', space=sflag, size = 0x8, scoped, tag = 'scoped memory for tpu_custom_call.1']
    %11 = vsyncpa [#allocation5], 0
    loop: start=0, step=1, limit=8
    $region2: #{tpu_custom_call.1} parent=1 // loop_pre_header
      _
    $region3: #{tpu_custom_call.1} parent=1 // loop_header
      %s13 = sphi 0, %s17
      %p14 = scmp.ge.s32.totalorder %s13, 8
      %s20 = sphi 0, %s32
      %s21 = sphi 0, %s28
      %s22 = sphi 0, %s20
      %s23 = sphi 0, %s21
      %s24 = sphi 0, %s22
      %s25 = sphi 0, %s23
      %s45 = sphi 0, %s47
      %s48 = sphi 0, %s45
      %s49 = sphi 0, %s48
      %s65 = sphi 0, %s49
      %s75 = sphi 0, %s77
      %s78 = sphi 0, %s75
      %s79 = sphi 0, %s78
      %s95 = sphi 0, %s79
      %s99 = sphi 0, %s99
      %s101 = sphi 0, %s99
      %s102 = sphi 0, %s101
      %s116 = sphi 0, %s102
      %s120 = sphi 0, %s120
      %s122 = sphi 0, %s120
      %s123 = sphi 0, %s122
      %s137 = sphi 0, %s123
      %s141 = sphi 0, %s141
      %s143 = sphi 0, %s141
      %s144 = sphi 0, %s143
      %s158 = sphi 0, %s144
      %s162 = sphi 0, %s162
      %s164 = sphi 0, %s162
      %s165 = sphi 0, %s164
      %s179 = sphi 0, %s165
      %s183 = sphi 0, %s183
      %s185 = sphi 0, %s183
      %s186 = sphi 0, %s185
      %s200 = sphi 0, %s186
    $region4: #{tpu_custom_call.1} parent=1 // loop_header_branch
      %16 = sbr.rel (%p14) target = $region8
    $region5: #{tpu_custom_call.1} parent=1 // loop_body
      %s18 = ssub.s32 %s13, 1
      %s19 = ssub.s32 %s13, 2
      %s26 = sadd.s32 1, %s21
      %p27 = scmp.ge.s32.totalorder %s26, 2
      %s28 = scalar_select %p27, 0, %s26
      %s29 = sadd.s32 1, %s20
      %s30 = scalar_select %p27, %s29, %s20
      %p31 = scmp.ge.s32.totalorder %s30, 3
      %s32 = scalar_select %p31, 0, %s30
      %p33 = scmp.lt.s32.totalorder %s20, 1
      %s34 = scalar_select %p33, %s20, 1
      %p35 = scmp.eq.s32.totalorder %s20, 2
      %s36 = scalar_select %p35, 1, %s21
      %p37 = scmp.lt.s32.totalorder %s32, 1
      %s38 = scalar_select %p37, %s32, 1
      %p39 = scmp.eq.s32.totalorder %s32, 2
      %s40 = scalar_select %p39, 1, %s28
      %s41 = ssub.s32 %s34, %s38
      %s42 = ssub.s32 %s36, %s40
      %s43 = sor.u32 %s41, %s42
      %p44 = scmp.eq.s32.totalorder %s43, 0
      %s46 = sadd.s32 %s45, 1
      %s47 = scalar_select %p44, %s45, %s46
      %p50 = pneg %p44
      %p51 = scmp.eq.s32.totalorder %s13, 5
      %p52 = por %p50, %p51
      %p53 = scmp.ne.s32.totalorder %s45, %s48
      %p54 = scmp.eq.s32.totalorder %s13, 0
      %p55 = por %p53, %p54
      %p56 = scmp.ne.s32.totalorder %s45, %s48
      %p57 = scmp.eq.s32.totalorder %s18, 5
      %p58 = por %p56, %p57
      %p59 = scmp.ne.s32.totalorder %s48, %s49
      %p60 = scmp.eq.s32.totalorder %s18, 0
      %p61 = por %p59, %p60
      %p62 = scmp.ne.s32.totalorder %s48, %s49
      %p63 = scmp.eq.s32.totalorder %s19, 5
      %p64 = por %p62, %p63
      %p66 = scmp.ne.s32.totalorder %s49, %s65
      %p67 = scmp.eq.s32.totalorder %s19, 0
      %p68 = por %p66, %p67
      %p69 = scmp.eq.s32.totalorder %s20, 2
      %s70 = scalar_select %p69, %s21, 0
      %p71 = scmp.eq.s32.totalorder %s32, 2
      %s72 = scalar_select %p71, %s28, 0
      %s73 = ssub.s32 %s70, %s72
      %p74 = scmp.eq.s32.totalorder %s73, 0
      %s76 = sadd.s32 %s75, 1
      %s77 = scalar_select %p74, %s75, %s76
      %p80 = pneg %p74
      %p81 = scmp.eq.s32.totalorder %s13, 5
      %p82 = por %p80, %p81
      %p83 = scmp.ne.s32.totalorder %s75, %s78
      %p84 = scmp.eq.s32.totalorder %s13, 0
      %p85 = por %p83, %p84
      %p86 = scmp.ne.s32.totalorder %s75, %s78
      %p87 = scmp.eq.s32.totalorder %s18, 5
      %p88 = por %p86, %p87
      %p89 = scmp.ne.s32.totalorder %s78, %s79
      %p90 = scmp.eq.s32.totalorder %s18, 0
      %p91 = por %p89, %p90
      %p92 = scmp.ne.s32.totalorder %s78, %s79
      %p93 = scmp.eq.s32.totalorder %s19, 5
      %p94 = por %p92, %p93
      %p96 = scmp.ne.s32.totalorder %s79, %s95
      %p97 = scmp.eq.s32.totalorder %s19, 0
      %p98 = por %p96, %p97
      %s100 = sadd.s32 %s99, 1
      %p103 = scmp.eq.s32.totalorder %s13, 5
      %p104 = scmp.ne.s32.totalorder %s99, %s101
      %p105 = scmp.eq.s32.totalorder %s13, 0
      %p106 = por %p104, %p105
      %p107 = scmp.ne.s32.totalorder %s99, %s101
      %p108 = scmp.eq.s32.totalorder %s18, 5
      %p109 = por %p107, %p108
      %p110 = scmp.ne.s32.totalorder %s101, %s102
      %p111 = scmp.eq.s32.totalorder %s18, 0
      %p112 = por %p110, %p111
      %p113 = scmp.ne.s32.totalorder %s101, %s102
      %p114 = scmp.eq.s32.totalorder %s19, 5
      %p115 = por %p113, %p114
      %p117 = scmp.ne.s32.totalorder %s102, %s116
      %p118 = scmp.eq.s32.totalorder %s19, 0
      %p119 = por %p117, %p118
      %s121 = sadd.s32 %s120, 1
      %p124 = scmp.eq.s32.totalorder %s13, 5
      %p125 = scmp.ne.s32.totalorder %s120, %s122
      %p126 = scmp.eq.s32.totalorder %s13, 0
      %p127 = por %p125, %p126
      %p128 = scmp.ne.s32.totalorder %s120, %s122
      %p129 = scmp.eq.s32.totalorder %s18, 5
      %p130 = por %p128, %p129
      %p131 = scmp.ne.s32.totalorder %s122, %s123
      %p132 = scmp.eq.s32.totalorder %s18, 0
      %p133 = por %p131, %p132
      %p134 = scmp.ne.s32.totalorder %s122, %s123
      %p135 = scmp.eq.s32.totalorder %s19, 5
      %p136 = por %p134, %p135
      %p138 = scmp.ne.s32.totalorder %s123, %s137
      %p139 = scmp.eq.s32.totalorder %s19, 0
      %p140 = por %p138, %p139
      %s142 = sadd.s32 %s141, 1
      %p145 = scmp.eq.s32.totalorder %s13, 5
      %p146 = scmp.ne.s32.totalorder %s141, %s143
      %p147 = scmp.eq.s32.totalorder %s13, 0
      %p148 = por %p146, %p147
      %p149 = scmp.ne.s32.totalorder %s141, %s143
      %p150 = scmp.eq.s32.totalorder %s18, 5
      %p151 = por %p149, %p150
      %p152 = scmp.ne.s32.totalorder %s143, %s144
      %p153 = scmp.eq.s32.totalorder %s18, 0
      %p154 = por %p152, %p153
      %p155 = scmp.ne.s32.totalorder %s143, %s144
      %p156 = scmp.eq.s32.totalorder %s19, 5
      %p157 = por %p155, %p156
      %p159 = scmp.ne.s32.totalorder %s144, %s158
      %p160 = scmp.eq.s32.totalorder %s19, 0
      %p161 = por %p159, %p160
      %s163 = sadd.s32 %s162, 1
      %p166 = scmp.eq.s32.totalorder %s13, 5
      %p167 = scmp.ne.s32.totalorder %s162, %s164
      %p168 = scmp.eq.s32.totalorder %s13, 0
      %p169 = por %p167, %p168
      %p170 = scmp.ne.s32.totalorder %s162, %s164
      %p171 = scmp.eq.s32.totalorder %s18, 5
      %p172 = por %p170, %p171
      %p173 = scmp.ne.s32.totalorder %s164, %s165
      %p174 = scmp.eq.s32.totalorder %s18, 0
      %p175 = por %p173, %p174
      %p176 = scmp.ne.s32.totalorder %s164, %s165
      %p177 = scmp.eq.s32.totalorder %s19, 5
      %p178 = por %p176, %p177
      %p180 = scmp.ne.s32.totalorder %s165, %s179
      %p181 = scmp.eq.s32.totalorder %s19, 0
      %p182 = por %p180, %p181
      %s184 = sadd.s32 %s183, 1
      %p187 = scmp.eq.s32.totalorder %s13, 5
      %p188 = scmp.ne.s32.totalorder %s183, %s185
      %p189 = scmp.eq.s32.totalorder %s13, 0
      %p190 = por %p188, %p189
      %p191 = scmp.ne.s32.totalorder %s183, %s185
      %p192 = scmp.eq.s32.totalorder %s18, 5
      %p193 = por %p191, %p192
      %p194 = scmp.ne.s32.totalorder %s185, %s186
      %p195 = scmp.eq.s32.totalorder %s18, 0
      %p196 = por %p194, %p195
      %p197 = scmp.ne.s32.totalorder %s185, %s186
      %p198 = scmp.eq.s32.totalorder %s19, 5
      %p199 = por %p197, %p198
      %p201 = scmp.ne.s32.totalorder %s186, %s200
      %p202 = scmp.eq.s32.totalorder %s19, 0
      %p203 = por %p201, %p202
      %p204 = scmp.le.s32.totalorder 1, %s13
      %p205 = scmp.lt.s32.totalorder %s13, 7
      %p206 = pnand %p204, %p205
      %p207 = pneg %p206
      // Predicated region
      $region9: #{tpu_custom_call.1} parent=5 // pred_check
        _
      $region10: #{tpu_custom_call.1} parent=5 // pred_check_branch
        %209 = sbr.rel (%p206) target = $region12
      $region11: #{tpu_custom_call.1} parent=5 // pred_region
        %s210 = ssub.s32 %s13, 1
        // Predicated region
        $region13: #{tpu_custom_call.1} parent=11 // pred_check
          %p211 = pneg %p112
        $region14: #{tpu_custom_call.1} parent=11 // pred_check_branch
          %213 = sbr.rel (%p211) target = $region16
        $region15: #{tpu_custom_call.1} parent=11 // pred_region
          _
        $region16: #{tpu_custom_call.1} parent=11 // pred_fallthru
          _
        // Predicated region
        $region17: #{tpu_custom_call.1} parent=11 // pred_check
          %p214 = pneg %p133
        $region18: #{tpu_custom_call.1} parent=11 // pred_check_branch
          %216 = sbr.rel (%p214) target = $region20
        $region19: #{tpu_custom_call.1} parent=11 // pred_region
          _
        $region20: #{tpu_custom_call.1} parent=11 // pred_fallthru
          _
        // Predicated region
        $region21: #{tpu_custom_call.1} parent=11 // pred_check
          %p217 = pneg %p154
        $region22: #{tpu_custom_call.1} parent=11 // pred_check_branch
          %219 = sbr.rel (%p217) target = $region24
        $region23: #{tpu_custom_call.1} parent=11 // pred_region
          _
        $region24: #{tpu_custom_call.1} parent=11 // pred_fallthru
          _
        // Predicated region
        $region25: #{tpu_custom_call.1} parent=11 // pred_check
          %p220 = pneg %p175
        $region26: #{tpu_custom_call.1} parent=11 // pred_check_branch
          %222 = sbr.rel (%p220) target = $region28
        $region27: #{tpu_custom_call.1} parent=11 // pred_region
          _
        $region28: #{tpu_custom_call.1} parent=11 // pred_fallthru
          _
      $region12: #{tpu_custom_call.1} parent=5 // pred_fallthru
        _
      %p223 = scmp.lt.s32.totalorder %s13, 6
      // Predicated region
      $region29: #{tpu_custom_call.1} parent=5 // pred_check
        %p224 = pneg %p223
      $region30: #{tpu_custom_call.1} parent=5 // pred_check_branch
        %226 = sbr.rel (%p224) target = $region32
      $region31: #{tpu_custom_call.1} parent=5 // pred_region
        // Predicated region
        $region33: #{tpu_custom_call.1} parent=31 // pred_check
          %p227 = pneg %p55
        $region34: #{tpu_custom_call.1} parent=31 // pred_check_branch
          %229 = sbr.rel (%p227) target = $region36
        $region35: #{tpu_custom_call.1} parent=31 // pred_region
          %p230 = scmp.lt.s32.totalorder %s20, 1
          %s231 = scalar_select %p230, %s20, 1
          %p232 = scmp.eq.s32.totalorder %s20, 2
          %s233 = scalar_select %p232, 1, %s21
          %s234 = smul.u32 8, %s233
          %p235 = scmp.lt.s32.totalorder %s231, 1
          %s236 = scalar_select %p235, %s231, 1
          %p237 = scmp.lt.s32.totalorder %s234, 15
          %s238 = scalar_select %p237, %s234, 15
          %s239 = smul.addr %s238, 8
          %s240 = smul.addr %s236, 128
          %s241 = sadd.s32 %s239, %s240
          %s242 = smul.addr %s241, 8
          %s243 = scalar_lea.vmem %s0, %s242
          %p244 = scmp.lt.s32.totalorder %s20, 1
          %s245 = scalar_select %p244, %s20, 1
          %p246 = scmp.eq.s32.totalorder %s20, 2
          %s247 = scalar_select %p246, 1, %s21
          %s248 = smul.u32 8, %s247
        $region36: #{tpu_custom_call.1} parent=31 // pred_fallthru
          _
        // Predicated region
        $region37: #{tpu_custom_call.1} parent=31 // pred_check
          %p249 = pneg %p85
        $region38: #{tpu_custom_call.1} parent=31 // pred_check_branch
          %251 = sbr.rel (%p249) target = $region40
        $region39: #{tpu_custom_call.1} parent=31 // pred_region
          %p252 = scmp.eq.s32.totalorder %s20, 2
          %s253 = scalar_select %p252, %s21, 0
          %s254 = smul.u32 8, %s253
          %p255 = scmp.lt.s32.totalorder %s254, 15
          %s256 = scalar_select %p255, %s254, 15
          %s257 = smul.addr %s256, 8
          %s258 = smul.addr %s257, 8
          %s259 = scalar_lea.vmem %s1, %s258
          %p260 = scmp.eq.s32.totalorder %s20, 2
          %s261 = scalar_select %p260, %s21, 0
          %s262 = smul.u32 8, %s261
        $region40: #{tpu_custom_call.1} parent=31 // pred_fallthru
          _
      $region32: #{tpu_custom_call.1} parent=5 // pred_fallthru
        _
      %p263 = scmp.le.s32.totalorder 1, %s13
      %p264 = scmp.lt.s32.totalorder %s13, 7
      %p265 = pnand %p263, %p264
      %p266 = pneg %p265
      // Predicated region
      $region41: #{tpu_custom_call.1} parent=5 // pred_check
        _
      $region42: #{tpu_custom_call.1} parent=5 // pred_check_branch
        %268 = sbr.rel (%p265) target = $region44
      $region43: #{tpu_custom_call.1} parent=5 // pred_region
        %s269 = ssub.s32 %s13, 1
        %p270 = scmp.lt.s32.totalorder %s22, 1
        %s271 = scalar_select %p270, %s22, 1
        %p272 = scmp.eq.s32.totalorder %s22, 2
        %s273 = scalar_select %p272, 1, %s23
        %s274 = smul.u32 8, %s273
        %p275 = scmp.lt.s32.totalorder %s271, 1
        %s276 = scalar_select %p275, %s271, 1
        %p277 = scmp.lt.s32.totalorder %s274, 15
        %s278 = scalar_select %p277, %s274, 15
        %s279 = smul.addr %s278, 8
        %s280 = smul.addr %s276, 128
        %s281 = sadd.s32 %s279, %s280
        %s282 = smul.addr %s281, 8
        %s283 = scalar_lea.vmem %s0, %s282
        %p284 = pneg %p61
        %p285 = pneg %p58
        %p286 = scmp.eq.s32.totalorder %s22, 2
        %s287 = scalar_select %p286, %s23, 0
        %s288 = smul.u32 8, %s287
        %p289 = scmp.lt.s32.totalorder %s288, 15
        %s290 = scalar_select %p289, %s288, 15
        %s291 = smul.addr %s290, 8
        %s292 = smul.addr %s291, 8
        %s293 = scalar_lea.vmem %s1, %s292
        %p294 = pneg %p91
        %p295 = pneg %p88
        %p296 = pneg %p112
        %p297 = pneg %p109
        %p298 = pneg %p133
        %p299 = pneg %p130
        %p300 = pneg %p154
        %p301 = pneg %p151
        %p302 = pneg %p175
        %p303 = pneg %p172
        %p304 = pneg %p196
        %p305 = pneg %p193
        %p306 = scmp.lt.s32.totalorder %s22, 1
        %s307 = scalar_select %p306, %s22, 1
        %p308 = scmp.eq.s32.totalorder %s22, 2
        %s309 = scalar_select %p308, 1, %s23
        %s310 = smul.u32 8, %s309
        %p311 = scmp.lt.s32.totalorder %s307, 1
        %s312 = scalar_select %p311, %s307, 1
        %p313 = scmp.lt.s32.totalorder %s310, 15
        %s314 = scalar_select %p313, %s310, 15
        %s315 = smul.addr %s314, 8
        %s316 = smul.addr %s312, 128
        %s317 = sadd.s32 %s315, %s316
        %s318 = smul.addr %s317, 8
        %s319 = scalar_lea.vmem %s0, %s318
        %p320 = scmp.lt.s32.totalorder %s22, 1
        %s321 = scalar_select %p320, %s22, 1
        %p322 = scmp.eq.s32.totalorder %s22, 2
        %s323 = scalar_select %p322, 1, %s23
        %s324 = smul.u32 8, %s323
        %p325 = scmp.eq.s32.totalorder %s22, 2
        %s326 = scalar_select %p325, %s23, 0
        %s327 = smul.u32 8, %s326
        %p328 = scmp.lt.s32.totalorder %s327, 15
        %s329 = scalar_select %p328, %s327, 15
        %s330 = smul.addr %s329, 8
        %s331 = smul.addr %s330, 8
        %s332 = scalar_lea.vmem %s1, %s331
        %p333 = scmp.eq.s32.totalorder %s22, 2
        %s334 = scalar_select %p333, %s23, 0
        %s335 = smul.u32 8, %s334
        %p336 = scmp.eq.s32.totalorder %s22, 0
        %p337 = scmp.eq.s32.totalorder %s23, 0
        %p338 = pnand %p336, %p337
        %p339 = pneg %p338
        // Predicated region
        $region45: #{tpu_custom_call.1} parent=43 // pred_check
          _
        $region46: #{tpu_custom_call.1} parent=43 // pred_check_branch
          %341 = sbr.rel (%p338) target = $region48
        $region47: #{tpu_custom_call.1} parent=43 // pred_region
          %342 = vst [vmem:[#allocation3] sm:$0xff] 0.0
          %343 = vst [vmem:[#allocation3 + $0x8] sm:$0xff] 0.0
          %344 = vst [vmem:[#allocation3 + $0x10] sm:$0xff] 0.0
          %345 = vst [vmem:[#allocation3 + $0x18] sm:$0xff] 0.0
          %v346 = vlaneseq
          %vm347 = vcmp.ge.s32.totalorder %v346, 0
          %vm348 = vcmp.lt.s32.totalorder %v346, 512
          %vm349 = vmand %vm347, %vm348
          %350 = vst.msk [vmem:[#allocation3 + $0x20] sm:$0xf] %vm349, 0.0
        $region48: #{tpu_custom_call.1} parent=43 // pred_fallthru
          _
        // Predicated region
        $region49: #{tpu_custom_call.1} parent=43 // pred_check
          %p351 = pneg %p337
        $region50: #{tpu_custom_call.1} parent=43 // pred_check_branch
          %353 = sbr.rel (%p351) target = $region52
        $region51: #{tpu_custom_call.1} parent=43 // pred_region
          %354 = vst [vmem:[#allocation2] sm:$0xff] 0.0
          %355 = vst [vmem:[#allocation2 + $0x8] sm:$0xff] 0.0
          %356 = vst [vmem:[#allocation2 + $0x10] sm:$0xff] 0.0
          %357 = vst [vmem:[#allocation2 + $0x18] sm:$0xff] 0.0
          %358 = vst [vmem:[#allocation2 + $0x20] sm:$0x1] 0.0
          %359 = vst [vmem:[#allocation2 + $0x28] sm:$0x1] 0.0
          %360 = vst [vmem:[#allocation2 + $0x30] sm:$0x1] 0.0
          %361 = vst [vmem:[#allocation2 + $0x38] sm:$0x1] 0.0
        $region52: #{tpu_custom_call.1} parent=43 // pred_fallthru
          _
        %p362 = scmp.lt.s32.totalorder %s22, 2
        // Predicated region
        $region53: #{tpu_custom_call.1} parent=43 // pred_check
          %p363 = pneg %p362
        $region54: #{tpu_custom_call.1} parent=43 // pred_check_branch
          %365 = sbr.rel (%p363) target = $region56
        $region55: #{tpu_custom_call.1} parent=43 // pred_region
          %v366 = vld [vmem:[%s319] sm:$0xff]
          %v367 = vld [vmem:[%s319 + $0x8] sm:$0xff]
          %v368 = vld [vmem:[%s319 + $0x10] sm:$0xff]
          %v369 = vld [vmem:[%s319 + $0x18] sm:$0xff]
          %v370 = vld [vmem:[%s319 + $0x20] sm:$0xff]
          %v371 = vld [vmem:[%s319 + $0x28] sm:$0xff]
          %v372 = vld [vmem:[%s319 + $0x30] sm:$0xff]
          %v373 = vld [vmem:[%s319 + $0x38] sm:$0xff]
          %v374 = vld [vmem:[%s319 + $0x40] sm:$0xff]
          %v375 = vld [vmem:[%s319 + $0x48] sm:$0xff]
          %v376 = vld [vmem:[%s319 + $0x50] sm:$0xff]
          %v377 = vld [vmem:[%s319 + $0x58] sm:$0xff]
          %v378 = vld [vmem:[%s319 + $0x60] sm:$0xff]
          %v379 = vld [vmem:[%s319 + $0x68] sm:$0xff]
          %v380 = vld [vmem:[%s319 + $0x70] sm:$0xff]
          %v381 = vld [vmem:[%s319 + $0x78] sm:$0xff]
          %v382 = vld [vmem:[%s319 + $0x80] sm:$0xff]
          %v383 = vld [vmem:[%s319 + $0x88] sm:$0xff]
          %v384 = vld [vmem:[%s319 + $0x90] sm:$0xff]
          %v385 = vld [vmem:[%s319 + $0x98] sm:$0xff]
          %v386 = vld [vmem:[%s319 + $0xa0] sm:$0xff]
          %v387 = vld [vmem:[%s319 + $0xa8] sm:$0xff]
          %v388 = vld [vmem:[%s319 + $0xb0] sm:$0xff]
          %v389 = vld [vmem:[%s319 + $0xb8] sm:$0xff]
          %v390 = vld [vmem:[%s319 + $0xc0] sm:$0xff]
          %v391 = vld [vmem:[%s319 + $0xc8] sm:$0xff]
          %v392 = vld [vmem:[%s319 + $0xd0] sm:$0xff]
          %v393 = vld [vmem:[%s319 + $0xd8] sm:$0xff]
          %v394 = vld [vmem:[%s319 + $0xe0] sm:$0xff]
          %v395 = vld [vmem:[%s319 + $0xe8] sm:$0xff]
          %v396 = vld [vmem:[%s319 + $0xf0] sm:$0xff]
          %v397 = vld [vmem:[%s319 + $0xf8] sm:$0xff]
          %v398 = vld [vmem:[%s319 + $0x100] sm:$0xff]
          %v399 = vld [vmem:[%s319 + $0x108] sm:$0xff]
          %v400 = vld [vmem:[%s319 + $0x110] sm:$0xff]
          %v401 = vld [vmem:[%s319 + $0x118] sm:$0xff]
          %v402 = vld [vmem:[%s319 + $0x120] sm:$0xff]
          %v403 = vld [vmem:[%s319 + $0x128] sm:$0xff]
          %v404 = vld [vmem:[%s319 + $0x130] sm:$0xff]
          %v405 = vld [vmem:[%s319 + $0x138] sm:$0xff]
          %v406 = vld [vmem:[%s319 + $0x140] sm:$0xff]
          %v407 = vld [vmem:[%s319 + $0x148] sm:$0xff]
          %v408 = vld [vmem:[%s319 + $0x150] sm:$0xff]
          %v409 = vld [vmem:[%s319 + $0x158] sm:$0xff]
          %v410 = vld [vmem:[%s319 + $0x160] sm:$0xff]
          %v411 = vld [vmem:[%s319 + $0x168] sm:$0xff]
          %v412 = vld [vmem:[%s319 + $0x170] sm:$0xff]
          %v413 = vld [vmem:[%s319 + $0x178] sm:$0xff]
          %v414 = vld [vmem:[%s319 + $0x180] sm:$0xff]
          %v415 = vld [vmem:[%s319 + $0x188] sm:$0xff]
          %v416 = vld [vmem:[%s319 + $0x190] sm:$0xff]
          %v417 = vld [vmem:[%s319 + $0x198] sm:$0xff]
          %v418 = vld [vmem:[%s319 + $0x1a0] sm:$0xff]
          %v419 = vld [vmem:[%s319 + $0x1a8] sm:$0xff]
          %v420 = vld [vmem:[%s319 + $0x1b0] sm:$0xff]
          %v421 = vld [vmem:[%s319 + $0x1b8] sm:$0xff]
          %v422 = vld [vmem:[%s319 + $0x1c0] sm:$0xff]
          %v423 = vld [vmem:[%s319 + $0x1c8] sm:$0xff]
          %v424 = vld [vmem:[%s319 + $0x1d0] sm:$0xff]
          %v425 = vld [vmem:[%s319 + $0x1d8] sm:$0xff]
          %v426 = vld [vmem:[%s319 + $0x1e0] sm:$0xff]
          %v427 = vld [vmem:[%s319 + $0x1e8] sm:$0xff]
          %v428 = vld [vmem:[%s319 + $0x1f0] sm:$0xff]
          %v429 = vld [vmem:[%s319 + $0x1f8] sm:$0xff]
          %v430 = vmul.f32 %v366, 0.00390625
          %v431 = vmul.f32 %v367, 0.00390625
          %v432 = vmul.f32 %v368, 0.00390625
          %v433 = vmul.f32 %v369, 0.00390625
          %v434 = vmul.f32 %v370, 0.00390625
          %v435 = vmul.f32 %v371, 0.00390625
          %v436 = vmul.f32 %v372, 0.00390625
          %v437 = vmul.f32 %v373, 0.00390625
          %v438 = vmul.f32 %v374, 0.00390625
          %v439 = vmul.f32 %v375, 0.00390625
          %v440 = vmul.f32 %v376, 0.00390625
          %v441 = vmul.f32 %v377, 0.00390625
          %v442 = vmul.f32 %v378, 0.00390625
          %v443 = vmul.f32 %v379, 0.00390625
          %v444 = vmul.f32 %v380, 0.00390625
          %v445 = vmul.f32 %v381, 0.00390625
          %v446 = vmul.f32 %v382, 0.00390625
          %v447 = vmul.f32 %v383, 0.00390625
          %v448 = vmul.f32 %v384, 0.00390625
          %v449 = vmul.f32 %v385, 0.00390625
          %v450 = vmul.f32 %v386, 0.00390625
          %v451 = vmul.f32 %v387, 0.00390625
          %v452 = vmul.f32 %v388, 0.00390625
          %v453 = vmul.f32 %v389, 0.00390625
          %v454 = vmul.f32 %v390, 0.00390625
          %v455 = vmul.f32 %v391, 0.00390625
          %v456 = vmul.f32 %v392, 0.00390625
          %v457 = vmul.f32 %v393, 0.00390625
          %v458 = vmul.f32 %v394, 0.00390625
          %v459 = vmul.f32 %v395, 0.00390625
          %v460 = vmul.f32 %v396, 0.00390625
          %v461 = vmul.f32 %v397, 0.00390625
          %v462 = vmul.f32 %v398, 0.00390625
          %v463 = vmul.f32 %v399, 0.00390625
          %v464 = vmul.f32 %v400, 0.00390625
          %v465 = vmul.f32 %v401, 0.00390625
          %v466 = vmul.f32 %v402, 0.00390625
          %v467 = vmul.f32 %v403, 0.00390625
          %v468 = vmul.f32 %v404, 0.00390625
          %v469 = vmul.f32 %v405, 0.00390625
          %v470 = vmul.f32 %v406, 0.00390625
          %v471 = vmul.f32 %v407, 0.00390625
          %v472 = vmul.f32 %v408, 0.00390625
          %v473 = vmul.f32 %v409, 0.00390625
          %v474 = vmul.f32 %v410, 0.00390625
          %v475 = vmul.f32 %v411, 0.00390625
          %v476 = vmul.f32 %v412, 0.00390625
          %v477 = vmul.f32 %v413, 0.00390625
          %v478 = vmul.f32 %v414, 0.00390625
          %v479 = vmul.f32 %v415, 0.00390625
          %v480 = vmul.f32 %v416, 0.00390625
          %v481 = vmul.f32 %v417, 0.00390625
          %v482 = vmul.f32 %v418, 0.00390625
          %v483 = vmul.f32 %v419, 0.00390625
          %v484 = vmul.f32 %v420, 0.00390625
          %v485 = vmul.f32 %v421, 0.00390625
          %v486 = vmul.f32 %v422, 0.00390625
          %v487 = vmul.f32 %v423, 0.00390625
          %v488 = vmul.f32 %v424, 0.00390625
          %v489 = vmul.f32 %v425, 0.00390625
          %v490 = vmul.f32 %v426, 0.00390625
          %v491 = vmul.f32 %v427, 0.00390625
          %v492 = vmul.f32 %v428, 0.00390625
          %v493 = vmul.f32 %v429, 0.00390625
          %v494 = vadd.f32 %v430, %v438
          %v495 = vadd.f32 %v494, %v446
          %v496 = vadd.f32 %v495, %v454
          %v497 = vadd.f32 %v496, %v462
          %v498 = vadd.f32 %v497, %v470
          %v499 = vadd.f32 %v498, %v478
          %v500 = vadd.f32 %v499, %v486
          %v501 = vadd.f32 %v431, %v439
          %v502 = vadd.f32 %v501, %v447
          %v503 = vadd.f32 %v502, %v455
          %v504 = vadd.f32 %v503, %v463
          %v505 = vadd.f32 %v504, %v471
          %v506 = vadd.f32 %v505, %v479
          %v507 = vadd.f32 %v506, %v487
          %v508 = vadd.f32 %v432, %v440
          %v509 = vadd.f32 %v508, %v448
          %v510 = vadd.f32 %v509, %v456
          %v511 = vadd.f32 %v510, %v464
          %v512 = vadd.f32 %v511, %v472
          %v513 = vadd.f32 %v512, %v480
          %v514 = vadd.f32 %v513, %v488
          %v515 = vadd.f32 %v433, %v441
          %v516 = vadd.f32 %v515, %v449
          %v517 = vadd.f32 %v516, %v457
          %v518 = vadd.f32 %v517, %v465
          %v519 = vadd.f32 %v518, %v473
          %v520 = vadd.f32 %v519, %v481
          %v521 = vadd.f32 %v520, %v489
          %v522 = vadd.f32 %v434, %v442
          %v523 = vadd.f32 %v522, %v450
          %v524 = vadd.f32 %v523, %v458
          %v525 = vadd.f32 %v524, %v466
          %v526 = vadd.f32 %v525, %v474
          %v527 = vadd.f32 %v526, %v482
          %v528 = vadd.f32 %v527, %v490
          %v529 = vadd.f32 %v435, %v443
          %v530 = vadd.f32 %v529, %v451
          %v531 = vadd.f32 %v530, %v459
          %v532 = vadd.f32 %v531, %v467
          %v533 = vadd.f32 %v532, %v475
          %v534 = vadd.f32 %v533, %v483
          %v535 = vadd.f32 %v534, %v491
          %v536 = vadd.f32 %v436, %v444
          %v537 = vadd.f32 %v536, %v452
          %v538 = vadd.f32 %v537, %v460
          %v539 = vadd.f32 %v538, %v468
          %v540 = vadd.f32 %v539, %v476
          %v541 = vadd.f32 %v540, %v484
          %v542 = vadd.f32 %v541, %v492
          %v543 = vadd.f32 %v437, %v445
          %v544 = vadd.f32 %v543, %v453
          %v545 = vadd.f32 %v544, %v461
          %v546 = vadd.f32 %v545, %v469
          %v547 = vadd.f32 %v546, %v477
          %v548 = vadd.f32 %v547, %v485
          %v549 = vadd.f32 %v548, %v493
          %v550 = vld [vmem:[#allocation2] ss:$8 sm:$0xf]
          %v551 = vadd.f32 %v500, %v528
          %v552 = vrot.slane %v551, 4
          %v553 = vadd.f32 %v551, %v552
          %v554 = vrot.slane %v553, 2
          %v555 = vadd.f32 %v553, %v554
          %v556 = vrot.slane %v555, 1
          %v557 = vadd.f32 %v555, %v556
          %v558 = vadd.f32 %v507, %v535
          %v559 = vrot.slane %v558, 4
          %v560 = vadd.f32 %v558, %v559
          %v561 = vrot.slane %v560, 2
          %v562 = vadd.f32 %v560, %v561
          %v563 = vrot.slane %v562, 1
          %v564 = vadd.f32 %v562, %v563
          %v565 = vadd.f32 %v514, %v542
          %v566 = vrot.slane %v565, 4
          %v567 = vadd.f32 %v565, %v566
          %v568 = vrot.slane %v567, 2
          %v569 = vadd.f32 %v567, %v568
          %v570 = vrot.slane %v569, 1
          %v571 = vadd.f32 %v569, %v570
          %v572 = vadd.f32 %v521, %v549
          %v573 = vrot.slane %v572, 4
          %v574 = vadd.f32 %v572, %v573
          %v575 = vrot.slane %v574, 2
          %v576 = vadd.f32 %v574, %v575
          %v577 = vrot.slane %v576, 1
          %v578 = vadd.f32 %v576, %v577
          %v583 = vcombine.low %v557, %v564
          %v584 = vcombine.low %v571, %v578
          %v586 = vunpack.c.l.s4 1966171168
          %v587 = vunpack.c.0.s8 %v586
          %v588 = vlaneseq
          %v589 = vshrl.u32 %v588, 7
          %v590 = vsub.s32 %v587, %v589
          %v591 = vrot.slane %v583, %v590
          %v593 = vunpack.c.l.s4 1966171168
          %v594 = vunpack.c.0.s8 %v593
          %v595 = vlaneseq
          %v596 = vshrl.u32 %v595, 7
          %v597 = vsub.s32 %v594, %v596
          %v598 = vrot.slane %v584, %v597
          %v599 = vcombine.low %v591, %v598
          %v601 = vunpack.c.l.s4 1966171168
          %v602 = vunpack.c.0.s8 %v601
          %v603 = vlaneseq
          %v604 = vshrl.u32 %v603, 7
          %v605 = vsub.s32 %v602, %v604
          %v606 = vrot.slane %v599, %v605
          %v608 = vadd.f32 %v550, %v606
          %v609 = vlaneseq
          %vm610 = vcmp.ge.s32.totalorder %v609, 0
          %vm611 = vcmp.lt.s32.totalorder %v609, 512
          %vm612 = vmand %vm610, %vm611
          %613 = vst.msk [vmem:[#allocation2] ss:$8 sm:$0xf] %vm612, %v608
          %614 = vst.msk [vmem:[#allocation2] ss:$8 sm:$0x0] %vm612, %v608
          %s615 = scalar_lea.vmem [#allocation2], 3
          %v616 = vld [vmem:[%s615] ss:$8 sm:$0xf]
          %v621 = vcombine.low %v500, %v507
          %v622 = vcombine.low %v514, %v521
          %v624 = vunpack.c.l.s4 1966171168
          %v625 = vunpack.c.0.s8 %v624
          %v626 = vlaneseq
          %v627 = vshrl.u32 %v626, 7
          %v628 = vsub.s32 %v625, %v627
          %v629 = vrot.slane %v621, %v628
          %v631 = vunpack.c.l.s4 1966171168
          %v632 = vunpack.c.0.s8 %v631
          %v633 = vlaneseq
          %v634 = vshrl.u32 %v633, 7
          %v635 = vsub.s32 %v632, %v634
          %v636 = vrot.slane %v622, %v635
          %v637 = vcombine.low %v629, %v636
          %v639 = vunpack.c.l.s4 1966171168
          %v640 = vunpack.c.0.s8 %v639
          %v641 = vlaneseq
          %v642 = vshrl.u32 %v641, 7
          %v643 = vsub.s32 %v640, %v642
          %v644 = vrot.slane %v637, %v643
          %v646 = vadd.f32 %v616, %v644
          %647 = vst.msk [vmem:[%s615] ss:$8 sm:$0xf] %vm612, %v646
          %648 = vst.msk [vmem:[%s615] ss:$8 sm:$0x0] %vm612, %v646
          %s649 = scalar_lea.vmem [#allocation2], 4
          %v650 = vld [vmem:[%s649] ss:$8 sm:$0xf]
          %v655 = vcombine.high %v528, %v535
          %v656 = vcombine.high %v542, %v549
          %v658 = vunpack.c.l.s4 1966171168
          %v659 = vunpack.c.0.s8 %v658
          %v660 = vlaneseq
          %v661 = vshrl.u32 %v660, 7
          %v662 = vsub.s32 %v659, %v661
          %v663 = vrot.slane %v655, %v662
          %v665 = vunpack.c.l.s4 1966171168
          %v666 = vunpack.c.0.s8 %v665
          %v667 = vlaneseq
          %v668 = vshrl.u32 %v667, 7
          %v669 = vsub.s32 %v666, %v668
          %v670 = vrot.slane %v656, %v669
          %v671 = vcombine.high %v663, %v670
          %v673 = vunpack.c.l.s4 1966171168
          %v674 = vunpack.c.0.s8 %v673
          %v675 = vlaneseq
          %v676 = vshrl.u32 %v675, 7
          %v677 = vsub.s32 %v674, %v676
          %v678 = vrot.slane %v671, %v677
          %v679 = vcombine.high %v678, %v678
          %v681 = vadd.f32 %v650, %v679
          %682 = vst.msk [vmem:[%s649] ss:$8 sm:$0xf] %vm612, %v681
          %683 = vst.msk [vmem:[%s649] ss:$8 sm:$0x0] %vm612, %v681
          // Predicated region
          $region57: #{tpu_custom_call.1} parent=55 // pred_check
            %p684 = pneg %p337
          $region58: #{tpu_custom_call.1} parent=55 // pred_check_branch
            %686 = sbr.rel (%p684) target = $region60
          $region59: #{tpu_custom_call.1} parent=55 // pred_region
            %v687 = vadd.f32 %v430, %v434
            %v688 = vrot.slane %v687, 4
            %v689 = vadd.f32 %v687, %v688
            %v690 = vrot.slane %v689, 2
            %v691 = vadd.f32 %v689, %v690
            %v692 = vrot.slane %v691, 1
            %v693 = vadd.f32 %v691, %v692
            %v694 = vadd.f32 %v431, %v435
            %v695 = vrot.slane %v694, 4
            %v696 = vadd.f32 %v694, %v695
            %v697 = vrot.slane %v696, 2
            %v698 = vadd.f32 %v696, %v697
            %v699 = vrot.slane %v698, 1
            %v700 = vadd.f32 %v698, %v699
            %v701 = vadd.f32 %v432, %v436
            %v702 = vrot.slane %v701, 4
            %v703 = vadd.f32 %v701, %v702
            %v704 = vrot.slane %v703, 2
            %v705 = vadd.f32 %v703, %v704
            %v706 = vrot.slane %v705, 1
            %v707 = vadd.f32 %v705, %v706
            %v708 = vadd.f32 %v433, %v437
            %v709 = vrot.slane %v708, 4
            %v710 = vadd.f32 %v708, %v709
            %v711 = vrot.slane %v710, 2
            %v712 = vadd.f32 %v710, %v711
            %v713 = vrot.slane %v712, 1
            %v714 = vadd.f32 %v712, %v713
            %v719 = vcombine.low %v693, %v700
            %v720 = vcombine.low %v707, %v714
            %v722 = vunpack.c.l.s4 1966171168
            %v723 = vunpack.c.0.s8 %v722
            %v724 = vlaneseq
            %v725 = vshrl.u32 %v724, 7
            %v726 = vsub.s32 %v723, %v725
            %v727 = vrot.slane %v719, %v726
            %v729 = vunpack.c.l.s4 1966171168
            %v730 = vunpack.c.0.s8 %v729
            %v731 = vlaneseq
            %v732 = vshrl.u32 %v731, 7
            %v733 = vsub.s32 %v730, %v732
            %v734 = vrot.slane %v720, %v733
            %v735 = vcombine.low %v727, %v734
            %v737 = vunpack.c.l.s4 1966171168
            %v738 = vunpack.c.0.s8 %v737
            %v739 = vlaneseq
            %v740 = vshrl.u32 %v739, 7
            %v741 = vsub.s32 %v738, %v740
            %v742 = vrot.slane %v735, %v741
            %s744 = scalar_lea.vmem [#allocation2], 1
            %745 = vst.msk [vmem:[%s744] ss:$8 sm:$0xf] %vm612, %v742
            %746 = vst.msk [vmem:[%s744] ss:$8 sm:$0x0] %vm612, %v742
            %v751 = vcombine.low %v430, %v431
            %v752 = vcombine.low %v432, %v433
            %v754 = vunpack.c.l.s4 1966171168
            %v755 = vunpack.c.0.s8 %v754
            %v756 = vlaneseq
            %v757 = vshrl.u32 %v756, 7
            %v758 = vsub.s32 %v755, %v757
            %v759 = vrot.slane %v751, %v758
            %v761 = vunpack.c.l.s4 1966171168
            %v762 = vunpack.c.0.s8 %v761
            %v763 = vlaneseq
            %v764 = vshrl.u32 %v763, 7
            %v765 = vsub.s32 %v762, %v764
            %v766 = vrot.slane %v752, %v765
            %v767 = vcombine.low %v759, %v766
            %v769 = vunpack.c.l.s4 1966171168
            %v770 = vunpack.c.0.s8 %v769
            %v771 = vlaneseq
            %v772 = vshrl.u32 %v771, 7
            %v773 = vsub.s32 %v770, %v772
            %v774 = vrot.slane %v767, %v773
            %s776 = scalar_lea.vmem [#allocation2], 5
            %777 = vst.msk [vmem:[%s776] ss:$8 sm:$0xf] %vm612, %v774
            %778 = vst.msk [vmem:[%s776] ss:$8 sm:$0x0] %vm612, %v774
            %v783 = vcombine.high %v434, %v435
            %v784 = vcombine.high %v436, %v437
            %v786 = vunpack.c.l.s4 1966171168
            %v787 = vunpack.c.0.s8 %v786
            %v788 = vlaneseq
            %v789 = vshrl.u32 %v788, 7
            %v790 = vsub.s32 %v787, %v789
            %v791 = vrot.slane %v783, %v790
            %v793 = vunpack.c.l.s4 1966171168
            %v794 = vunpack.c.0.s8 %v793
            %v795 = vlaneseq
            %v796 = vshrl.u32 %v795, 7
            %v797 = vsub.s32 %v794, %v796
            %v798 = vrot.slane %v784, %v797
            %v799 = vcombine.high %v791, %v798
            %v801 = vunpack.c.l.s4 1966171168
            %v802 = vunpack.c.0.s8 %v801
            %v803 = vlaneseq
            %v804 = vshrl.u32 %v803, 7
            %v805 = vsub.s32 %v802, %v804
            %v806 = vrot.slane %v799, %v805
            %v807 = vcombine.high %v806, %v806
            %s809 = scalar_lea.vmem [#allocation2], 6
            %810 = vst.msk [vmem:[%s809] ss:$8 sm:$0xf] %vm612, %v807
            %811 = vst.msk [vmem:[%s809] ss:$8 sm:$0x0] %vm612, %v807
          $region60: #{tpu_custom_call.1} parent=55 // pred_fallthru
            _
          %p812 = scmp.eq.s32.totalorder %s23, 1
          // Predicated region
          $region61: #{tpu_custom_call.1} parent=55 // pred_check
            %p813 = pneg %p812
          $region62: #{tpu_custom_call.1} parent=55 // pred_check_branch
            %815 = sbr.rel (%p813) target = $region64
          $region63: #{tpu_custom_call.1} parent=55 // pred_region
            %v816 = vadd.f32 %v486, %v490
            %v817 = vrot.slane %v816, 4
            %v818 = vadd.f32 %v816, %v817
            %v819 = vrot.slane %v818, 2
            %v820 = vadd.f32 %v818, %v819
            %v821 = vrot.slane %v820, 1
            %v822 = vadd.f32 %v820, %v821
            %v823 = vadd.f32 %v487, %v491
            %v824 = vrot.slane %v823, 4
            %v825 = vadd.f32 %v823, %v824
            %v826 = vrot.slane %v825, 2
            %v827 = vadd.f32 %v825, %v826
            %v828 = vrot.slane %v827, 1
            %v829 = vadd.f32 %v827, %v828
            %v830 = vadd.f32 %v488, %v492
            %v831 = vrot.slane %v830, 4
            %v832 = vadd.f32 %v830, %v831
            %v833 = vrot.slane %v832, 2
            %v834 = vadd.f32 %v832, %v833
            %v835 = vrot.slane %v834, 1
            %v836 = vadd.f32 %v834, %v835
            %v837 = vadd.f32 %v489, %v493
            %v838 = vrot.slane %v837, 4
            %v839 = vadd.f32 %v837, %v838
            %v840 = vrot.slane %v839, 2
            %v841 = vadd.f32 %v839, %v840
            %v842 = vrot.slane %v841, 1
            %v843 = vadd.f32 %v841, %v842
            %v848 = vcombine.low %v822, %v829
            %v849 = vcombine.low %v836, %v843
            %v851 = vunpack.c.l.s4 1966171168
            %v852 = vunpack.c.0.s8 %v851
            %v853 = vlaneseq
            %v854 = vshrl.u32 %v853, 7
            %v855 = vsub.s32 %v852, %v854
            %v856 = vrot.slane %v848, %v855
            %v858 = vunpack.c.l.s4 1966171168
            %v859 = vunpack.c.0.s8 %v858
            %v860 = vlaneseq
            %v861 = vshrl.u32 %v860, 7
            %v862 = vsub.s32 %v859, %v861
            %v863 = vrot.slane %v849, %v862
            %v864 = vcombine.low %v856, %v863
            %v866 = vunpack.c.l.s4 1966171168
            %v867 = vunpack.c.0.s8 %v866
            %v868 = vlaneseq
            %v869 = vshrl.u32 %v868, 7
            %v870 = vsub.s32 %v867, %v869
            %v871 = vrot.slane %v864, %v870
            %s873 = scalar_lea.vmem [#allocation2], 2
            %874 = vst.msk [vmem:[%s873] ss:$8 sm:$0xf] %vm612, %v871
            %875 = vst.msk [vmem:[%s873] ss:$8 sm:$0x0] %vm612, %v871
            %v880 = vcombine.low %v486, %v487
            %v881 = vcombine.low %v488, %v489
            %v883 = vunpack.c.l.s4 1966171168
            %v884 = vunpack.c.0.s8 %v883
            %v885 = vlaneseq
            %v886 = vshrl.u32 %v885, 7
            %v887 = vsub.s32 %v884, %v886
            %v888 = vrot.slane %v880, %v887
            %v890 = vunpack.c.l.s4 1966171168
            %v891 = vunpack.c.0.s8 %v890
            %v892 = vlaneseq
            %v893 = vshrl.u32 %v892, 7
            %v894 = vsub.s32 %v891, %v893
            %v895 = vrot.slane %v881, %v894
            %v896 = vcombine.low %v888, %v895
            %v898 = vunpack.c.l.s4 1966171168
            %v899 = vunpack.c.0.s8 %v898
            %v900 = vlaneseq
            %v901 = vshrl.u32 %v900, 7
            %v902 = vsub.s32 %v899, %v901
            %v903 = vrot.slane %v896, %v902
            %s905 = scalar_lea.vmem [#allocation2], 7
            %906 = vst.msk [vmem:[%s905] ss:$8 sm:$0xf] %vm612, %v903
            %907 = vst.msk [vmem:[%s905] ss:$8 sm:$0x0] %vm612, %v903
            %v912 = vcombine.high %v490, %v491
            %v913 = vcombine.high %v492, %v493
            %v915 = vunpack.c.l.s4 1966171168
            %v916 = vunpack.c.0.s8 %v915
            %v917 = vlaneseq
            %v918 = vshrl.u32 %v917, 7
            %v919 = vsub.s32 %v916, %v918
            %v920 = vrot.slane %v912, %v919
            %v922 = vunpack.c.l.s4 1966171168
            %v923 = vunpack.c.0.s8 %v922
            %v924 = vlaneseq
            %v925 = vshrl.u32 %v924, 7
            %v926 = vsub.s32 %v923, %v925
            %v927 = vrot.slane %v913, %v926
            %v928 = vcombine.high %v920, %v927
            %v930 = vunpack.c.l.s4 1966171168
            %v931 = vunpack.c.0.s8 %v930
            %v932 = vlaneseq
            %v933 = vshrl.u32 %v932, 7
            %v934 = vsub.s32 %v931, %v933
            %v935 = vrot.slane %v928, %v934
            %v936 = vcombine.high %v935, %v935
            %s938 = scalar_lea.vmem [#allocation2], 32
            %939 = vst.msk [vmem:[%s938] ss:$8 sm:$0xf] %vm612, %v936
            %940 = vst.msk [vmem:[%s938] ss:$8 sm:$0x0] %vm612, %v936
          $region64: #{tpu_custom_call.1} parent=55 // pred_fallthru
            _
        $region56: #{tpu_custom_call.1} parent=43 // pred_fallthru
          _
        %p941 = scmp.eq.s32.totalorder %s22, 2
        // Predicated region
        $region65: #{tpu_custom_call.1} parent=43 // pred_check
          %p942 = pneg %p941
        $region66: #{tpu_custom_call.1} parent=43 // pred_check_branch
          %944 = sbr.rel (%p942) target = $region68
        $region67: #{tpu_custom_call.1} parent=43 // pred_region
          %v945 = vld [vmem:[%s332] sm:$0xff]
          %v946 = vld [vmem:[%s332 + $0x8] sm:$0xff]
          %v947 = vld [vmem:[%s332 + $0x10] sm:$0xff]
          %v948 = vld [vmem:[%s332 + $0x18] sm:$0xff]
          %v949 = vld [vmem:[%s332 + $0x20] sm:$0xff]
          %v950 = vld [vmem:[%s332 + $0x28] sm:$0xff]
          %v951 = vld [vmem:[%s332 + $0x30] sm:$0xff]
          %v952 = vld [vmem:[%s332 + $0x38] sm:$0xff]
          %v953 = vld [vmem:[%s332 + $0x40] sm:$0xff]
          %v954 = vld [vmem:[%s332 + $0x48] sm:$0xff]
          %v955 = vld [vmem:[%s332 + $0x50] sm:$0xff]
          %v956 = vld [vmem:[%s332 + $0x58] sm:$0xff]
          %v957 = vld [vmem:[%s332 + $0x60] sm:$0xff]
          %v958 = vld [vmem:[%s332 + $0x68] sm:$0xff]
          %v959 = vld [vmem:[%s332 + $0x70] sm:$0xff]
          %v960 = vld [vmem:[%s332 + $0x78] sm:$0xff]
          %v961 = vld [vmem:[%s332 + $0x80] sm:$0xff]
          %v962 = vld [vmem:[%s332 + $0x88] sm:$0xff]
          %v963 = vld [vmem:[%s332 + $0x90] sm:$0xff]
          %v964 = vld [vmem:[%s332 + $0x98] sm:$0xff]
          %v965 = vld [vmem:[%s332 + $0xa0] sm:$0xff]
          %v966 = vld [vmem:[%s332 + $0xa8] sm:$0xff]
          %v967 = vld [vmem:[%s332 + $0xb0] sm:$0xff]
          %v968 = vld [vmem:[%s332 + $0xb8] sm:$0xff]
          %v969 = vld [vmem:[%s332 + $0xc0] sm:$0xff]
          %v970 = vld [vmem:[%s332 + $0xc8] sm:$0xff]
          %v971 = vld [vmem:[%s332 + $0xd0] sm:$0xff]
          %v972 = vld [vmem:[%s332 + $0xd8] sm:$0xff]
          %v973 = vld [vmem:[%s332 + $0xe0] sm:$0xff]
          %v974 = vld [vmem:[%s332 + $0xe8] sm:$0xff]
          %v975 = vld [vmem:[%s332 + $0xf0] sm:$0xff]
          %v976 = vld [vmem:[%s332 + $0xf8] sm:$0xff]
          %v977 = vld [vmem:[%s332 + $0x100] sm:$0xff]
          %v978 = vld [vmem:[%s332 + $0x108] sm:$0xff]
          %v979 = vld [vmem:[%s332 + $0x110] sm:$0xff]
          %v980 = vld [vmem:[%s332 + $0x118] sm:$0xff]
          %v981 = vld [vmem:[%s332 + $0x120] sm:$0xff]
          %v982 = vld [vmem:[%s332 + $0x128] sm:$0xff]
          %v983 = vld [vmem:[%s332 + $0x130] sm:$0xff]
          %v984 = vld [vmem:[%s332 + $0x138] sm:$0xff]
          %v985 = vld [vmem:[%s332 + $0x140] sm:$0xff]
          %v986 = vld [vmem:[%s332 + $0x148] sm:$0xff]
          %v987 = vld [vmem:[%s332 + $0x150] sm:$0xff]
          %v988 = vld [vmem:[%s332 + $0x158] sm:$0xff]
          %v989 = vld [vmem:[%s332 + $0x160] sm:$0xff]
          %v990 = vld [vmem:[%s332 + $0x168] sm:$0xff]
          %v991 = vld [vmem:[%s332 + $0x170] sm:$0xff]
          %v992 = vld [vmem:[%s332 + $0x178] sm:$0xff]
          %v993 = vld [vmem:[%s332 + $0x180] sm:$0xff]
          %v994 = vld [vmem:[%s332 + $0x188] sm:$0xff]
          %v995 = vld [vmem:[%s332 + $0x190] sm:$0xff]
          %v996 = vld [vmem:[%s332 + $0x198] sm:$0xff]
          %v997 = vld [vmem:[%s332 + $0x1a0] sm:$0xff]
          %v998 = vld [vmem:[%s332 + $0x1a8] sm:$0xff]
          %v999 = vld [vmem:[%s332 + $0x1b0] sm:$0xff]
          %v1000 = vld [vmem:[%s332 + $0x1b8] sm:$0xff]
          %v1001 = vld [vmem:[%s332 + $0x1c0] sm:$0xff]
          %v1002 = vld [vmem:[%s332 + $0x1c8] sm:$0xff]
          %v1003 = vld [vmem:[%s332 + $0x1d0] sm:$0xff]
          %v1004 = vld [vmem:[%s332 + $0x1d8] sm:$0xff]
          %v1005 = vld [vmem:[%s332 + $0x1e0] sm:$0xff]
          %v1006 = vld [vmem:[%s332 + $0x1e8] sm:$0xff]
          %v1007 = vld [vmem:[%s332 + $0x1f0] sm:$0xff]
          %v1008 = vld [vmem:[%s332 + $0x1f8] sm:$0xff]
          %v1009 = vmul.f32 %v945, 0.00390625
          %v1010 = vmul.f32 %v946, 0.00390625
          %v1011 = vmul.f32 %v947, 0.00390625
          %v1012 = vmul.f32 %v948, 0.00390625
          %v1013 = vmul.f32 %v949, 0.00390625
          %v1014 = vmul.f32 %v950, 0.00390625
          %v1015 = vmul.f32 %v951, 0.00390625
          %v1016 = vmul.f32 %v952, 0.00390625
          %v1017 = vmul.f32 %v953, 0.00390625
          %v1018 = vmul.f32 %v954, 0.00390625
          %v1019 = vmul.f32 %v955, 0.00390625
          %v1020 = vmul.f32 %v956, 0.00390625
          %v1021 = vmul.f32 %v957, 0.00390625
          %v1022 = vmul.f32 %v958, 0.00390625
          %v1023 = vmul.f32 %v959, 0.00390625
          %v1024 = vmul.f32 %v960, 0.00390625
          %v1025 = vmul.f32 %v961, 0.00390625
          %v1026 = vmul.f32 %v962, 0.00390625
          %v1027 = vmul.f32 %v963, 0.00390625
          %v1028 = vmul.f32 %v964, 0.00390625
          %v1029 = vmul.f32 %v965, 0.00390625
          %v1030 = vmul.f32 %v966, 0.00390625
          %v1031 = vmul.f32 %v967, 0.00390625
          %v1032 = vmul.f32 %v968, 0.00390625
          %v1033 = vmul.f32 %v969, 0.00390625
          %v1034 = vmul.f32 %v970, 0.00390625
          %v1035 = vmul.f32 %v971, 0.00390625
          %v1036 = vmul.f32 %v972, 0.00390625
          %v1037 = vmul.f32 %v973, 0.00390625
          %v1038 = vmul.f32 %v974, 0.00390625
          %v1039 = vmul.f32 %v975, 0.00390625
          %v1040 = vmul.f32 %v976, 0.00390625
          %v1041 = vmul.f32 %v977, 0.00390625
          %v1042 = vmul.f32 %v978, 0.00390625
          %v1043 = vmul.f32 %v979, 0.00390625
          %v1044 = vmul.f32 %v980, 0.00390625
          %v1045 = vmul.f32 %v981, 0.00390625
          %v1046 = vmul.f32 %v982, 0.00390625
          %v1047 = vmul.f32 %v983, 0.00390625
          %v1048 = vmul.f32 %v984, 0.00390625
          %v1049 = vmul.f32 %v985, 0.00390625
          %v1050 = vmul.f32 %v986, 0.00390625
          %v1051 = vmul.f32 %v987, 0.00390625
          %v1052 = vmul.f32 %v988, 0.00390625
          %v1053 = vmul.f32 %v989, 0.00390625
          %v1054 = vmul.f32 %v990, 0.00390625
          %v1055 = vmul.f32 %v991, 0.00390625
          %v1056 = vmul.f32 %v992, 0.00390625
          %v1057 = vmul.f32 %v993, 0.00390625
          %v1058 = vmul.f32 %v994, 0.00390625
          %v1059 = vmul.f32 %v995, 0.00390625
          %v1060 = vmul.f32 %v996, 0.00390625
          %v1061 = vmul.f32 %v997, 0.00390625
          %v1062 = vmul.f32 %v998, 0.00390625
          %v1063 = vmul.f32 %v999, 0.00390625
          %v1064 = vmul.f32 %v1000, 0.00390625
          %v1065 = vmul.f32 %v1001, 0.00390625
          %v1066 = vmul.f32 %v1002, 0.00390625
          %v1067 = vmul.f32 %v1003, 0.00390625
          %v1068 = vmul.f32 %v1004, 0.00390625
          %v1069 = vmul.f32 %v1005, 0.00390625
          %v1070 = vmul.f32 %v1006, 0.00390625
          %v1071 = vmul.f32 %v1007, 0.00390625
          %v1072 = vmul.f32 %v1008, 0.00390625
          %v1073 = vadd.f32 %v1009, %v1017
          %v1074 = vadd.f32 %v1073, %v1025
          %v1075 = vadd.f32 %v1074, %v1033
          %v1076 = vadd.f32 %v1075, %v1041
          %v1077 = vadd.f32 %v1076, %v1049
          %v1078 = vadd.f32 %v1077, %v1057
          %v1079 = vadd.f32 %v1078, %v1065
          %v1080 = vadd.f32 %v1010, %v1018
          %v1081 = vadd.f32 %v1080, %v1026
          %v1082 = vadd.f32 %v1081, %v1034
          %v1083 = vadd.f32 %v1082, %v1042
          %v1084 = vadd.f32 %v1083, %v1050
          %v1085 = vadd.f32 %v1084, %v1058
          %v1086 = vadd.f32 %v1085, %v1066
          %v1087 = vadd.f32 %v1011, %v1019
          %v1088 = vadd.f32 %v1087, %v1027
          %v1089 = vadd.f32 %v1088, %v1035
          %v1090 = vadd.f32 %v1089, %v1043
          %v1091 = vadd.f32 %v1090, %v1051
          %v1092 = vadd.f32 %v1091, %v1059
          %v1093 = vadd.f32 %v1092, %v1067
          %v1094 = vadd.f32 %v1012, %v1020
          %v1095 = vadd.f32 %v1094, %v1028
          %v1096 = vadd.f32 %v1095, %v1036
          %v1097 = vadd.f32 %v1096, %v1044
          %v1098 = vadd.f32 %v1097, %v1052
          %v1099 = vadd.f32 %v1098, %v1060
          %v1100 = vadd.f32 %v1099, %v1068
          %v1101 = vadd.f32 %v1013, %v1021
          %v1102 = vadd.f32 %v1101, %v1029
          %v1103 = vadd.f32 %v1102, %v1037
          %v1104 = vadd.f32 %v1103, %v1045
          %v1105 = vadd.f32 %v1104, %v1053
          %v1106 = vadd.f32 %v1105, %v1061
          %v1107 = vadd.f32 %v1106, %v1069
          %v1108 = vadd.f32 %v1014, %v1022
          %v1109 = vadd.f32 %v1108, %v1030
          %v1110 = vadd.f32 %v1109, %v1038
          %v1111 = vadd.f32 %v1110, %v1046
          %v1112 = vadd.f32 %v1111, %v1054
          %v1113 = vadd.f32 %v1112, %v1062
          %v1114 = vadd.f32 %v1113, %v1070
          %v1115 = vadd.f32 %v1015, %v1023
          %v1116 = vadd.f32 %v1115, %v1031
          %v1117 = vadd.f32 %v1116, %v1039
          %v1118 = vadd.f32 %v1117, %v1047
          %v1119 = vadd.f32 %v1118, %v1055
          %v1120 = vadd.f32 %v1119, %v1063
          %v1121 = vadd.f32 %v1120, %v1071
          %v1122 = vadd.f32 %v1016, %v1024
          %v1123 = vadd.f32 %v1122, %v1032
          %v1124 = vadd.f32 %v1123, %v1040
          %v1125 = vadd.f32 %v1124, %v1048
          %v1126 = vadd.f32 %v1125, %v1056
          %v1127 = vadd.f32 %v1126, %v1064
          %v1128 = vadd.f32 %v1127, %v1072
          %v1129 = vld [vmem:[#allocation2] ss:$8 sm:$0xf]
          %v1130 = vadd.f32 %v1079, %v1107
          %v1131 = vrot.slane %v1130, 4
          %v1132 = vadd.f32 %v1130, %v1131
          %v1133 = vrot.slane %v1132, 2
          %v1134 = vadd.f32 %v1132, %v1133
          %v1135 = vrot.slane %v1134, 1
          %v1136 = vadd.f32 %v1134, %v1135
          %v1137 = vadd.f32 %v1086, %v1114
          %v1138 = vrot.slane %v1137, 4
          %v1139 = vadd.f32 %v1137, %v1138
          %v1140 = vrot.slane %v1139, 2
          %v1141 = vadd.f32 %v1139, %v1140
          %v1142 = vrot.slane %v1141, 1
          %v1143 = vadd.f32 %v1141, %v1142
          %v1144 = vadd.f32 %v1093, %v1121
          %v1145 = vrot.slane %v1144, 4
          %v1146 = vadd.f32 %v1144, %v1145
          %v1147 = vrot.slane %v1146, 2
          %v1148 = vadd.f32 %v1146, %v1147
          %v1149 = vrot.slane %v1148, 1
          %v1150 = vadd.f32 %v1148, %v1149
          %v1151 = vadd.f32 %v1100, %v1128
          %v1152 = vrot.slane %v1151, 4
          %v1153 = vadd.f32 %v1151, %v1152
          %v1154 = vrot.slane %v1153, 2
          %v1155 = vadd.f32 %v1153, %v1154
          %v1156 = vrot.slane %v1155, 1
          %v1157 = vadd.f32 %v1155, %v1156
          %v1162 = vcombine.low %v1136, %v1143
          %v1163 = vcombine.low %v1150, %v1157
          %v1165 = vunpack.c.l.s4 1966171168
          %v1166 = vunpack.c.0.s8 %v1165
          %v1167 = vlaneseq
          %v1168 = vshrl.u32 %v1167, 7
          %v1169 = vsub.s32 %v1166, %v1168
          %v1170 = vrot.slane %v1162, %v1169
          %v1172 = vunpack.c.l.s4 1966171168
          %v1173 = vunpack.c.0.s8 %v1172
          %v1174 = vlaneseq
          %v1175 = vshrl.u32 %v1174, 7
          %v1176 = vsub.s32 %v1173, %v1175
          %v1177 = vrot.slane %v1163, %v1176
          %v1178 = vcombine.low %v1170, %v1177
          %v1180 = vunpack.c.l.s4 1966171168
          %v1181 = vunpack.c.0.s8 %v1180
          %v1182 = vlaneseq
          %v1183 = vshrl.u32 %v1182, 7
          %v1184 = vsub.s32 %v1181, %v1183
          %v1185 = vrot.slane %v1178, %v1184
          %v1187 = vadd.f32 %v1129, %v1185
          %v1188 = vlaneseq
          %vm1189 = vcmp.ge.s32.totalorder %v1188, 0
          %vm1190 = vcmp.lt.s32.totalorder %v1188, 512
          %vm1191 = vmand %vm1189, %vm1190
          %1192 = vst.msk [vmem:[#allocation2] ss:$8 sm:$0xf] %vm1191, %v1187
          %1193 = vst.msk [vmem:[#allocation2] ss:$8 sm:$0x0] %vm1191, %v1187
          %s1194 = scalar_lea.vmem [#allocation2], 3
          %v1195 = vld [vmem:[%s1194] ss:$8 sm:$0xf]
          %v1200 = vcombine.low %v1079, %v1086
          %v1201 = vcombine.low %v1093, %v1100
          %v1203 = vunpack.c.l.s4 1966171168
          %v1204 = vunpack.c.0.s8 %v1203
          %v1205 = vlaneseq
          %v1206 = vshrl.u32 %v1205, 7
          %v1207 = vsub.s32 %v1204, %v1206
          %v1208 = vrot.slane %v1200, %v1207
          %v1210 = vunpack.c.l.s4 1966171168
          %v1211 = vunpack.c.0.s8 %v1210
          %v1212 = vlaneseq
          %v1213 = vshrl.u32 %v1212, 7
          %v1214 = vsub.s32 %v1211, %v1213
          %v1215 = vrot.slane %v1201, %v1214
          %v1216 = vcombine.low %v1208, %v1215
          %v1218 = vunpack.c.l.s4 1966171168
          %v1219 = vunpack.c.0.s8 %v1218
          %v1220 = vlaneseq
          %v1221 = vshrl.u32 %v1220, 7
          %v1222 = vsub.s32 %v1219, %v1221
          %v1223 = vrot.slane %v1216, %v1222
          %v1225 = vadd.f32 %v1195, %v1223
          %1226 = vst.msk [vmem:[%s1194] ss:$8 sm:$0xf] %vm1191, %v1225
          %1227 = vst.msk [vmem:[%s1194] ss:$8 sm:$0x0] %vm1191, %v1225
          %s1228 = scalar_lea.vmem [#allocation2], 4
          %v1229 = vld [vmem:[%s1228] ss:$8 sm:$0xf]
          %v1234 = vcombine.high %v1107, %v1114
          %v1235 = vcombine.high %v1121, %v1128
          %v1237 = vunpack.c.l.s4 1966171168
          %v1238 = vunpack.c.0.s8 %v1237
          %v1239 = vlaneseq
          %v1240 = vshrl.u32 %v1239, 7
          %v1241 = vsub.s32 %v1238, %v1240
          %v1242 = vrot.slane %v1234, %v1241
          %v1244 = vunpack.c.l.s4 1966171168
          %v1245 = vunpack.c.0.s8 %v1244
          %v1246 = vlaneseq
          %v1247 = vshrl.u32 %v1246, 7
          %v1248 = vsub.s32 %v1245, %v1247
          %v1249 = vrot.slane %v1235, %v1248
          %v1250 = vcombine.high %v1242, %v1249
          %v1252 = vunpack.c.l.s4 1966171168
          %v1253 = vunpack.c.0.s8 %v1252
          %v1254 = vlaneseq
          %v1255 = vshrl.u32 %v1254, 7
          %v1256 = vsub.s32 %v1253, %v1255
          %v1257 = vrot.slane %v1250, %v1256
          %v1258 = vcombine.high %v1257, %v1257
          %v1260 = vadd.f32 %v1229, %v1258
          %1261 = vst.msk [vmem:[%s1228] ss:$8 sm:$0xf] %vm1191, %v1260
          %1262 = vst.msk [vmem:[%s1228] ss:$8 sm:$0x0] %vm1191, %v1260
          // Predicated region
          $region69: #{tpu_custom_call.1} parent=67 // pred_check
            %p1263 = pneg %p337
          $region70: #{tpu_custom_call.1} parent=67 // pred_check_branch
            %1265 = sbr.rel (%p1263) target = $region72
          $region71: #{tpu_custom_call.1} parent=67 // pred_region
            %v1266 = vadd.f32 %v1009, %v1013
            %v1267 = vrot.slane %v1266, 4
            %v1268 = vadd.f32 %v1266, %v1267
            %v1269 = vrot.slane %v1268, 2
            %v1270 = vadd.f32 %v1268, %v1269
            %v1271 = vrot.slane %v1270, 1
            %v1272 = vadd.f32 %v1270, %v1271
            %v1273 = vadd.f32 %v1010, %v1014
            %v1274 = vrot.slane %v1273, 4
            %v1275 = vadd.f32 %v1273, %v1274
            %v1276 = vrot.slane %v1275, 2
            %v1277 = vadd.f32 %v1275, %v1276
            %v1278 = vrot.slane %v1277, 1
            %v1279 = vadd.f32 %v1277, %v1278
            %v1280 = vadd.f32 %v1011, %v1015
            %v1281 = vrot.slane %v1280, 4
            %v1282 = vadd.f32 %v1280, %v1281
            %v1283 = vrot.slane %v1282, 2
            %v1284 = vadd.f32 %v1282, %v1283
            %v1285 = vrot.slane %v1284, 1
            %v1286 = vadd.f32 %v1284, %v1285
            %v1287 = vadd.f32 %v1012, %v1016
            %v1288 = vrot.slane %v1287, 4
            %v1289 = vadd.f32 %v1287, %v1288
            %v1290 = vrot.slane %v1289, 2
            %v1291 = vadd.f32 %v1289, %v1290
            %v1292 = vrot.slane %v1291, 1
            %v1293 = vadd.f32 %v1291, %v1292
            %v1298 = vcombine.low %v1272, %v1279
            %v1299 = vcombine.low %v1286, %v1293
            %v1301 = vunpack.c.l.s4 1966171168
            %v1302 = vunpack.c.0.s8 %v1301
            %v1303 = vlaneseq
            %v1304 = vshrl.u32 %v1303, 7
            %v1305 = vsub.s32 %v1302, %v1304
            %v1306 = vrot.slane %v1298, %v1305
            %v1308 = vunpack.c.l.s4 1966171168
            %v1309 = vunpack.c.0.s8 %v1308
            %v1310 = vlaneseq
            %v1311 = vshrl.u32 %v1310, 7
            %v1312 = vsub.s32 %v1309, %v1311
            %v1313 = vrot.slane %v1299, %v1312
            %v1314 = vcombine.low %v1306, %v1313
            %v1316 = vunpack.c.l.s4 1966171168
            %v1317 = vunpack.c.0.s8 %v1316
            %v1318 = vlaneseq
            %v1319 = vshrl.u32 %v1318, 7
            %v1320 = vsub.s32 %v1317, %v1319
            %v1321 = vrot.slane %v1314, %v1320
            %s1323 = scalar_lea.vmem [#allocation2], 1
            %1324 = vst.msk [vmem:[%s1323] ss:$8 sm:$0xf] %vm1191, %v1321
            %1325 = vst.msk [vmem:[%s1323] ss:$8 sm:$0x0] %vm1191, %v1321
            %v1330 = vcombine.low %v1009, %v1010
            %v1331 = vcombine.low %v1011, %v1012
            %v1333 = vunpack.c.l.s4 1966171168
            %v1334 = vunpack.c.0.s8 %v1333
            %v1335 = vlaneseq
            %v1336 = vshrl.u32 %v1335, 7
            %v1337 = vsub.s32 %v1334, %v1336
            %v1338 = vrot.slane %v1330, %v1337
            %v1340 = vunpack.c.l.s4 1966171168
            %v1341 = vunpack.c.0.s8 %v1340
            %v1342 = vlaneseq
            %v1343 = vshrl.u32 %v1342, 7
            %v1344 = vsub.s32 %v1341, %v1343
            %v1345 = vrot.slane %v1331, %v1344
            %v1346 = vcombine.low %v1338, %v1345
            %v1348 = vunpack.c.l.s4 1966171168
            %v1349 = vunpack.c.0.s8 %v1348
            %v1350 = vlaneseq
            %v1351 = vshrl.u32 %v1350, 7
            %v1352 = vsub.s32 %v1349, %v1351
            %v1353 = vrot.slane %v1346, %v1352
            %s1355 = scalar_lea.vmem [#allocation2], 5
            %1356 = vst.msk [vmem:[%s1355] ss:$8 sm:$0xf] %vm1191, %v1353
            %1357 = vst.msk [vmem:[%s1355] ss:$8 sm:$0x0] %vm1191, %v1353
            %v1362 = vcombine.high %v1013, %v1014
            %v1363 = vcombine.high %v1015, %v1016
            %v1365 = vunpack.c.l.s4 1966171168
            %v1366 = vunpack.c.0.s8 %v1365
            %v1367 = vlaneseq
            %v1368 = vshrl.u32 %v1367, 7
            %v1369 = vsub.s32 %v1366, %v1368
            %v1370 = vrot.slane %v1362, %v1369
            %v1372 = vunpack.c.l.s4 1966171168
            %v1373 = vunpack.c.0.s8 %v1372
            %v1374 = vlaneseq
            %v1375 = vshrl.u32 %v1374, 7
            %v1376 = vsub.s32 %v1373, %v1375
            %v1377 = vrot.slane %v1363, %v1376
            %v1378 = vcombine.high %v1370, %v1377
            %v1380 = vunpack.c.l.s4 1966171168
            %v1381 = vunpack.c.0.s8 %v1380
            %v1382 = vlaneseq
            %v1383 = vshrl.u32 %v1382, 7
            %v1384 = vsub.s32 %v1381, %v1383
            %v1385 = vrot.slane %v1378, %v1384
            %v1386 = vcombine.high %v1385, %v1385
            %s1388 = scalar_lea.vmem [#allocation2], 6
            %1389 = vst.msk [vmem:[%s1388] ss:$8 sm:$0xf] %vm1191, %v1386
            %1390 = vst.msk [vmem:[%s1388] ss:$8 sm:$0x0] %vm1191, %v1386
          $region72: #{tpu_custom_call.1} parent=67 // pred_fallthru
            _
          %p1391 = scmp.eq.s32.totalorder %s23, 1
          // Predicated region
          $region73: #{tpu_custom_call.1} parent=67 // pred_check
            %p1392 = pneg %p1391
          $region74: #{tpu_custom_call.1} parent=67 // pred_check_branch
            %1394 = sbr.rel (%p1392) target = $region76
          $region75: #{tpu_custom_call.1} parent=67 // pred_region
            %v1395 = vadd.f32 %v1065, %v1069
            %v1396 = vrot.slane %v1395, 4
            %v1397 = vadd.f32 %v1395, %v1396
            %v1398 = vrot.slane %v1397, 2
            %v1399 = vadd.f32 %v1397, %v1398
            %v1400 = vrot.slane %v1399, 1
            %v1401 = vadd.f32 %v1399, %v1400
            %v1402 = vadd.f32 %v1066, %v1070
            %v1403 = vrot.slane %v1402, 4
            %v1404 = vadd.f32 %v1402, %v1403
            %v1405 = vrot.slane %v1404, 2
            %v1406 = vadd.f32 %v1404, %v1405
            %v1407 = vrot.slane %v1406, 1
            %v1408 = vadd.f32 %v1406, %v1407
            %v1409 = vadd.f32 %v1067, %v1071
            %v1410 = vrot.slane %v1409, 4
            %v1411 = vadd.f32 %v1409, %v1410
            %v1412 = vrot.slane %v1411, 2
            %v1413 = vadd.f32 %v1411, %v1412
            %v1414 = vrot.slane %v1413, 1
            %v1415 = vadd.f32 %v1413, %v1414
            %v1416 = vadd.f32 %v1068, %v1072
            %v1417 = vrot.slane %v1416, 4
            %v1418 = vadd.f32 %v1416, %v1417
            %v1419 = vrot.slane %v1418, 2
            %v1420 = vadd.f32 %v1418, %v1419
            %v1421 = vrot.slane %v1420, 1
            %v1422 = vadd.f32 %v1420, %v1421
            %v1427 = vcombine.low %v1401, %v1408
            %v1428 = vcombine.low %v1415, %v1422
            %v1430 = vunpack.c.l.s4 1966171168
            %v1431 = vunpack.c.0.s8 %v1430
            %v1432 = vlaneseq
            %v1433 = vshrl.u32 %v1432, 7
            %v1434 = vsub.s32 %v1431, %v1433
            %v1435 = vrot.slane %v1427, %v1434
            %v1437 = vunpack.c.l.s4 1966171168
            %v1438 = vunpack.c.0.s8 %v1437
            %v1439 = vlaneseq
            %v1440 = vshrl.u32 %v1439, 7
            %v1441 = vsub.s32 %v1438, %v1440
            %v1442 = vrot.slane %v1428, %v1441
            %v1443 = vcombine.low %v1435, %v1442
            %v1445 = vunpack.c.l.s4 1966171168
            %v1446 = vunpack.c.0.s8 %v1445
            %v1447 = vlaneseq
            %v1448 = vshrl.u32 %v1447, 7
            %v1449 = vsub.s32 %v1446, %v1448
            %v1450 = vrot.slane %v1443, %v1449
            %s1452 = scalar_lea.vmem [#allocation2], 2
            %1453 = vst.msk [vmem:[%s1452] ss:$8 sm:$0xf] %vm1191, %v1450
            %1454 = vst.msk [vmem:[%s1452] ss:$8 sm:$0x0] %vm1191, %v1450
            %v1459 = vcombine.low %v1065, %v1066
            %v1460 = vcombine.low %v1067, %v1068
            %v1462 = vunpack.c.l.s4 1966171168
            %v1463 = vunpack.c.0.s8 %v1462
            %v1464 = vlaneseq
            %v1465 = vshrl.u32 %v1464, 7
            %v1466 = vsub.s32 %v1463, %v1465
            %v1467 = vrot.slane %v1459, %v1466
            %v1469 = vunpack.c.l.s4 1966171168
            %v1470 = vunpack.c.0.s8 %v1469
            %v1471 = vlaneseq
            %v1472 = vshrl.u32 %v1471, 7
            %v1473 = vsub.s32 %v1470, %v1472
            %v1474 = vrot.slane %v1460, %v1473
            %v1475 = vcombine.low %v1467, %v1474
            %v1477 = vunpack.c.l.s4 1966171168
            %v1478 = vunpack.c.0.s8 %v1477
            %v1479 = vlaneseq
            %v1480 = vshrl.u32 %v1479, 7
            %v1481 = vsub.s32 %v1478, %v1480
            %v1482 = vrot.slane %v1475, %v1481
            %s1484 = scalar_lea.vmem [#allocation2], 7
            %1485 = vst.msk [vmem:[%s1484] ss:$8 sm:$0xf] %vm1191, %v1482
            %1486 = vst.msk [vmem:[%s1484] ss:$8 sm:$0x0] %vm1191, %v1482
            %v1491 = vcombine.high %v1069, %v1070
            %v1492 = vcombine.high %v1071, %v1072
            %v1494 = vunpack.c.l.s4 1966171168
            %v1495 = vunpack.c.0.s8 %v1494
            %v1496 = vlaneseq
            %v1497 = vshrl.u32 %v1496, 7
            %v1498 = vsub.s32 %v1495, %v1497
            %v1499 = vrot.slane %v1491, %v1498
            %v1501 = vunpack.c.l.s4 1966171168
            %v1502 = vunpack.c.0.s8 %v1501
            %v1503 = vlaneseq
            %v1504 = vshrl.u32 %v1503, 7
            %v1505 = vsub.s32 %v1502, %v1504
            %v1506 = vrot.slane %v1492, %v1505
            %v1507 = vcombine.high %v1499, %v1506
            %v1509 = vunpack.c.l.s4 1966171168
            %v1510 = vunpack.c.0.s8 %v1509
            %v1511 = vlaneseq
            %v1512 = vshrl.u32 %v1511, 7
            %v1513 = vsub.s32 %v1510, %v1512
            %v1514 = vrot.slane %v1507, %v1513
            %v1515 = vcombine.high %v1514, %v1514
            %s1517 = scalar_lea.vmem [#allocation2], 32
            %1518 = vst.msk [vmem:[%s1517] ss:$8 sm:$0xf] %vm1191, %v1515
            %1519 = vst.msk [vmem:[%s1517] ss:$8 sm:$0x0] %vm1191, %v1515
          $region76: #{tpu_custom_call.1} parent=67 // pred_fallthru
            _
        $region68: #{tpu_custom_call.1} parent=43 // pred_fallthru
          _
        %p1520 = scmp.eq.s32.totalorder %s23, 1
        // Predicated region
        $region77: #{tpu_custom_call.1} parent=43 // pred_check
          %p1521 = pneg %p1520
        $region78: #{tpu_custom_call.1} parent=43 // pred_check_branch
          %1523 = sbr.rel (%p1521) target = $region80
        $region79: #{tpu_custom_call.1} parent=43 // pred_region
          %v1524 = vld [vmem:[#allocation2] ss:$8 sm:$0xf]
          %s1525 = scalar_lea.vmem [#allocation2], 1
          %v1526 = vld [vmem:[%s1525] ss:$8 sm:$0xf]
          %s1527 = scalar_lea.vmem [#allocation2], 2
          %v1528 = vld [vmem:[%s1527] ss:$8 sm:$0xf]
          %s1529 = scalar_lea.vmem [#allocation2], 3
          %v1530 = vld [vmem:[%s1529] ss:$8 sm:$0xf]
          %s1531 = scalar_lea.vmem [#allocation2], 4
          %v1532 = vld [vmem:[%s1531] ss:$8 sm:$0xf]
          %s1533 = scalar_lea.vmem [#allocation2], 5
          %v1534 = vld [vmem:[%s1533] ss:$8 sm:$0xf]
          %s1535 = scalar_lea.vmem [#allocation2], 6
          %v1536 = vld [vmem:[%s1535] ss:$8 sm:$0xf]
          %s1537 = scalar_lea.vmem [#allocation2], 7
          %v1538 = vld [vmem:[%s1537] ss:$8 sm:$0xf]
          %s1539 = scalar_lea.vmem [#allocation2], 32
          %v1540 = vld [vmem:[%s1539] ss:$8 sm:$0xf]
          %v1541 = vsub.f32 %v1524, %v1528
          %v1542 = vsub.f32 %v1541, %v1532
          %v1543 = vadd.f32 %v1542, %v1540
          %v1544 = vsub.f32 %v1541, %v1530
          %v1545 = vadd.f32 %v1544, %v1538
          %v1546 = vsub.f32 %v1524, %v1532
          %v1547 = vsub.f32 %v1524, %v1530
          %v1548 = vsub.f32 %v1524, %v1526
          %v1549 = vsub.f32 %v1548, %v1532
          %v1550 = vadd.f32 %v1549, %v1536
          %v1551 = vsub.f32 %v1548, %v1530
          %v1552 = vadd.f32 %v1551, %v1534
          %v1554 = vlaneseq
          %v1555 = vshrl.u32 %v1554, 7
          %v1556 = vsub.s32 0, %v1555
          %v1557 = vrot.slane %v1543, %v1556
          %v1558 = vlaneseq
          %v1559 = vshrl.u32 %v1558, 7
          %v1560 = vsub.s32 1, %v1559
          %v1561 = vrot.slane %v1543, %v1560
          %v1562 = vlaneseq
          %v1563 = vshrl.u32 %v1562, 7
          %v1564 = vsub.s32 2, %v1563
          %v1565 = vrot.slane %v1543, %v1564
          %v1566 = vlaneseq
          %v1567 = vshrl.u32 %v1566, 7
          %v1568 = vsub.s32 3, %v1567
          %v1569 = vrot.slane %v1543, %v1568
          %v1575 = vlaneseq
          %v1576 = vshrl.u32 %v1575, 7
          %v1577 = vsub.s32 0, %v1576
          %v1578 = vrot.slane %v1541, %v1577
          %v1579 = vlaneseq
          %v1580 = vshrl.u32 %v1579, 7
          %v1581 = vsub.s32 1, %v1580
          %v1582 = vrot.slane %v1541, %v1581
          %v1583 = vlaneseq
          %v1584 = vshrl.u32 %v1583, 7
          %v1585 = vsub.s32 2, %v1584
          %v1586 = vrot.slane %v1541, %v1585
          %v1587 = vlaneseq
          %v1588 = vshrl.u32 %v1587, 7
          %v1589 = vsub.s32 3, %v1588
          %v1590 = vrot.slane %v1541, %v1589
          %v1596 = vlaneseq
          %v1597 = vshrl.u32 %v1596, 7
          %v1598 = vsub.s32 0, %v1597
          %v1599 = vrot.slane %v1545, %v1598
          %v1600 = vlaneseq
          %v1601 = vshrl.u32 %v1600, 7
          %v1602 = vsub.s32 1, %v1601
          %v1603 = vrot.slane %v1545, %v1602
          %v1604 = vlaneseq
          %v1605 = vshrl.u32 %v1604, 7
          %v1606 = vsub.s32 2, %v1605
          %v1607 = vrot.slane %v1545, %v1606
          %v1608 = vlaneseq
          %v1609 = vshrl.u32 %v1608, 7
          %v1610 = vsub.s32 3, %v1609
          %v1611 = vrot.slane %v1545, %v1610
          %v1617 = vlaneseq
          %v1618 = vshrl.u32 %v1617, 7
          %v1619 = vsub.s32 0, %v1618
          %v1620 = vrot.slane %v1546, %v1619
          %v1621 = vlaneseq
          %v1622 = vshrl.u32 %v1621, 7
          %v1623 = vsub.s32 1, %v1622
          %v1624 = vrot.slane %v1546, %v1623
          %v1625 = vlaneseq
          %v1626 = vshrl.u32 %v1625, 7
          %v1627 = vsub.s32 2, %v1626
          %v1628 = vrot.slane %v1546, %v1627
          %v1629 = vlaneseq
          %v1630 = vshrl.u32 %v1629, 7
          %v1631 = vsub.s32 3, %v1630
          %v1632 = vrot.slane %v1546, %v1631
          %v1638 = vlaneseq
          %v1639 = vshrl.u32 %v1638, 7
          %v1640 = vsub.s32 0, %v1639
          %v1641 = vrot.slane %v1524, %v1640
          %v1642 = vlaneseq
          %v1643 = vshrl.u32 %v1642, 7
          %v1644 = vsub.s32 1, %v1643
          %v1645 = vrot.slane %v1524, %v1644
          %v1646 = vlaneseq
          %v1647 = vshrl.u32 %v1646, 7
          %v1648 = vsub.s32 2, %v1647
          %v1649 = vrot.slane %v1524, %v1648
          %v1650 = vlaneseq
          %v1651 = vshrl.u32 %v1650, 7
          %v1652 = vsub.s32 3, %v1651
          %v1653 = vrot.slane %v1524, %v1652
          %v1659 = vlaneseq
          %v1660 = vshrl.u32 %v1659, 7
          %v1661 = vsub.s32 0, %v1660
          %v1662 = vrot.slane %v1547, %v1661
          %v1663 = vlaneseq
          %v1664 = vshrl.u32 %v1663, 7
          %v1665 = vsub.s32 1, %v1664
          %v1666 = vrot.slane %v1547, %v1665
          %v1667 = vlaneseq
          %v1668 = vshrl.u32 %v1667, 7
          %v1669 = vsub.s32 2, %v1668
          %v1670 = vrot.slane %v1547, %v1669
          %v1671 = vlaneseq
          %v1672 = vshrl.u32 %v1671, 7
          %v1673 = vsub.s32 3, %v1672
          %v1674 = vrot.slane %v1547, %v1673
          %v1680 = vlaneseq
          %v1681 = vshrl.u32 %v1680, 7
          %v1682 = vsub.s32 0, %v1681
          %v1683 = vrot.slane %v1550, %v1682
          %v1684 = vlaneseq
          %v1685 = vshrl.u32 %v1684, 7
          %v1686 = vsub.s32 1, %v1685
          %v1687 = vrot.slane %v1550, %v1686
          %v1688 = vlaneseq
          %v1689 = vshrl.u32 %v1688, 7
          %v1690 = vsub.s32 2, %v1689
          %v1691 = vrot.slane %v1550, %v1690
          %v1692 = vlaneseq
          %v1693 = vshrl.u32 %v1692, 7
          %v1694 = vsub.s32 3, %v1693
          %v1695 = vrot.slane %v1550, %v1694
          %v1701 = vlaneseq
          %v1702 = vshrl.u32 %v1701, 7
          %v1703 = vsub.s32 0, %v1702
          %v1704 = vrot.slane %v1548, %v1703
          %v1705 = vlaneseq
          %v1706 = vshrl.u32 %v1705, 7
          %v1707 = vsub.s32 1, %v1706
          %v1708 = vrot.slane %v1548, %v1707
          %v1709 = vlaneseq
          %v1710 = vshrl.u32 %v1709, 7
          %v1711 = vsub.s32 2, %v1710
          %v1712 = vrot.slane %v1548, %v1711
          %v1713 = vlaneseq
          %v1714 = vshrl.u32 %v1713, 7
          %v1715 = vsub.s32 3, %v1714
          %v1716 = vrot.slane %v1548, %v1715
          %v1722 = vlaneseq
          %v1723 = vshrl.u32 %v1722, 7
          %v1724 = vsub.s32 0, %v1723
          %v1725 = vrot.slane %v1552, %v1724
          %v1726 = vlaneseq
          %v1727 = vshrl.u32 %v1726, 7
          %v1728 = vsub.s32 1, %v1727
          %v1729 = vrot.slane %v1552, %v1728
          %v1730 = vlaneseq
          %v1731 = vshrl.u32 %v1730, 7
          %v1732 = vsub.s32 2, %v1731
          %v1733 = vrot.slane %v1552, %v1732
          %v1734 = vlaneseq
          %v1735 = vshrl.u32 %v1734, 7
          %v1736 = vsub.s32 3, %v1735
          %v1737 = vrot.slane %v1552, %v1736
          // Predicated region
          $region81: #{tpu_custom_call.1} parent=79 // pred_check
            %p1742 = pneg %p362
          $region82: #{tpu_custom_call.1} parent=79 // pred_check_branch
            %1744 = sbr.rel (%p1742) target = $region84
          $region83: #{tpu_custom_call.1} parent=79 // pred_region
            %v1745 = vld [vmem:[#allocation3] sm:$0xff]
            %v1746 = vld [vmem:[#allocation3 + $0x8] sm:$0xff]
            %v1747 = vld [vmem:[#allocation3 + $0x10] sm:$0xff]
            %v1748 = vld [vmem:[#allocation3 + $0x18] sm:$0xff]
            %v1749 = vld [vmem:[#allocation3 + $0x20] sm:$0xf]
            %v1750 = vmul.f32 %v1557, 0.5
            %v1751 = vmul.f32 %v1561, 0.5
            %v1752 = vmul.f32 %v1565, 0.5
            %v1753 = vmul.f32 %v1569, 0.5
            %v1754 = vmul.f32 %v1578, 0.5
            %v1755 = vmul.f32 %v1582, 0.5
            %v1756 = vmul.f32 %v1586, 0.5
            %v1757 = vmul.f32 %v1590, 0.5
            %v1758 = vmul.f32 %v1599, 0.5
            %v1759 = vmul.f32 %v1603, 0.5
            %v1760 = vmul.f32 %v1607, 0.5
            %v1761 = vmul.f32 %v1611, 0.5
            %v1762 = vmul.f32 %v1620, 0.5
            %v1763 = vmul.f32 %v1624, 0.5
            %v1764 = vmul.f32 %v1628, 0.5
            %v1765 = vmul.f32 %v1632, 0.5
            %v1766 = vmul.f32 %v1641, 0.5
            %v1767 = vmul.f32 %v1645, 0.5
            %v1768 = vmul.f32 %v1649, 0.5
            %v1769 = vmul.f32 %v1653, 0.5
            %v1770 = vmul.f32 %v1662, 0.5
            %v1771 = vmul.f32 %v1666, 0.5
            %v1772 = vmul.f32 %v1670, 0.5
            %v1773 = vmul.f32 %v1674, 0.5
            %v1774 = vmul.f32 %v1683, 0.5
            %v1775 = vmul.f32 %v1687, 0.5
            %v1776 = vmul.f32 %v1691, 0.5
            %v1777 = vmul.f32 %v1695, 0.5
            %v1778 = vmul.f32 %v1704, 0.5
            %v1779 = vmul.f32 %v1708, 0.5
            %v1780 = vmul.f32 %v1712, 0.5
            %v1781 = vmul.f32 %v1716, 0.5
            %v1782 = vmul.f32 %v1725, 0.5
            %v1783 = vmul.f32 %v1729, 0.5
            %v1784 = vmul.f32 %v1733, 0.5
            %v1785 = vmul.f32 %v1737, 0.5
            %v1822 = vcombine.low %v1750, %v1751
            %v1823 = vcombine.low %v1752, %v1753
            %v1824 = vcombine.low %v1754, %v1755
            %v1825 = vcombine.low %v1756, %v1757
            %v1827 = vunpack.c.l.s4 1966171168
            %v1828 = vunpack.c.0.s8 %v1827
            %v1829 = vlaneseq
            %v1830 = vshrl.u32 %v1829, 7
            %v1831 = vsub.s32 %v1828, %v1830
            %v1832 = vrot.slane %v1822, %v1831
            %v1834 = vunpack.c.l.s4 1966171168
            %v1835 = vunpack.c.0.s8 %v1834
            %v1836 = vlaneseq
            %v1837 = vshrl.u32 %v1836, 7
            %v1838 = vsub.s32 %v1835, %v1837
            %v1839 = vrot.slane %v1823, %v1838
            %v1841 = vunpack.c.l.s4 1966171168
            %v1842 = vunpack.c.0.s8 %v1841
            %v1843 = vlaneseq
            %v1844 = vshrl.u32 %v1843, 7
            %v1845 = vsub.s32 %v1842, %v1844
            %v1846 = vrot.slane %v1824, %v1845
            %v1848 = vunpack.c.l.s4 1966171168
            %v1849 = vunpack.c.0.s8 %v1848
            %v1850 = vlaneseq
            %v1851 = vshrl.u32 %v1850, 7
            %v1852 = vsub.s32 %v1849, %v1851
            %v1853 = vrot.slane %v1825, %v1852
            %v1854 = vcombine.low %v1832, %v1839
            %v1855 = vcombine.low %v1846, %v1853
            %v1857 = vunpack.c.l.s4 1966171168
            %v1858 = vunpack.c.0.s8 %v1857
            %v1859 = vlaneseq
            %v1860 = vshrl.u32 %v1859, 7
            %v1861 = vsub.s32 %v1858, %v1860
            %v1862 = vrot.slane %v1854, %v1861
            %v1864 = vunpack.c.l.s4 1966171168
            %v1865 = vunpack.c.0.s8 %v1864
            %v1866 = vlaneseq
            %v1867 = vshrl.u32 %v1866, 7
            %v1868 = vsub.s32 %v1865, %v1867
            %v1869 = vrot.slane %v1855, %v1868
            %v1870 = vcombine.low %v1862, %v1869
            %v1871 = vcombine.low %v1758, %v1759
            %v1872 = vcombine.low %v1760, %v1761
            %v1873 = vcombine.low %v1762, %v1763
            %v1874 = vcombine.low %v1764, %v1765
            %v1876 = vunpack.c.l.s4 1966171168
            %v1877 = vunpack.c.0.s8 %v1876
            %v1878 = vlaneseq
            %v1879 = vshrl.u32 %v1878, 7
            %v1880 = vsub.s32 %v1877, %v1879
            %v1881 = vrot.slane %v1871, %v1880
            %v1883 = vunpack.c.l.s4 1966171168
            %v1884 = vunpack.c.0.s8 %v1883
            %v1885 = vlaneseq
            %v1886 = vshrl.u32 %v1885, 7
            %v1887 = vsub.s32 %v1884, %v1886
            %v1888 = vrot.slane %v1872, %v1887
            %v1890 = vunpack.c.l.s4 1966171168
            %v1891 = vunpack.c.0.s8 %v1890
            %v1892 = vlaneseq
            %v1893 = vshrl.u32 %v1892, 7
            %v1894 = vsub.s32 %v1891, %v1893
            %v1895 = vrot.slane %v1873, %v1894
            %v1897 = vunpack.c.l.s4 1966171168
            %v1898 = vunpack.c.0.s8 %v1897
            %v1899 = vlaneseq
            %v1900 = vshrl.u32 %v1899, 7
            %v1901 = vsub.s32 %v1898, %v1900
            %v1902 = vrot.slane %v1874, %v1901
            %v1903 = vcombine.low %v1881, %v1888
            %v1904 = vcombine.low %v1895, %v1902
            %v1906 = vunpack.c.l.s4 1966171168
            %v1907 = vunpack.c.0.s8 %v1906
            %v1908 = vlaneseq
            %v1909 = vshrl.u32 %v1908, 7
            %v1910 = vsub.s32 %v1907, %v1909
            %v1911 = vrot.slane %v1903, %v1910
            %v1913 = vunpack.c.l.s4 1966171168
            %v1914 = vunpack.c.0.s8 %v1913
            %v1915 = vlaneseq
            %v1916 = vshrl.u32 %v1915, 7
            %v1917 = vsub.s32 %v1914, %v1916
            %v1918 = vrot.slane %v1904, %v1917
            %v1919 = vcombine.low %v1911, %v1918
            %v1920 = vcombine.low %v1766, %v1767
            %v1921 = vcombine.low %v1768, %v1769
            %v1922 = vcombine.low %v1770, %v1771
            %v1923 = vcombine.low %v1772, %v1773
            %v1925 = vunpack.c.l.s4 1966171168
            %v1926 = vunpack.c.0.s8 %v1925
            %v1927 = vlaneseq
            %v1928 = vshrl.u32 %v1927, 7
            %v1929 = vsub.s32 %v1926, %v1928
            %v1930 = vrot.slane %v1920, %v1929
            %v1932 = vunpack.c.l.s4 1966171168
            %v1933 = vunpack.c.0.s8 %v1932
            %v1934 = vlaneseq
            %v1935 = vshrl.u32 %v1934, 7
            %v1936 = vsub.s32 %v1933, %v1935
            %v1937 = vrot.slane %v1921, %v1936
            %v1939 = vunpack.c.l.s4 1966171168
            %v1940 = vunpack.c.0.s8 %v1939
            %v1941 = vlaneseq
            %v1942 = vshrl.u32 %v1941, 7
            %v1943 = vsub.s32 %v1940, %v1942
            %v1944 = vrot.slane %v1922, %v1943
            %v1946 = vunpack.c.l.s4 1966171168
            %v1947 = vunpack.c.0.s8 %v1946
            %v1948 = vlaneseq
            %v1949 = vshrl.u32 %v1948, 7
            %v1950 = vsub.s32 %v1947, %v1949
            %v1951 = vrot.slane %v1923, %v1950
            %v1952 = vcombine.low %v1930, %v1937
            %v1953 = vcombine.low %v1944, %v1951
            %v1955 = vunpack.c.l.s4 1966171168
            %v1956 = vunpack.c.0.s8 %v1955
            %v1957 = vlaneseq
            %v1958 = vshrl.u32 %v1957, 7
            %v1959 = vsub.s32 %v1956, %v1958
            %v1960 = vrot.slane %v1952, %v1959
            %v1962 = vunpack.c.l.s4 1966171168
            %v1963 = vunpack.c.0.s8 %v1962
            %v1964 = vlaneseq
            %v1965 = vshrl.u32 %v1964, 7
            %v1966 = vsub.s32 %v1963, %v1965
            %v1967 = vrot.slane %v1953, %v1966
            %v1968 = vcombine.low %v1960, %v1967
            %v1969 = vcombine.low %v1774, %v1775
            %v1970 = vcombine.low %v1776, %v1777
            %v1971 = vcombine.low %v1778, %v1779
            %v1972 = vcombine.low %v1780, %v1781
            %v1974 = vunpack.c.l.s4 1966171168
            %v1975 = vunpack.c.0.s8 %v1974
            %v1976 = vlaneseq
            %v1977 = vshrl.u32 %v1976, 7
            %v1978 = vsub.s32 %v1975, %v1977
            %v1979 = vrot.slane %v1969, %v1978
            %v1981 = vunpack.c.l.s4 1966171168
            %v1982 = vunpack.c.0.s8 %v1981
            %v1983 = vlaneseq
            %v1984 = vshrl.u32 %v1983, 7
            %v1985 = vsub.s32 %v1982, %v1984
            %v1986 = vrot.slane %v1970, %v1985
            %v1988 = vunpack.c.l.s4 1966171168
            %v1989 = vunpack.c.0.s8 %v1988
            %v1990 = vlaneseq
            %v1991 = vshrl.u32 %v1990, 7
            %v1992 = vsub.s32 %v1989, %v1991
            %v1993 = vrot.slane %v1971, %v1992
            %v1995 = vunpack.c.l.s4 1966171168
            %v1996 = vunpack.c.0.s8 %v1995
            %v1997 = vlaneseq
            %v1998 = vshrl.u32 %v1997, 7
            %v1999 = vsub.s32 %v1996, %v1998
            %v2000 = vrot.slane %v1972, %v1999
            %v2001 = vcombine.low %v1979, %v1986
            %v2002 = vcombine.low %v1993, %v2000
            %v2004 = vunpack.c.l.s4 1966171168
            %v2005 = vunpack.c.0.s8 %v2004
            %v2006 = vlaneseq
            %v2007 = vshrl.u32 %v2006, 7
            %v2008 = vsub.s32 %v2005, %v2007
            %v2009 = vrot.slane %v2001, %v2008
            %v2011 = vunpack.c.l.s4 1966171168
            %v2012 = vunpack.c.0.s8 %v2011
            %v2013 = vlaneseq
            %v2014 = vshrl.u32 %v2013, 7
            %v2015 = vsub.s32 %v2012, %v2014
            %v2016 = vrot.slane %v2002, %v2015
            %v2017 = vcombine.low %v2009, %v2016
            %v2018 = vcombine.low %v1782, %v1783
            %v2019 = vcombine.low %v1784, %v1785
            %v2021 = vunpack.c.l.s4 1966171168
            %v2022 = vunpack.c.0.s8 %v2021
            %v2023 = vlaneseq
            %v2024 = vshrl.u32 %v2023, 7
            %v2025 = vsub.s32 %v2022, %v2024
            %v2026 = vrot.slane %v2018, %v2025
            %v2028 = vunpack.c.l.s4 1966171168
            %v2029 = vunpack.c.0.s8 %v2028
            %v2030 = vlaneseq
            %v2031 = vshrl.u32 %v2030, 7
            %v2032 = vsub.s32 %v2029, %v2031
            %v2033 = vrot.slane %v2019, %v2032
            %v2034 = vcombine.low %v2026, %v2033
            %v2036 = vunpack.c.l.s4 1966171168
            %v2037 = vunpack.c.0.s8 %v2036
            %v2038 = vlaneseq
            %v2039 = vshrl.u32 %v2038, 7
            %v2040 = vsub.s32 %v2037, %v2039
            %v2041 = vrot.slane %v2034, %v2040
            %v2047 = vadd.f32 %v1745, %v1870
            %v2048 = vadd.f32 %v1746, %v1919
            %v2049 = vadd.f32 %v1747, %v1968
            %v2050 = vadd.f32 %v1748, %v2017
            %v2051 = vadd.f32 %v1749, %v2041
            %2052 = vst [vmem:[#allocation3] sm:$0xff] %v2047
            %2053 = vst [vmem:[#allocation3 + $0x8] sm:$0xff] %v2048
            %2054 = vst [vmem:[#allocation3 + $0x10] sm:$0xff] %v2049
            %2055 = vst [vmem:[#allocation3 + $0x18] sm:$0xff] %v2050
            %v2056 = vlaneseq
            %vm2057 = vcmp.ge.s32.totalorder %v2056, 0
            %vm2058 = vcmp.lt.s32.totalorder %v2056, 512
            %vm2059 = vmand %vm2057, %vm2058
            %2060 = vst.msk [vmem:[#allocation3 + $0x20] sm:$0xf] %vm2059, %v2051
          $region84: #{tpu_custom_call.1} parent=79 // pred_fallthru
            _
          // Predicated region
          $region85: #{tpu_custom_call.1} parent=79 // pred_check
            %p2061 = pneg %p941
          $region86: #{tpu_custom_call.1} parent=79 // pred_check_branch
            %2063 = sbr.rel (%p2061) target = $region88
          $region87: #{tpu_custom_call.1} parent=79 // pred_region
            %v2064 = vld [vmem:[#allocation3] sm:$0xff]
            %v2065 = vld [vmem:[#allocation3 + $0x8] sm:$0xff]
            %v2066 = vld [vmem:[#allocation3 + $0x10] sm:$0xff]
            %v2067 = vld [vmem:[#allocation3 + $0x18] sm:$0xff]
            %v2068 = vld [vmem:[#allocation3 + $0x20] sm:$0xf]
            %v2074 = vlaneseq
            %v2075 = vshrl.u32 %v2074, 7
            %v2076 = vsub.s32 0, %v2075
            %v2077 = vrot.slane %v2064, %v2076
            %v2078 = vlaneseq
            %v2079 = vshrl.u32 %v2078, 7
            %v2080 = vsub.s32 1, %v2079
            %v2081 = vrot.slane %v2064, %v2080
            %v2082 = vlaneseq
            %v2083 = vshrl.u32 %v2082, 7
            %v2084 = vsub.s32 2, %v2083
            %v2085 = vrot.slane %v2064, %v2084
            %v2086 = vlaneseq
            %v2087 = vshrl.u32 %v2086, 7
            %v2088 = vsub.s32 3, %v2087
            %v2089 = vrot.slane %v2064, %v2088
            %v2090 = vlaneseq
            %v2091 = vshrl.u32 %v2090, 7
            %v2092 = vsub.s32 4, %v2091
            %v2093 = vrot.slane %v2064, %v2092
            %v2094 = vlaneseq
            %v2095 = vshrl.u32 %v2094, 7
            %v2096 = vsub.s32 5, %v2095
            %v2097 = vrot.slane %v2064, %v2096
            %v2098 = vlaneseq
            %v2099 = vshrl.u32 %v2098, 7
            %v2100 = vsub.s32 6, %v2099
            %v2101 = vrot.slane %v2064, %v2100
            %v2102 = vlaneseq
            %v2103 = vshrl.u32 %v2102, 7
            %v2104 = vsub.s32 7, %v2103
            %v2105 = vrot.slane %v2064, %v2104
            %v2106 = vlaneseq
            %v2107 = vshrl.u32 %v2106, 7
            %v2108 = vsub.s32 0, %v2107
            %v2109 = vrot.slane %v2065, %v2108
            %v2110 = vlaneseq
            %v2111 = vshrl.u32 %v2110, 7
            %v2112 = vsub.s32 1, %v2111
            %v2113 = vrot.slane %v2065, %v2112
            %v2114 = vlaneseq
            %v2115 = vshrl.u32 %v2114, 7
            %v2116 = vsub.s32 2, %v2115
            %v2117 = vrot.slane %v2065, %v2116
            %v2118 = vlaneseq
            %v2119 = vshrl.u32 %v2118, 7
            %v2120 = vsub.s32 3, %v2119
            %v2121 = vrot.slane %v2065, %v2120
            %v2122 = vlaneseq
            %v2123 = vshrl.u32 %v2122, 7
            %v2124 = vsub.s32 4, %v2123
            %v2125 = vrot.slane %v2065, %v2124
            %v2126 = vlaneseq
            %v2127 = vshrl.u32 %v2126, 7
            %v2128 = vsub.s32 5, %v2127
            %v2129 = vrot.slane %v2065, %v2128
            %v2130 = vlaneseq
            %v2131 = vshrl.u32 %v2130, 7
            %v2132 = vsub.s32 6, %v2131
            %v2133 = vrot.slane %v2065, %v2132
            %v2134 = vlaneseq
            %v2135 = vshrl.u32 %v2134, 7
            %v2136 = vsub.s32 7, %v2135
            %v2137 = vrot.slane %v2065, %v2136
            %v2138 = vlaneseq
            %v2139 = vshrl.u32 %v2138, 7
            %v2140 = vsub.s32 0, %v2139
            %v2141 = vrot.slane %v2066, %v2140
            %v2142 = vlaneseq
            %v2143 = vshrl.u32 %v2142, 7
            %v2144 = vsub.s32 1, %v2143
            %v2145 = vrot.slane %v2066, %v2144
            %v2146 = vlaneseq
            %v2147 = vshrl.u32 %v2146, 7
            %v2148 = vsub.s32 2, %v2147
            %v2149 = vrot.slane %v2066, %v2148
            %v2150 = vlaneseq
            %v2151 = vshrl.u32 %v2150, 7
            %v2152 = vsub.s32 3, %v2151
            %v2153 = vrot.slane %v2066, %v2152
            %v2154 = vlaneseq
            %v2155 = vshrl.u32 %v2154, 7
            %v2156 = vsub.s32 4, %v2155
            %v2157 = vrot.slane %v2066, %v2156
            %v2158 = vlaneseq
            %v2159 = vshrl.u32 %v2158, 7
            %v2160 = vsub.s32 5, %v2159
            %v2161 = vrot.slane %v2066, %v2160
            %v2162 = vlaneseq
            %v2163 = vshrl.u32 %v2162, 7
            %v2164 = vsub.s32 6, %v2163
            %v2165 = vrot.slane %v2066, %v2164
            %v2166 = vlaneseq
            %v2167 = vshrl.u32 %v2166, 7
            %v2168 = vsub.s32 7, %v2167
            %v2169 = vrot.slane %v2066, %v2168
            %v2170 = vlaneseq
            %v2171 = vshrl.u32 %v2170, 7
            %v2172 = vsub.s32 0, %v2171
            %v2173 = vrot.slane %v2067, %v2172
            %v2174 = vlaneseq
            %v2175 = vshrl.u32 %v2174, 7
            %v2176 = vsub.s32 1, %v2175
            %v2177 = vrot.slane %v2067, %v2176
            %v2178 = vlaneseq
            %v2179 = vshrl.u32 %v2178, 7
            %v2180 = vsub.s32 2, %v2179
            %v2181 = vrot.slane %v2067, %v2180
            %v2182 = vlaneseq
            %v2183 = vshrl.u32 %v2182, 7
            %v2184 = vsub.s32 3, %v2183
            %v2185 = vrot.slane %v2067, %v2184
            %v2186 = vlaneseq
            %v2187 = vshrl.u32 %v2186, 7
            %v2188 = vsub.s32 4, %v2187
            %v2189 = vrot.slane %v2067, %v2188
            %v2190 = vlaneseq
            %v2191 = vshrl.u32 %v2190, 7
            %v2192 = vsub.s32 5, %v2191
            %v2193 = vrot.slane %v2067, %v2192
            %v2194 = vlaneseq
            %v2195 = vshrl.u32 %v2194, 7
            %v2196 = vsub.s32 6, %v2195
            %v2197 = vrot.slane %v2067, %v2196
            %v2198 = vlaneseq
            %v2199 = vshrl.u32 %v2198, 7
            %v2200 = vsub.s32 7, %v2199
            %v2201 = vrot.slane %v2067, %v2200
            %v2202 = vlaneseq
            %v2203 = vshrl.u32 %v2202, 7
            %v2204 = vsub.s32 0, %v2203
            %v2205 = vrot.slane %v2068, %v2204
            %v2206 = vlaneseq
            %v2207 = vshrl.u32 %v2206, 7
            %v2208 = vsub.s32 1, %v2207
            %v2209 = vrot.slane %v2068, %v2208
            %v2210 = vlaneseq
            %v2211 = vshrl.u32 %v2210, 7
            %v2212 = vsub.s32 2, %v2211
            %v2213 = vrot.slane %v2068, %v2212
            %v2214 = vlaneseq
            %v2215 = vshrl.u32 %v2214, 7
            %v2216 = vsub.s32 3, %v2215
            %v2217 = vrot.slane %v2068, %v2216
            %v2254 = vrot.slane %v1557, 7
            %v2255 = vrot.slane %v1561, 7
            %v2256 = vrot.slane %v1565, 7
            %v2257 = vrot.slane %v1569, 7
            %v2258 = vrot.slane %v1578, 7
            %v2259 = vrot.slane %v1582, 7
            %v2260 = vrot.slane %v1586, 7
            %v2261 = vrot.slane %v1590, 7
            %v2262 = vrot.slane %v1599, 7
            %v2263 = vrot.slane %v1603, 7
            %v2264 = vrot.slane %v1607, 7
            %v2265 = vrot.slane %v1611, 7
            %v2266 = vrot.slane %v1620, 7
            %v2267 = vrot.slane %v1624, 7
            %v2268 = vrot.slane %v1628, 7
            %v2269 = vrot.slane %v1632, 7
            %v2270 = vrot.slane %v1641, 7
            %v2271 = vrot.slane %v1645, 7
            %v2272 = vrot.slane %v1649, 7
            %v2273 = vrot.slane %v1653, 7
            %v2274 = vrot.slane %v1662, 7
            %v2275 = vrot.slane %v1666, 7
            %v2276 = vrot.slane %v1670, 7
            %v2277 = vrot.slane %v1674, 7
            %v2278 = vrot.slane %v1683, 7
            %v2279 = vrot.slane %v1687, 7
            %v2280 = vrot.slane %v1691, 7
            %v2281 = vrot.slane %v1695, 7
            %v2282 = vrot.slane %v1704, 7
            %v2283 = vrot.slane %v1708, 7
            %v2284 = vrot.slane %v1712, 7
            %v2285 = vrot.slane %v1716, 7
            %v2286 = vrot.slane %v1725, 7
            %v2287 = vrot.slane %v1729, 7
            %v2288 = vrot.slane %v1733, 7
            %v2289 = vrot.slane %v1737, 7
            %vm2326 = vcmask 1040384
            %v2327 = vsel %vm2326, %v2077, %v2254
            %v2328 = vsel %vm2326, %v2081, %v2255
            %v2329 = vsel %vm2326, %v2085, %v2256
            %v2330 = vsel %vm2326, %v2089, %v2257
            %v2331 = vsel %vm2326, %v2093, %v2258
            %v2332 = vsel %vm2326, %v2097, %v2259
            %v2333 = vsel %vm2326, %v2101, %v2260
            %v2334 = vsel %vm2326, %v2105, %v2261
            %v2335 = vsel %vm2326, %v2109, %v2262
            %v2336 = vsel %vm2326, %v2113, %v2263
            %v2337 = vsel %vm2326, %v2117, %v2264
            %v2338 = vsel %vm2326, %v2121, %v2265
            %v2339 = vsel %vm2326, %v2125, %v2266
            %v2340 = vsel %vm2326, %v2129, %v2267
            %v2341 = vsel %vm2326, %v2133, %v2268
            %v2342 = vsel %vm2326, %v2137, %v2269
            %v2343 = vsel %vm2326, %v2141, %v2270
            %v2344 = vsel %vm2326, %v2145, %v2271
            %v2345 = vsel %vm2326, %v2149, %v2272
            %v2346 = vsel %vm2326, %v2153, %v2273
            %v2347 = vsel %vm2326, %v2157, %v2274
            %v2348 = vsel %vm2326, %v2161, %v2275
            %v2349 = vsel %vm2326, %v2165, %v2276
            %v2350 = vsel %vm2326, %v2169, %v2277
            %v2351 = vsel %vm2326, %v2173, %v2278
            %v2352 = vsel %vm2326, %v2177, %v2279
            %v2353 = vsel %vm2326, %v2181, %v2280
            %v2354 = vsel %vm2326, %v2185, %v2281
            %v2355 = vsel %vm2326, %v2189, %v2282
            %v2356 = vsel %vm2326, %v2193, %v2283
            %v2357 = vsel %vm2326, %v2197, %v2284
            %v2358 = vsel %vm2326, %v2201, %v2285
            %v2359 = vsel %vm2326, %v2205, %v2286
            %v2360 = vsel %vm2326, %v2209, %v2287
            %v2361 = vsel %vm2326, %v2213, %v2288
            %v2362 = vsel %vm2326, %v2217, %v2289
            %v2363 = vld [vmem:[%s2] sm:$0xff]
            %v2364 = vld [vmem:[%s2 + $0x8] sm:$0xff]
            %v2365 = vld [vmem:[%s2 + $0x10] sm:$0xff]
            %v2366 = vld [vmem:[%s2 + $0x18] sm:$0xff]
            %v2367 = vld [vmem:[%s2 + $0x20] sm:$0xff]
            %v2368 = vld [vmem:[%s2 + $0x28] sm:$0xff]
            %v2369 = vld [vmem:[%s2 + $0x30] sm:$0xff]
            %v2370 = vld [vmem:[%s2 + $0x38] sm:$0xff]
            %v2371 = vld [vmem:[%s2 + $0x40] sm:$0xff]
            %v2372 = vld [vmem:[%s2 + $0x48] sm:$0xff]
            %v2373 = vld [vmem:[%s2 + $0x50] sm:$0xff]
            %v2374 = vld [vmem:[%s2 + $0x58] sm:$0xff]
            %v2375 = vld [vmem:[%s2 + $0x60] sm:$0xff]
            %v2376 = vld [vmem:[%s2 + $0x68] sm:$0xff]
            %v2377 = vld [vmem:[%s2 + $0x70] sm:$0xff]
            %v2378 = vld [vmem:[%s2 + $0x78] sm:$0xff]
            %v2379 = vld [vmem:[%s2 + $0x80] sm:$0xff]
            %v2380 = vld [vmem:[%s2 + $0x88] sm:$0xff]
            %v2381 = vld [vmem:[%s2 + $0x90] sm:$0xff]
            %v2382 = vld [vmem:[%s2 + $0x98] sm:$0xff]
            %v2383 = vld [vmem:[%s2 + $0xa0] sm:$0xff]
            %v2384 = vld [vmem:[%s2 + $0xa8] sm:$0xff]
            %v2385 = vld [vmem:[%s2 + $0xb0] sm:$0xff]
            %v2386 = vld [vmem:[%s2 + $0xb8] sm:$0xff]
            %v2387 = vld [vmem:[%s2 + $0xc0] sm:$0xff]
            %v2388 = vld [vmem:[%s2 + $0xc8] sm:$0xff]
            %v2389 = vld [vmem:[%s2 + $0xd0] sm:$0xff]
            %v2390 = vld [vmem:[%s2 + $0xd8] sm:$0xff]
            %v2391 = vld [vmem:[%s2 + $0xe0] sm:$0xff]
            %v2392 = vld [vmem:[%s2 + $0xe8] sm:$0xff]
            %v2393 = vld [vmem:[%s2 + $0xf0] sm:$0xff]
            %v2394 = vld [vmem:[%s2 + $0xf8] sm:$0xff]
            %v2395 = vld [vmem:[%s2 + $0x100] sm:$0xff]
            %v2396 = vld [vmem:[%s2 + $0x108] sm:$0xff]
            %v2397 = vld [vmem:[%s2 + $0x110] sm:$0xff]
            %v2398 = vld [vmem:[%s2 + $0x118] sm:$0xff]
            %v2399 = vld [vmem:[%s2 + $0x120] sm:$0xff]
            %v2400 = vld [vmem:[%s2 + $0x128] sm:$0xff]
            %v2401 = vld [vmem:[%s2 + $0x130] sm:$0xff]
            %v2402 = vld [vmem:[%s2 + $0x138] sm:$0xff]
            %v2403 = vld [vmem:[%s2 + $0x140] sm:$0xff]
            %v2404 = vld [vmem:[%s2 + $0x148] sm:$0xff]
            %v2405 = vld [vmem:[%s2 + $0x150] sm:$0xff]
            %v2406 = vld [vmem:[%s2 + $0x158] sm:$0xff]
            %v2407 = vld [vmem:[%s2 + $0x160] sm:$0xff]
            %v2408 = vld [vmem:[%s2 + $0x168] sm:$0xff]
            %v2409 = vld [vmem:[%s2 + $0x170] sm:$0xff]
            %v2410 = vld [vmem:[%s2 + $0x178] sm:$0xff]
            %v2411 = vld [vmem:[%s2 + $0x180] sm:$0xff]
            %v2412 = vld [vmem:[%s2 + $0x188] sm:$0xff]
            %v2413 = vld [vmem:[%s2 + $0x190] sm:$0xff]
            %v2414 = vld [vmem:[%s2 + $0x198] sm:$0xff]
            %v2415 = vld [vmem:[%s2 + $0x1a0] sm:$0xff]
            %v2416 = vld [vmem:[%s2 + $0x1a8] sm:$0xff]
            %v2417 = vld [vmem:[%s2 + $0x1b0] sm:$0xff]
            %v2418 = vld [vmem:[%s2 + $0x1b8] sm:$0xff]
            %v2419 = vld [vmem:[%s2 + $0x1c0] sm:$0xff]
            %v2420 = vld [vmem:[%s2 + $0x1c8] sm:$0xff]
            %v2421 = vld [vmem:[%s2 + $0x1d0] sm:$0xff]
            %v2422 = vld [vmem:[%s2 + $0x1d8] sm:$0xff]
            %v2423 = vld [vmem:[%s2 + $0x1e0] sm:$0xff]
            %v2424 = vld [vmem:[%s2 + $0x1e8] sm:$0xff]
            %v2425 = vld [vmem:[%s2 + $0x1f0] sm:$0xff]
            %v2426 = vld [vmem:[%s2 + $0x1f8] sm:$0xff]
            %v2427 = vld [vmem:[%s2 + $0x200] sm:$0xff]
            %v2428 = vld [vmem:[%s2 + $0x208] sm:$0xff]
            %v2429 = vld [vmem:[%s2 + $0x210] sm:$0xff]
            %v2430 = vld [vmem:[%s2 + $0x218] sm:$0xff]
            %v2431 = vld [vmem:[%s2 + $0x220] sm:$0xff]
            %v2432 = vld [vmem:[%s2 + $0x228] sm:$0xff]
            %v2433 = vld [vmem:[%s2 + $0x230] sm:$0xff]
            %v2434 = vld [vmem:[%s2 + $0x238] sm:$0xff]
            %v2435 = vld [vmem:[%s2 + $0x240] sm:$0xff]
            %v2436 = vld [vmem:[%s2 + $0x248] sm:$0xff]
            %v2437 = vld [vmem:[%s2 + $0x250] sm:$0xff]
            %v2438 = vld [vmem:[%s2 + $0x258] sm:$0xff]
            %v2439 = vld [vmem:[%s2 + $0x260] sm:$0xff]
            %v2440 = vld [vmem:[%s2 + $0x268] sm:$0xff]
            %v2441 = vld [vmem:[%s2 + $0x270] sm:$0xff]
            %v2442 = vld [vmem:[%s2 + $0x278] sm:$0xff]
            %v2443 = vld [vmem:[%s2 + $0x280] sm:$0xff]
            %v2444 = vld [vmem:[%s2 + $0x288] sm:$0xff]
            %v2445 = vld [vmem:[%s2 + $0x290] sm:$0xff]
            %v2446 = vld [vmem:[%s2 + $0x298] sm:$0xff]
            %v2447 = vld [vmem:[%s2 + $0x2a0] sm:$0xff]
            %v2448 = vld [vmem:[%s2 + $0x2a8] sm:$0xff]
            %v2449 = vld [vmem:[%s2 + $0x2b0] sm:$0xff]
            %v2450 = vld [vmem:[%s2 + $0x2b8] sm:$0xff]
            %v2451 = vld [vmem:[%s2 + $0x2c0] sm:$0xff]
            %v2452 = vld [vmem:[%s2 + $0x2c8] sm:$0xff]
            %v2453 = vld [vmem:[%s2 + $0x2d0] sm:$0xff]
            %v2454 = vld [vmem:[%s2 + $0x2d8] sm:$0xff]
            %v2455 = vld [vmem:[%s2 + $0x2e0] sm:$0xff]
            %v2456 = vld [vmem:[%s2 + $0x2e8] sm:$0xff]
            %v2457 = vld [vmem:[%s2 + $0x2f0] sm:$0xff]
            %v2458 = vld [vmem:[%s2 + $0x2f8] sm:$0xff]
            %v2459 = vld [vmem:[%s2 + $0x300] sm:$0xff]
            %v2460 = vld [vmem:[%s2 + $0x308] sm:$0xff]
            %v2461 = vld [vmem:[%s2 + $0x310] sm:$0xff]
            %v2462 = vld [vmem:[%s2 + $0x318] sm:$0xff]
            %v2463 = vld [vmem:[%s2 + $0x320] sm:$0xff]
            %v2464 = vld [vmem:[%s2 + $0x328] sm:$0xff]
            %v2465 = vld [vmem:[%s2 + $0x330] sm:$0xff]
            %v2466 = vld [vmem:[%s2 + $0x338] sm:$0xff]
            %v2467 = vld [vmem:[%s2 + $0x340] sm:$0xff]
            %v2468 = vld [vmem:[%s2 + $0x348] sm:$0xff]
            %v2469 = vld [vmem:[%s2 + $0x350] sm:$0xff]
            %v2470 = vld [vmem:[%s2 + $0x358] sm:$0xff]
            %v2471 = vld [vmem:[%s2 + $0x360] sm:$0xff]
            %v2472 = vld [vmem:[%s2 + $0x368] sm:$0xff]
            %v2473 = vld [vmem:[%s2 + $0x370] sm:$0xff]
            %v2474 = vld [vmem:[%s2 + $0x378] sm:$0xff]
            %v2475 = vld [vmem:[%s2 + $0x380] sm:$0xff]
            %v2476 = vld [vmem:[%s2 + $0x388] sm:$0xff]
            %v2477 = vld [vmem:[%s2 + $0x390] sm:$0xff]
            %v2478 = vld [vmem:[%s2 + $0x398] sm:$0xff]
            %v2479 = vld [vmem:[%s2 + $0x3a0] sm:$0xff]
            %v2480 = vld [vmem:[%s2 + $0x3a8] sm:$0xff]
            %v2481 = vld [vmem:[%s2 + $0x3b0] sm:$0xff]
            %v2482 = vld [vmem:[%s2 + $0x3b8] sm:$0xff]
            %v2483 = vld [vmem:[%s2 + $0x3c0] sm:$0xff]
            %v2484 = vld [vmem:[%s2 + $0x3c8] sm:$0xff]
            %v2485 = vld [vmem:[%s2 + $0x3d0] sm:$0xff]
            %v2486 = vld [vmem:[%s2 + $0x3d8] sm:$0xff]
            %v2487 = vld [vmem:[%s2 + $0x3e0] sm:$0xff]
            %v2488 = vld [vmem:[%s2 + $0x3e8] sm:$0xff]
            %v2489 = vld [vmem:[%s2 + $0x3f0] sm:$0xff]
            %v2490 = vld [vmem:[%s2 + $0x3f8] sm:$0xff]
            %v2491 = vld [vmem:[%s2 + $0x400] sm:$0xff]
            %v2492 = vld [vmem:[%s2 + $0x408] sm:$0xff]
            %v2493 = vld [vmem:[%s2 + $0x410] sm:$0xff]
            %v2494 = vld [vmem:[%s2 + $0x418] sm:$0xff]
            %v2495 = vld [vmem:[%s2 + $0x420] sm:$0xff]
            %v2496 = vld [vmem:[%s2 + $0x428] sm:$0xff]
            %v2497 = vld [vmem:[%s2 + $0x430] sm:$0xff]
            %v2498 = vld [vmem:[%s2 + $0x438] sm:$0xff]
            %v2499 = vld [vmem:[%s2 + $0x440] sm:$0xff]
            %v2500 = vld [vmem:[%s2 + $0x448] sm:$0xff]
            %v2501 = vld [vmem:[%s2 + $0x450] sm:$0xff]
            %v2502 = vld [vmem:[%s2 + $0x458] sm:$0xff]
            %v2503 = vld [vmem:[%s2 + $0x460] sm:$0xff]
            %v2504 = vld [vmem:[%s2 + $0x468] sm:$0xff]
            %v2505 = vld [vmem:[%s2 + $0x470] sm:$0xff]
            %v2506 = vld [vmem:[%s2 + $0x478] sm:$0xff]
            %v2507 = vld [vmem:[%s2 + $0x480] sm:$0xff]
            %v2508 = vld [vmem:[%s2 + $0x488] sm:$0xff]
            %v2509 = vld [vmem:[%s2 + $0x490] sm:$0xff]
            %v2510 = vld [vmem:[%s2 + $0x498] sm:$0xff]
            %v2511 = vld [vmem:[%s2 + $0x4a0] sm:$0xff]
            %v2512 = vld [vmem:[%s2 + $0x4a8] sm:$0xff]
            %v2513 = vld [vmem:[%s2 + $0x4b0] sm:$0xff]
            %v2514 = vld [vmem:[%s2 + $0x4b8] sm:$0xff]
            %v2515 = vld [vmem:[%s2 + $0x4c0] sm:$0xff]
            %v2516 = vld [vmem:[%s2 + $0x4c8] sm:$0xff]
            %v2517 = vld [vmem:[%s2 + $0x4d0] sm:$0xff]
            %v2518 = vld [vmem:[%s2 + $0x4d8] sm:$0xff]
            %v2519 = vld [vmem:[%s2 + $0x4e0] sm:$0xff]
            %v2520 = vld [vmem:[%s2 + $0x4e8] sm:$0xff]
            %v2521 = vld [vmem:[%s2 + $0x4f0] sm:$0xff]
            %v2522 = vld [vmem:[%s2 + $0x4f8] sm:$0xff]
            %v2523 = vld [vmem:[%s2 + $0x500] sm:$0xff]
            %v2524 = vld [vmem:[%s2 + $0x508] sm:$0xff]
            %v2525 = vld [vmem:[%s2 + $0x510] sm:$0xff]
            %v2526 = vld [vmem:[%s2 + $0x518] sm:$0xff]
            %v2527 = vld [vmem:[%s2 + $0x520] sm:$0xff]
            %v2528 = vld [vmem:[%s2 + $0x528] sm:$0xff]
            %v2529 = vld [vmem:[%s2 + $0x530] sm:$0xff]
            %v2530 = vld [vmem:[%s2 + $0x538] sm:$0xff]
            %v2531 = vld [vmem:[%s2 + $0x540] sm:$0xff]
            %v2532 = vld [vmem:[%s2 + $0x548] sm:$0xff]
            %v2533 = vld [vmem:[%s2 + $0x550] sm:$0xff]
            %v2534 = vld [vmem:[%s2 + $0x558] sm:$0xff]
            %v2535 = vld [vmem:[%s2 + $0x560] sm:$0xff]
            %v2536 = vld [vmem:[%s2 + $0x568] sm:$0xff]
            %v2537 = vld [vmem:[%s2 + $0x570] sm:$0xff]
            %v2538 = vld [vmem:[%s2 + $0x578] sm:$0xff]
            %v2539 = vld [vmem:[%s2 + $0x580] sm:$0xff]
            %v2540 = vld [vmem:[%s2 + $0x588] sm:$0xff]
            %v2541 = vld [vmem:[%s2 + $0x590] sm:$0xff]
            %v2542 = vld [vmem:[%s2 + $0x598] sm:$0xff]
            %v2543 = vld [vmem:[%s2 + $0x5a0] sm:$0xff]
            %v2544 = vld [vmem:[%s2 + $0x5a8] sm:$0xff]
            %v2545 = vld [vmem:[%s2 + $0x5b0] sm:$0xff]
            %v2546 = vld [vmem:[%s2 + $0x5b8] sm:$0xff]
            %v2547 = vld [vmem:[%s2 + $0x5c0] sm:$0xff]
            %v2548 = vld [vmem:[%s2 + $0x5c8] sm:$0xff]
            %v2549 = vld [vmem:[%s2 + $0x5d0] sm:$0xff]
            %v2550 = vld [vmem:[%s2 + $0x5d8] sm:$0xff]
            %v2551 = vld [vmem:[%s2 + $0x5e0] sm:$0xff]
            %v2552 = vld [vmem:[%s2 + $0x5e8] sm:$0xff]
            %v2553 = vld [vmem:[%s2 + $0x5f0] sm:$0xff]
            %v2554 = vld [vmem:[%s2 + $0x5f8] sm:$0xff]
            %v2555 = vld [vmem:[%s2 + $0x600] sm:$0xff]
            %v2556 = vld [vmem:[%s2 + $0x608] sm:$0xff]
            %v2557 = vld [vmem:[%s2 + $0x610] sm:$0xff]
            %v2558 = vld [vmem:[%s2 + $0x618] sm:$0xff]
            %v2559 = vld [vmem:[%s2 + $0x620] sm:$0xff]
            %v2560 = vld [vmem:[%s2 + $0x628] sm:$0xff]
            %v2561 = vld [vmem:[%s2 + $0x630] sm:$0xff]
            %v2562 = vld [vmem:[%s2 + $0x638] sm:$0xff]
            %v2563 = vld [vmem:[%s2 + $0x640] sm:$0xff]
            %v2564 = vld [vmem:[%s2 + $0x648] sm:$0xff]
            %v2565 = vld [vmem:[%s2 + $0x650] sm:$0xff]
            %v2566 = vld [vmem:[%s2 + $0x658] sm:$0xff]
            %v2567 = vld [vmem:[%s2 + $0x660] sm:$0xff]
            %v2568 = vld [vmem:[%s2 + $0x668] sm:$0xff]
            %v2569 = vld [vmem:[%s2 + $0x670] sm:$0xff]
            %v2570 = vld [vmem:[%s2 + $0x678] sm:$0xff]
            %v2571 = vld [vmem:[%s2 + $0x680] sm:$0xff]
            %v2572 = vld [vmem:[%s2 + $0x688] sm:$0xff]
            %v2573 = vld [vmem:[%s2 + $0x690] sm:$0xff]
            %v2574 = vld [vmem:[%s2 + $0x698] sm:$0xff]
            %v2575 = vld [vmem:[%s2 + $0x6a0] sm:$0xff]
            %v2576 = vld [vmem:[%s2 + $0x6a8] sm:$0xff]
            %v2577 = vld [vmem:[%s2 + $0x6b0] sm:$0xff]
            %v2578 = vld [vmem:[%s2 + $0x6b8] sm:$0xff]
            %v2579 = vld [vmem:[%s2 + $0x6c0] sm:$0xff]
            %v2580 = vld [vmem:[%s2 + $0x6c8] sm:$0xff]
            %v2581 = vld [vmem:[%s2 + $0x6d0] sm:$0xff]
            %v2582 = vld [vmem:[%s2 + $0x6d8] sm:$0xff]
            %v2583 = vld [vmem:[%s2 + $0x6e0] sm:$0xff]
            %v2584 = vld [vmem:[%s2 + $0x6e8] sm:$0xff]
            %v2585 = vld [vmem:[%s2 + $0x6f0] sm:$0xff]
            %v2586 = vld [vmem:[%s2 + $0x6f8] sm:$0xff]
            %v2587 = vld [vmem:[%s2 + $0x700] sm:$0xff]
            %v2588 = vld [vmem:[%s2 + $0x708] sm:$0xff]
            %v2589 = vld [vmem:[%s2 + $0x710] sm:$0xff]
            %v2590 = vld [vmem:[%s2 + $0x718] sm:$0xff]
            %v2591 = vld [vmem:[%s2 + $0x720] sm:$0xff]
            %v2592 = vld [vmem:[%s2 + $0x728] sm:$0xff]
            %v2593 = vld [vmem:[%s2 + $0x730] sm:$0xff]
            %v2594 = vld [vmem:[%s2 + $0x738] sm:$0xff]
            %v2595 = vld [vmem:[%s2 + $0x740] sm:$0xff]
            %v2596 = vld [vmem:[%s2 + $0x748] sm:$0xff]
            %v2597 = vld [vmem:[%s2 + $0x750] sm:$0xff]
            %v2598 = vld [vmem:[%s2 + $0x758] sm:$0xff]
            %v2599 = vld [vmem:[%s2 + $0x760] sm:$0xff]
            %v2600 = vld [vmem:[%s2 + $0x768] sm:$0xff]
            %v2601 = vld [vmem:[%s2 + $0x770] sm:$0xff]
            %v2602 = vld [vmem:[%s2 + $0x778] sm:$0xff]
            %v2603 = vld [vmem:[%s2 + $0x780] sm:$0xff]
            %v2604 = vld [vmem:[%s2 + $0x788] sm:$0xff]
            %v2605 = vld [vmem:[%s2 + $0x790] sm:$0xff]
            %v2606 = vld [vmem:[%s2 + $0x798] sm:$0xff]
            %v2607 = vld [vmem:[%s2 + $0x7a0] sm:$0xff]
            %v2608 = vld [vmem:[%s2 + $0x7a8] sm:$0xff]
            %v2609 = vld [vmem:[%s2 + $0x7b0] sm:$0xff]
            %v2610 = vld [vmem:[%s2 + $0x7b8] sm:$0xff]
            %v2611 = vld [vmem:[%s2 + $0x7c0] sm:$0xff]
            %v2612 = vld [vmem:[%s2 + $0x7c8] sm:$0xff]
            %v2613 = vld [vmem:[%s2 + $0x7d0] sm:$0xff]
            %v2614 = vld [vmem:[%s2 + $0x7d8] sm:$0xff]
            %v2615 = vld [vmem:[%s2 + $0x7e0] sm:$0xff]
            %v2616 = vld [vmem:[%s2 + $0x7e8] sm:$0xff]
            %v2617 = vld [vmem:[%s2 + $0x7f0] sm:$0xff]
            %v2618 = vld [vmem:[%s2 + $0x7f8] sm:$0xff]
            %v2619 = vld [vmem:[%s2 + $0x800] sm:$0xff]
            %v2620 = vld [vmem:[%s2 + $0x808] sm:$0xff]
            %v2621 = vld [vmem:[%s2 + $0x810] sm:$0xff]
            %v2622 = vld [vmem:[%s2 + $0x818] sm:$0xff]
            %v2623 = vld [vmem:[%s2 + $0x820] sm:$0xff]
            %v2624 = vld [vmem:[%s2 + $0x828] sm:$0xff]
            %v2625 = vld [vmem:[%s2 + $0x830] sm:$0xff]
            %v2626 = vld [vmem:[%s2 + $0x838] sm:$0xff]
            %v2627 = vld [vmem:[%s2 + $0x840] sm:$0xff]
            %v2628 = vld [vmem:[%s2 + $0x848] sm:$0xff]
            %v2629 = vld [vmem:[%s2 + $0x850] sm:$0xff]
            %v2630 = vld [vmem:[%s2 + $0x858] sm:$0xff]
            %v2631 = vld [vmem:[%s2 + $0x860] sm:$0xff]
            %v2632 = vld [vmem:[%s2 + $0x868] sm:$0xff]
            %v2633 = vld [vmem:[%s2 + $0x870] sm:$0xff]
            %v2634 = vld [vmem:[%s2 + $0x878] sm:$0xff]
            %v2635 = vld [vmem:[%s2 + $0x880] sm:$0xff]
            %v2636 = vld [vmem:[%s2 + $0x888] sm:$0xff]
            %v2637 = vld [vmem:[%s2 + $0x890] sm:$0xff]
            %v2638 = vld [vmem:[%s2 + $0x898] sm:$0xff]
            %v2639 = vld [vmem:[%s2 + $0x8a0] sm:$0xff]
            %v2640 = vld [vmem:[%s2 + $0x8a8] sm:$0xff]
            %v2641 = vld [vmem:[%s2 + $0x8b0] sm:$0xff]
            %v2642 = vld [vmem:[%s2 + $0x8b8] sm:$0xff]
            %v2643 = vld [vmem:[%s2 + $0x8c0] sm:$0xff]
            %v2644 = vld [vmem:[%s2 + $0x8c8] sm:$0xff]
            %v2645 = vld [vmem:[%s2 + $0x8d0] sm:$0xff]
            %v2646 = vld [vmem:[%s2 + $0x8d8] sm:$0xff]
            %v2647 = vld [vmem:[%s2 + $0x8e0] sm:$0xff]
            %v2648 = vld [vmem:[%s2 + $0x8e8] sm:$0xff]
            %v2649 = vld [vmem:[%s2 + $0x8f0] sm:$0xff]
            %v2650 = vld [vmem:[%s2 + $0x8f8] sm:$0xff]
            %v2651 = vld [vmem:[%s2 + $0x900] sm:$0xff]
            %v2652 = vld [vmem:[%s2 + $0x908] sm:$0xff]
            %v2653 = vld [vmem:[%s2 + $0x910] sm:$0xff]
            %v2654 = vld [vmem:[%s2 + $0x918] sm:$0xff]
            %v2655 = vld [vmem:[%s2 + $0x920] sm:$0xff]
            %v2656 = vld [vmem:[%s2 + $0x928] sm:$0xff]
            %v2657 = vld [vmem:[%s2 + $0x930] sm:$0xff]
            %v2658 = vld [vmem:[%s2 + $0x938] sm:$0xff]
            %v2659 = vld [vmem:[%s2 + $0x940] sm:$0xff]
            %v2660 = vld [vmem:[%s2 + $0x948] sm:$0xff]
            %v2661 = vld [vmem:[%s2 + $0x950] sm:$0xff]
            %v2662 = vld [vmem:[%s2 + $0x958] sm:$0xff]
            %v2663 = vld [vmem:[%s2 + $0x960] sm:$0xff]
            %v2664 = vld [vmem:[%s2 + $0x968] sm:$0xff]
            %v2665 = vld [vmem:[%s2 + $0x970] sm:$0xff]
            %v2666 = vld [vmem:[%s2 + $0x978] sm:$0xff]
            %v2667 = vld [vmem:[%s2 + $0x980] sm:$0xff]
            %v2668 = vld [vmem:[%s2 + $0x988] sm:$0xff]
            %v2669 = vld [vmem:[%s2 + $0x990] sm:$0xff]
            %v2670 = vld [vmem:[%s2 + $0x998] sm:$0xff]
            %v2671 = vld [vmem:[%s2 + $0x9a0] sm:$0xff]
            %v2672 = vld [vmem:[%s2 + $0x9a8] sm:$0xff]
            %v2673 = vld [vmem:[%s2 + $0x9b0] sm:$0xff]
            %v2674 = vld [vmem:[%s2 + $0x9b8] sm:$0xff]
            %v2675 = vld [vmem:[%s2 + $0x9c0] sm:$0xff]
            %v2676 = vld [vmem:[%s2 + $0x9c8] sm:$0xff]
            %v2677 = vld [vmem:[%s2 + $0x9d0] sm:$0xff]
            %v2678 = vld [vmem:[%s2 + $0x9d8] sm:$0xff]
            %v2679 = vld [vmem:[%s2 + $0x9e0] sm:$0xff]
            %v2680 = vld [vmem:[%s2 + $0x9e8] sm:$0xff]
            %v2681 = vld [vmem:[%s2 + $0x9f0] sm:$0xff]
            %v2682 = vld [vmem:[%s2 + $0x9f8] sm:$0xff]
            %v2683 = vld [vmem:[%s2 + $0xa00] sm:$0xff]
            %v2684 = vld [vmem:[%s2 + $0xa08] sm:$0xff]
            %v2685 = vld [vmem:[%s2 + $0xa10] sm:$0xff]
            %v2686 = vld [vmem:[%s2 + $0xa18] sm:$0xff]
            %v2687 = vld [vmem:[%s2 + $0xa20] sm:$0xff]
            %v2688 = vld [vmem:[%s2 + $0xa28] sm:$0xff]
            %v2689 = vld [vmem:[%s2 + $0xa30] sm:$0xff]
            %v2690 = vld [vmem:[%s2 + $0xa38] sm:$0xff]
            %v2691 = vld [vmem:[%s2 + $0xa40] sm:$0xff]
            %v2692 = vld [vmem:[%s2 + $0xa48] sm:$0xff]
            %v2693 = vld [vmem:[%s2 + $0xa50] sm:$0xff]
            %v2694 = vld [vmem:[%s2 + $0xa58] sm:$0xff]
            %v2695 = vld [vmem:[%s2 + $0xa60] sm:$0xff]
            %v2696 = vld [vmem:[%s2 + $0xa68] sm:$0xff]
            %v2697 = vld [vmem:[%s2 + $0xa70] sm:$0xff]
            %v2698 = vld [vmem:[%s2 + $0xa78] sm:$0xff]
            %v2699 = vld [vmem:[%s2 + $0xa80] sm:$0xff]
            %v2700 = vld [vmem:[%s2 + $0xa88] sm:$0xff]
            %v2701 = vld [vmem:[%s2 + $0xa90] sm:$0xff]
            %v2702 = vld [vmem:[%s2 + $0xa98] sm:$0xff]
            %v2703 = vld [vmem:[%s2 + $0xaa0] sm:$0xff]
            %v2704 = vld [vmem:[%s2 + $0xaa8] sm:$0xff]
            %v2705 = vld [vmem:[%s2 + $0xab0] sm:$0xff]
            %v2706 = vld [vmem:[%s2 + $0xab8] sm:$0xff]
            %v2707 = vld [vmem:[%s2 + $0xac0] sm:$0xff]
            %v2708 = vld [vmem:[%s2 + $0xac8] sm:$0xff]
            %v2709 = vld [vmem:[%s2 + $0xad0] sm:$0xff]
            %v2710 = vld [vmem:[%s2 + $0xad8] sm:$0xff]
            %v2711 = vld [vmem:[%s2 + $0xae0] sm:$0xff]
            %v2712 = vld [vmem:[%s2 + $0xae8] sm:$0xff]
            %v2713 = vld [vmem:[%s2 + $0xaf0] sm:$0xff]
            %v2714 = vld [vmem:[%s2 + $0xaf8] sm:$0xff]
            %v2715 = vld [vmem:[%s2 + $0xb00] sm:$0xff]
            %v2716 = vld [vmem:[%s2 + $0xb08] sm:$0xff]
            %v2717 = vld [vmem:[%s2 + $0xb10] sm:$0xff]
            %v2718 = vld [vmem:[%s2 + $0xb18] sm:$0xff]
            %v2719 = vld [vmem:[%s2 + $0xb20] sm:$0xff]
            %v2720 = vld [vmem:[%s2 + $0xb28] sm:$0xff]
            %v2721 = vld [vmem:[%s2 + $0xb30] sm:$0xff]
            %v2722 = vld [vmem:[%s2 + $0xb38] sm:$0xff]
            %v2723 = vld [vmem:[%s2 + $0xb40] sm:$0xff]
            %v2724 = vld [vmem:[%s2 + $0xb48] sm:$0xff]
            %v2725 = vld [vmem:[%s2 + $0xb50] sm:$0xff]
            %v2726 = vld [vmem:[%s2 + $0xb58] sm:$0xff]
            %v2727 = vld [vmem:[%s2 + $0xb60] sm:$0xff]
            %v2728 = vld [vmem:[%s2 + $0xb68] sm:$0xff]
            %v2729 = vld [vmem:[%s2 + $0xb70] sm:$0xff]
            %v2730 = vld [vmem:[%s2 + $0xb78] sm:$0xff]
            %v2731 = vld [vmem:[%s2 + $0xb80] sm:$0xff]
            %v2732 = vld [vmem:[%s2 + $0xb88] sm:$0xff]
            %v2733 = vld [vmem:[%s2 + $0xb90] sm:$0xff]
            %v2734 = vld [vmem:[%s2 + $0xb98] sm:$0xff]
            %v2735 = vld [vmem:[%s2 + $0xba0] sm:$0xff]
            %v2736 = vld [vmem:[%s2 + $0xba8] sm:$0xff]
            %v2737 = vld [vmem:[%s2 + $0xbb0] sm:$0xff]
            %v2738 = vld [vmem:[%s2 + $0xbb8] sm:$0xff]
            %v2739 = vld [vmem:[%s2 + $0xbc0] sm:$0xff]
            %v2740 = vld [vmem:[%s2 + $0xbc8] sm:$0xff]
            %v2741 = vld [vmem:[%s2 + $0xbd0] sm:$0xff]
            %v2742 = vld [vmem:[%s2 + $0xbd8] sm:$0xff]
            %v2743 = vld [vmem:[%s2 + $0xbe0] sm:$0xff]
            %v2744 = vld [vmem:[%s2 + $0xbe8] sm:$0xff]
            %v2745 = vld [vmem:[%s2 + $0xbf0] sm:$0xff]
            %v2746 = vld [vmem:[%s2 + $0xbf8] sm:$0xff]
            %v2747 = vld [vmem:[%s2 + $0xc00] sm:$0xff]
            %v2748 = vld [vmem:[%s2 + $0xc08] sm:$0xff]
            %v2749 = vld [vmem:[%s2 + $0xc10] sm:$0xff]
            %v2750 = vld [vmem:[%s2 + $0xc18] sm:$0xff]
            %v2751 = vld [vmem:[%s2 + $0xc20] sm:$0xff]
            %v2752 = vld [vmem:[%s2 + $0xc28] sm:$0xff]
            %v2753 = vld [vmem:[%s2 + $0xc30] sm:$0xff]
            %v2754 = vld [vmem:[%s2 + $0xc38] sm:$0xff]
            %v2755 = vld [vmem:[%s2 + $0xc40] sm:$0xff]
            %v2756 = vld [vmem:[%s2 + $0xc48] sm:$0xff]
            %v2757 = vld [vmem:[%s2 + $0xc50] sm:$0xff]
            %v2758 = vld [vmem:[%s2 + $0xc58] sm:$0xff]
            %v2759 = vld [vmem:[%s2 + $0xc60] sm:$0xff]
            %v2760 = vld [vmem:[%s2 + $0xc68] sm:$0xff]
            %v2761 = vld [vmem:[%s2 + $0xc70] sm:$0xff]
            %v2762 = vld [vmem:[%s2 + $0xc78] sm:$0xff]
            %v2763 = vld [vmem:[%s2 + $0xc80] sm:$0xff]
            %v2764 = vld [vmem:[%s2 + $0xc88] sm:$0xff]
            %v2765 = vld [vmem:[%s2 + $0xc90] sm:$0xff]
            %v2766 = vld [vmem:[%s2 + $0xc98] sm:$0xff]
            %v2767 = vld [vmem:[%s2 + $0xca0] sm:$0xff]
            %v2768 = vld [vmem:[%s2 + $0xca8] sm:$0xff]
            %v2769 = vld [vmem:[%s2 + $0xcb0] sm:$0xff]
            %v2770 = vld [vmem:[%s2 + $0xcb8] sm:$0xff]
            %v2771 = vld [vmem:[%s2 + $0xcc0] sm:$0xff]
            %v2772 = vld [vmem:[%s2 + $0xcc8] sm:$0xff]
            %v2773 = vld [vmem:[%s2 + $0xcd0] sm:$0xff]
            %v2774 = vld [vmem:[%s2 + $0xcd8] sm:$0xff]
            %v2775 = vld [vmem:[%s2 + $0xce0] sm:$0xff]
            %v2776 = vld [vmem:[%s2 + $0xce8] sm:$0xff]
            %v2777 = vld [vmem:[%s2 + $0xcf0] sm:$0xff]
            %v2778 = vld [vmem:[%s2 + $0xcf8] sm:$0xff]
            %v2779 = vld [vmem:[%s2 + $0xd00] sm:$0xff]
            %v2780 = vld [vmem:[%s2 + $0xd08] sm:$0xff]
            %v2781 = vld [vmem:[%s2 + $0xd10] sm:$0xff]
            %v2782 = vld [vmem:[%s2 + $0xd18] sm:$0xff]
            %v2783 = vld [vmem:[%s2 + $0xd20] sm:$0xff]
            %v2784 = vld [vmem:[%s2 + $0xd28] sm:$0xff]
            %v2785 = vld [vmem:[%s2 + $0xd30] sm:$0xff]
            %v2786 = vld [vmem:[%s2 + $0xd38] sm:$0xff]
            %v2787 = vld [vmem:[%s2 + $0xd40] sm:$0xff]
            %v2788 = vld [vmem:[%s2 + $0xd48] sm:$0xff]
            %v2789 = vld [vmem:[%s2 + $0xd50] sm:$0xff]
            %v2790 = vld [vmem:[%s2 + $0xd58] sm:$0xff]
            %v2791 = vld [vmem:[%s2 + $0xd60] sm:$0xff]
            %v2792 = vld [vmem:[%s2 + $0xd68] sm:$0xff]
            %v2793 = vld [vmem:[%s2 + $0xd70] sm:$0xff]
            %v2794 = vld [vmem:[%s2 + $0xd78] sm:$0xff]
            %v2795 = vld [vmem:[%s2 + $0xd80] sm:$0xff]
            %v2796 = vld [vmem:[%s2 + $0xd88] sm:$0xff]
            %v2797 = vld [vmem:[%s2 + $0xd90] sm:$0xff]
            %v2798 = vld [vmem:[%s2 + $0xd98] sm:$0xff]
            %v2799 = vld [vmem:[%s2 + $0xda0] sm:$0xff]
            %v2800 = vld [vmem:[%s2 + $0xda8] sm:$0xff]
            %v2801 = vld [vmem:[%s2 + $0xdb0] sm:$0xff]
            %v2802 = vld [vmem:[%s2 + $0xdb8] sm:$0xff]
            %v2803 = vld [vmem:[%s2 + $0xdc0] sm:$0xff]
            %v2804 = vld [vmem:[%s2 + $0xdc8] sm:$0xff]
            %v2805 = vld [vmem:[%s2 + $0xdd0] sm:$0xff]
            %v2806 = vld [vmem:[%s2 + $0xdd8] sm:$0xff]
            %v2807 = vld [vmem:[%s2 + $0xde0] sm:$0xff]
            %v2808 = vld [vmem:[%s2 + $0xde8] sm:$0xff]
            %v2809 = vld [vmem:[%s2 + $0xdf0] sm:$0xff]
            %v2810 = vld [vmem:[%s2 + $0xdf8] sm:$0xff]
            %v2811 = vld [vmem:[%s2 + $0xe00] sm:$0xff]
            %v2812 = vld [vmem:[%s2 + $0xe08] sm:$0xff]
            %v2813 = vld [vmem:[%s2 + $0xe10] sm:$0xff]
            %v2814 = vld [vmem:[%s2 + $0xe18] sm:$0xff]
            %v2815 = vld [vmem:[%s2 + $0xe20] sm:$0xff]
            %v2816 = vld [vmem:[%s2 + $0xe28] sm:$0xff]
            %v2817 = vld [vmem:[%s2 + $0xe30] sm:$0xff]
            %v2818 = vld [vmem:[%s2 + $0xe38] sm:$0xff]
            %v2819 = vld [vmem:[%s2 + $0xe40] sm:$0xff]
            %v2820 = vld [vmem:[%s2 + $0xe48] sm:$0xff]
            %v2821 = vld [vmem:[%s2 + $0xe50] sm:$0xff]
            %v2822 = vld [vmem:[%s2 + $0xe58] sm:$0xff]
            %v2823 = vld [vmem:[%s2 + $0xe60] sm:$0xff]
            %v2824 = vld [vmem:[%s2 + $0xe68] sm:$0xff]
            %v2825 = vld [vmem:[%s2 + $0xe70] sm:$0xff]
            %v2826 = vld [vmem:[%s2 + $0xe78] sm:$0xff]
            %v2827 = vld [vmem:[%s2 + $0xe80] sm:$0xff]
            %v2828 = vld [vmem:[%s2 + $0xe88] sm:$0xff]
            %v2829 = vld [vmem:[%s2 + $0xe90] sm:$0xff]
            %v2830 = vld [vmem:[%s2 + $0xe98] sm:$0xff]
            %v2831 = vld [vmem:[%s2 + $0xea0] sm:$0xff]
            %v2832 = vld [vmem:[%s2 + $0xea8] sm:$0xff]
            %v2833 = vld [vmem:[%s2 + $0xeb0] sm:$0xff]
            %v2834 = vld [vmem:[%s2 + $0xeb8] sm:$0xff]
            %v2835 = vld [vmem:[%s2 + $0xec0] sm:$0xff]
            %v2836 = vld [vmem:[%s2 + $0xec8] sm:$0xff]
            %v2837 = vld [vmem:[%s2 + $0xed0] sm:$0xff]
            %v2838 = vld [vmem:[%s2 + $0xed8] sm:$0xff]
            %v2839 = vld [vmem:[%s2 + $0xee0] sm:$0xff]
            %v2840 = vld [vmem:[%s2 + $0xee8] sm:$0xff]
            %v2841 = vld [vmem:[%s2 + $0xef0] sm:$0xff]
            %v2842 = vld [vmem:[%s2 + $0xef8] sm:$0xff]
            %v2843 = vld [vmem:[%s2 + $0xf00] sm:$0xff]
            %v2844 = vld [vmem:[%s2 + $0xf08] sm:$0xff]
            %v2845 = vld [vmem:[%s2 + $0xf10] sm:$0xff]
            %v2846 = vld [vmem:[%s2 + $0xf18] sm:$0xff]
            %v2847 = vld [vmem:[%s2 + $0xf20] sm:$0xff]
            %v2848 = vld [vmem:[%s2 + $0xf28] sm:$0xff]
            %v2849 = vld [vmem:[%s2 + $0xf30] sm:$0xff]
            %v2850 = vld [vmem:[%s2 + $0xf38] sm:$0xff]
            %v2851 = vld [vmem:[%s2 + $0xf40] sm:$0xff]
            %v2852 = vld [vmem:[%s2 + $0xf48] sm:$0xff]
            %v2853 = vld [vmem:[%s2 + $0xf50] sm:$0xff]
            %v2854 = vld [vmem:[%s2 + $0xf58] sm:$0xff]
            %v2855 = vld [vmem:[%s2 + $0xf60] sm:$0xff]
            %v2856 = vld [vmem:[%s2 + $0xf68] sm:$0xff]
            %v2857 = vld [vmem:[%s2 + $0xf70] sm:$0xff]
            %v2858 = vld [vmem:[%s2 + $0xf78] sm:$0xff]
            %v2859 = vld [vmem:[%s2 + $0xf80] sm:$0xff]
            %v2860 = vld [vmem:[%s2 + $0xf88] sm:$0xff]
            %v2861 = vld [vmem:[%s2 + $0xf90] sm:$0xff]
            %v2862 = vld [vmem:[%s2 + $0xf98] sm:$0xff]
            %v2863 = vld [vmem:[%s2 + $0xfa0] sm:$0xff]
            %v2864 = vld [vmem:[%s2 + $0xfa8] sm:$0xff]
            %v2865 = vld [vmem:[%s2 + $0xfb0] sm:$0xff]
            %v2866 = vld [vmem:[%s2 + $0xfb8] sm:$0xff]
            %v2867 = vld [vmem:[%s2 + $0xfc0] sm:$0xff]
            %v2868 = vld [vmem:[%s2 + $0xfc8] sm:$0xff]
            %v2869 = vld [vmem:[%s2 + $0xfd0] sm:$0xff]
            %v2870 = vld [vmem:[%s2 + $0xfd8] sm:$0xff]
            %v2871 = vld [vmem:[%s2 + $0xfe0] sm:$0xff]
            %v2872 = vld [vmem:[%s2 + $0xfe8] sm:$0xff]
            %v2873 = vld [vmem:[%s2 + $0xff0] sm:$0xff]
            %v2874 = vld [vmem:[%s2 + $0xff8] sm:$0xff]
            %v2875 = vld [vmem:[%s2 + $0x1000] sm:$0xff]
            %v2876 = vld [vmem:[%s2 + $0x1008] sm:$0xff]
            %v2877 = vld [vmem:[%s2 + $0x1010] sm:$0xff]
            %v2878 = vld [vmem:[%s2 + $0x1018] sm:$0xff]
            %v2879 = vld [vmem:[%s2 + $0x1020] sm:$0xff]
            %v2880 = vld [vmem:[%s2 + $0x1028] sm:$0xff]
            %v2881 = vld [vmem:[%s2 + $0x1030] sm:$0xff]
            %v2882 = vld [vmem:[%s2 + $0x1038] sm:$0xff]
            %v2883 = vld [vmem:[%s2 + $0x1040] sm:$0xff]
            %v2884 = vld [vmem:[%s2 + $0x1048] sm:$0xff]
            %v2885 = vld [vmem:[%s2 + $0x1050] sm:$0xff]
            %v2886 = vld [vmem:[%s2 + $0x1058] sm:$0xff]
            %v2887 = vld [vmem:[%s2 + $0x1060] sm:$0xff]
            %v2888 = vld [vmem:[%s2 + $0x1068] sm:$0xff]
            %v2889 = vld [vmem:[%s2 + $0x1070] sm:$0xff]
            %v2890 = vld [vmem:[%s2 + $0x1078] sm:$0xff]
            %v2891 = vld [vmem:[%s2 + $0x1080] sm:$0xff]
            %v2892 = vld [vmem:[%s2 + $0x1088] sm:$0xff]
            %v2893 = vld [vmem:[%s2 + $0x1090] sm:$0xff]
            %v2894 = vld [vmem:[%s2 + $0x1098] sm:$0xff]
            %v2895 = vld [vmem:[%s2 + $0x10a0] sm:$0xff]
            %v2896 = vld [vmem:[%s2 + $0x10a8] sm:$0xff]
            %v2897 = vld [vmem:[%s2 + $0x10b0] sm:$0xff]
            %v2898 = vld [vmem:[%s2 + $0x10b8] sm:$0xff]
            %v2899 = vld [vmem:[%s2 + $0x10c0] sm:$0xff]
            %v2900 = vld [vmem:[%s2 + $0x10c8] sm:$0xff]
            %v2901 = vld [vmem:[%s2 + $0x10d0] sm:$0xff]
            %v2902 = vld [vmem:[%s2 + $0x10d8] sm:$0xff]
            %v2903 = vld [vmem:[%s2 + $0x10e0] sm:$0xff]
            %v2904 = vld [vmem:[%s2 + $0x10e8] sm:$0xff]
            %v2905 = vld [vmem:[%s2 + $0x10f0] sm:$0xff]
            %v2906 = vld [vmem:[%s2 + $0x10f8] sm:$0xff]
            %v2907 = vld [vmem:[%s2 + $0x1100] sm:$0xff]
            %v2908 = vld [vmem:[%s2 + $0x1108] sm:$0xff]
            %v2909 = vld [vmem:[%s2 + $0x1110] sm:$0xff]
            %v2910 = vld [vmem:[%s2 + $0x1118] sm:$0xff]
            %v2911 = vld [vmem:[%s2 + $0x1120] sm:$0xff]
            %v2912 = vld [vmem:[%s2 + $0x1128] sm:$0xff]
            %v2913 = vld [vmem:[%s2 + $0x1130] sm:$0xff]
            %v2914 = vld [vmem:[%s2 + $0x1138] sm:$0xff]
            %v2915 = vld [vmem:[%s2 + $0x1140] sm:$0xff]
            %v2916 = vld [vmem:[%s2 + $0x1148] sm:$0xff]
            %v2917 = vld [vmem:[%s2 + $0x1150] sm:$0xff]
            %v2918 = vld [vmem:[%s2 + $0x1158] sm:$0xff]
            %v2919 = vld [vmem:[%s2 + $0x1160] sm:$0xff]
            %v2920 = vld [vmem:[%s2 + $0x1168] sm:$0xff]
            %v2921 = vld [vmem:[%s2 + $0x1170] sm:$0xff]
            %v2922 = vld [vmem:[%s2 + $0x1178] sm:$0xff]
            %v2923 = vld [vmem:[%s2 + $0x1180] sm:$0xff]
            %v2924 = vld [vmem:[%s2 + $0x1188] sm:$0xff]
            %v2925 = vld [vmem:[%s2 + $0x1190] sm:$0xff]
            %v2926 = vld [vmem:[%s2 + $0x1198] sm:$0xff]
            %v2927 = vld [vmem:[%s2 + $0x11a0] sm:$0xff]
            %v2928 = vld [vmem:[%s2 + $0x11a8] sm:$0xff]
            %v2929 = vld [vmem:[%s2 + $0x11b0] sm:$0xff]
            %v2930 = vld [vmem:[%s2 + $0x11b8] sm:$0xff]
            %v2931 = vld [vmem:[%s2 + $0x11c0] sm:$0xff]
            %v2932 = vld [vmem:[%s2 + $0x11c8] sm:$0xff]
            %v2933 = vld [vmem:[%s2 + $0x11d0] sm:$0xff]
            %v2934 = vld [vmem:[%s2 + $0x11d8] sm:$0xff]
            %v2935 = vld [vmem:[%s2 + $0x11e0] sm:$0xff]
            %v2936 = vld [vmem:[%s2 + $0x11e8] sm:$0xff]
            %v2937 = vld [vmem:[%s2 + $0x11f0] sm:$0xff]
            %v2938 = vld [vmem:[%s2 + $0x11f8] sm:$0xff]
            %v2939 = vld [vmem:[%s3] sm:$0x1]
            %v2941 = vlaneseq
            %v2942 = vshrl.u32 %v2941, 7
            %v2943 = vsub.s32 0, %v2942
            %v2944 = vrot.slane %v2939, %v2943
            %2946 = vmatprep.subr.mxu0 0.0
            %2947 = vmatpush1.msra.mxu0 %v2378
            %2948 = vmatprep.subr.mxu0 0.0
            %2949 = vmatpush1.msra.mxu0 %v2377
            %2950 = vmatprep.subr.mxu0 0.0
            %2951 = vmatpush1.msra.mxu0 %v2376
            %2952 = vmatprep.subr.mxu0 0.0
            %2953 = vmatpush1.msra.mxu0 %v2375
            %2954 = vmatprep.subr.mxu0 0.0
            %2955 = vmatpush1.msra.mxu0 %v2374
            %2956 = vmatprep.subr.mxu0 0.0
            %2957 = vmatpush1.msra.mxu0 %v2373
            %2958 = vmatprep.subr.mxu0 0.0
            %2959 = vmatpush1.msra.mxu0 %v2372
            %2960 = vmatprep.subr.mxu0 0.0
            %2961 = vmatpush1.msra.mxu0 %v2371
            %2962 = vmatprep.subr.mxu0 0.0
            %2963 = vmatpush1.msra.mxu0 %v2370
            %2964 = vmatprep.subr.mxu0 0.0
            %2965 = vmatpush1.msra.mxu0 %v2369
            %2966 = vmatprep.subr.mxu0 0.0
            %2967 = vmatpush1.msra.mxu0 %v2368
            %2968 = vmatprep.subr.mxu0 0.0
            %2969 = vmatpush1.msra.mxu0 %v2367
            %2970 = vmatprep.subr.mxu0 0.0
            %2971 = vmatpush1.msra.mxu0 %v2366
            %2972 = vmatprep.subr.mxu0 0.0
            %2973 = vmatpush1.msra.mxu0 %v2365
            %2974 = vmatprep.subr.mxu0 0.0
            %2975 = vmatpush1.msra.mxu0 %v2364
            %2976 = vmatprep.subr.mxu0 0.0
            %2977 = vmatpush1.msra.mxu0 %v2363
            %2978 = vmatprep.subr.mxu0 0.0
            %2979 = vmatpush2.msra.mxu0 %v2394
            %2980 = vmatprep.subr.mxu0 0.0
            %2981 = vmatpush2.msra.mxu0 %v2393
            %2982 = vmatprep.subr.mxu0 0.0
            %2983 = vmatpush2.msra.mxu0 %v2392
            %2984 = vmatprep.subr.mxu0 0.0
            %2985 = vmatpush2.msra.mxu0 %v2391
            %2986 = vmatprep.subr.mxu0 0.0
            %2987 = vmatpush2.msra.mxu0 %v2390
            %2988 = vmatprep.subr.mxu0 0.0
            %2989 = vmatpush2.msra.mxu0 %v2389
            %2990 = vmatprep.subr.mxu0 0.0
            %2991 = vmatpush2.msra.mxu0 %v2388
            %2992 = vmatprep.subr.mxu0 0.0
            %2993 = vmatpush2.msra.mxu0 %v2387
            %2994 = vmatprep.subr.mxu0 0.0
            %2995 = vmatpush2.msra.mxu0 %v2386
            %2996 = vmatprep.subr.mxu0 0.0
            %2997 = vmatpush2.msra.mxu0 %v2385
            %2998 = vmatprep.subr.mxu0 0.0
            %2999 = vmatpush2.msra.mxu0 %v2384
            %3000 = vmatprep.subr.mxu0 0.0
            %3001 = vmatpush2.msra.mxu0 %v2383
            %3002 = vmatprep.subr.mxu0 0.0
            %3003 = vmatpush2.msra.mxu0 %v2382
            %3004 = vmatprep.subr.mxu0 0.0
            %3005 = vmatpush2.msra.mxu0 %v2381
            %3006 = vmatprep.subr.mxu0 0.0
            %3007 = vmatpush2.msra.mxu0 %v2380
            %3008 = vmatprep.subr.mxu0 0.0
            %3009 = vmatpush2.msra.mxu0 %v2379
            %3010 = vmatprep.mubr.f32.mxu0 %v2328
            %3011 = vmatmul.mubr.f32.gmra.mxu0 %v2327
            %v3012 = vpop.f32.mrf.mxu0
            %v3013 = vadd.f32 %v2944, %v3012
            %v3014 = vpop.f32.mrf.mxu0
            %3015 = vdwg.mxu0
            %3016 = vmatprep.subr.mxu0 0.0
            %3017 = vmatpush1.msra.mxu0 %v2410
            %3018 = vmatprep.subr.mxu0 0.0
            %3019 = vmatpush1.msra.mxu0 %v2409
            %3020 = vmatprep.subr.mxu0 0.0
            %3021 = vmatpush1.msra.mxu0 %v2408
            %3022 = vmatprep.subr.mxu0 0.0
            %3023 = vmatpush1.msra.mxu0 %v2407
            %3024 = vmatprep.subr.mxu0 0.0
            %3025 = vmatpush1.msra.mxu0 %v2406
            %3026 = vmatprep.subr.mxu0 0.0
            %3027 = vmatpush1.msra.mxu0 %v2405
            %3028 = vmatprep.subr.mxu0 0.0
            %3029 = vmatpush1.msra.mxu0 %v2404
            %3030 = vmatprep.subr.mxu0 0.0
            %3031 = vmatpush1.msra.mxu0 %v2403
            %3032 = vmatprep.subr.mxu0 0.0
            %3033 = vmatpush1.msra.mxu0 %v2402
            %3034 = vmatprep.subr.mxu0 0.0
            %3035 = vmatpush1.msra.mxu0 %v2401
            %3036 = vmatprep.subr.mxu0 0.0
            %3037 = vmatpush1.msra.mxu0 %v2400
            %3038 = vmatprep.subr.mxu0 0.0
            %3039 = vmatpush1.msra.mxu0 %v2399
            %3040 = vmatprep.subr.mxu0 0.0
            %3041 = vmatpush1.msra.mxu0 %v2398
            %3042 = vmatprep.subr.mxu0 0.0
            %3043 = vmatpush1.msra.mxu0 %v2397
            %3044 = vmatprep.subr.mxu0 0.0
            %3045 = vmatpush1.msra.mxu0 %v2396
            %3046 = vmatprep.subr.mxu0 0.0
            %3047 = vmatpush1.msra.mxu0 %v2395
            %3048 = vmatprep.subr.mxu0 0.0
            %3049 = vmatpush2.msra.mxu0 %v2426
            %3050 = vmatprep.subr.mxu0 0.0
            %3051 = vmatpush2.msra.mxu0 %v2425
            %3052 = vmatprep.subr.mxu0 0.0
            %3053 = vmatpush2.msra.mxu0 %v2424
            %3054 = vmatprep.subr.mxu0 0.0
            %3055 = vmatpush2.msra.mxu0 %v2423
            %3056 = vmatprep.subr.mxu0 0.0
            %3057 = vmatpush2.msra.mxu0 %v2422
            %3058 = vmatprep.subr.mxu0 0.0
            %3059 = vmatpush2.msra.mxu0 %v2421
            %3060 = vmatprep.subr.mxu0 0.0
            %3061 = vmatpush2.msra.mxu0 %v2420
            %3062 = vmatprep.subr.mxu0 0.0
            %3063 = vmatpush2.msra.mxu0 %v2419
            %3064 = vmatprep.subr.mxu0 0.0
            %3065 = vmatpush2.msra.mxu0 %v2418
            %3066 = vmatprep.subr.mxu0 0.0
            %3067 = vmatpush2.msra.mxu0 %v2417
            %3068 = vmatprep.subr.mxu0 0.0
            %3069 = vmatpush2.msra.mxu0 %v2416
            %3070 = vmatprep.subr.mxu0 0.0
            %3071 = vmatpush2.msra.mxu0 %v2415
            %3072 = vmatprep.subr.mxu0 0.0
            %3073 = vmatpush2.msra.mxu0 %v2414
            %3074 = vmatprep.subr.mxu0 0.0
            %3075 = vmatpush2.msra.mxu0 %v2413
            %3076 = vmatprep.subr.mxu0 0.0
            %3077 = vmatpush2.msra.mxu0 %v2412
            %3078 = vmatprep.subr.mxu0 0.0
            %3079 = vmatpush2.msra.mxu0 %v2411
            %3080 = vmatprep.mubr.f32.mxu0 %v2330
            %3081 = vmatmul.mubr.f32.gmra.mxu0 %v2329
            %v3082 = vpop.f32.mrf.mxu0
            %v3083 = vadd.f32 %v3013, %v3082
            %v3084 = vpop.f32.mrf.mxu0
            %3085 = vdwg.mxu0
            %3086 = vmatprep.subr.mxu0 0.0
            %3087 = vmatpush1.msra.mxu0 %v2442
            %3088 = vmatprep.subr.mxu0 0.0
            %3089 = vmatpush1.msra.mxu0 %v2441
            %3090 = vmatprep.subr.mxu0 0.0
            %3091 = vmatpush1.msra.mxu0 %v2440
            %3092 = vmatprep.subr.mxu0 0.0
            %3093 = vmatpush1.msra.mxu0 %v2439
            %3094 = vmatprep.subr.mxu0 0.0
            %3095 = vmatpush1.msra.mxu0 %v2438
            %3096 = vmatprep.subr.mxu0 0.0
            %3097 = vmatpush1.msra.mxu0 %v2437
            %3098 = vmatprep.subr.mxu0 0.0
            %3099 = vmatpush1.msra.mxu0 %v2436
            %3100 = vmatprep.subr.mxu0 0.0
            %3101 = vmatpush1.msra.mxu0 %v2435
            %3102 = vmatprep.subr.mxu0 0.0
            %3103 = vmatpush1.msra.mxu0 %v2434
            %3104 = vmatprep.subr.mxu0 0.0
            %3105 = vmatpush1.msra.mxu0 %v2433
            %3106 = vmatprep.subr.mxu0 0.0
            %3107 = vmatpush1.msra.mxu0 %v2432
            %3108 = vmatprep.subr.mxu0 0.0
            %3109 = vmatpush1.msra.mxu0 %v2431
            %3110 = vmatprep.subr.mxu0 0.0
            %3111 = vmatpush1.msra.mxu0 %v2430
            %3112 = vmatprep.subr.mxu0 0.0
            %3113 = vmatpush1.msra.mxu0 %v2429
            %3114 = vmatprep.subr.mxu0 0.0
            %3115 = vmatpush1.msra.mxu0 %v2428
            %3116 = vmatprep.subr.mxu0 0.0
            %3117 = vmatpush1.msra.mxu0 %v2427
            %3118 = vmatprep.subr.mxu0 0.0
            %3119 = vmatpush2.msra.mxu0 %v2458
            %3120 = vmatprep.subr.mxu0 0.0
            %3121 = vmatpush2.msra.mxu0 %v2457
            %3122 = vmatprep.subr.mxu0 0.0
            %3123 = vmatpush2.msra.mxu0 %v2456
            %3124 = vmatprep.subr.mxu0 0.0
            %3125 = vmatpush2.msra.mxu0 %v2455
            %3126 = vmatprep.subr.mxu0 0.0
            %3127 = vmatpush2.msra.mxu0 %v2454
            %3128 = vmatprep.subr.mxu0 0.0
            %3129 = vmatpush2.msra.mxu0 %v2453
            %3130 = vmatprep.subr.mxu0 0.0
            %3131 = vmatpush2.msra.mxu0 %v2452
            %3132 = vmatprep.subr.mxu0 0.0
            %3133 = vmatpush2.msra.mxu0 %v2451
            %3134 = vmatprep.subr.mxu0 0.0
            %3135 = vmatpush2.msra.mxu0 %v2450
            %3136 = vmatprep.subr.mxu0 0.0
            %3137 = vmatpush2.msra.mxu0 %v2449
            %3138 = vmatprep.subr.mxu0 0.0
            %3139 = vmatpush2.msra.mxu0 %v2448
            %3140 = vmatprep.subr.mxu0 0.0
            %3141 = vmatpush2.msra.mxu0 %v2447
            %3142 = vmatprep.subr.mxu0 0.0
            %3143 = vmatpush2.msra.mxu0 %v2446
            %3144 = vmatprep.subr.mxu0 0.0
            %3145 = vmatpush2.msra.mxu0 %v2445
            %3146 = vmatprep.subr.mxu0 0.0
            %3147 = vmatpush2.msra.mxu0 %v2444
            %3148 = vmatprep.subr.mxu0 0.0
            %3149 = vmatpush2.msra.mxu0 %v2443
            %3150 = vmatprep.mubr.f32.mxu0 %v2332
            %3151 = vmatmul.mubr.f32.gmra.mxu0 %v2331
            %v3152 = vpop.f32.mrf.mxu0
            %v3153 = vadd.f32 %v3083, %v3152
            %v3154 = vpop.f32.mrf.mxu0
            %3155 = vdwg.mxu0
            %3156 = vmatprep.subr.mxu0 0.0
            %3157 = vmatpush1.msra.mxu0 %v2474
            %3158 = vmatprep.subr.mxu0 0.0
            %3159 = vmatpush1.msra.mxu0 %v2473
            %3160 = vmatprep.subr.mxu0 0.0
            %3161 = vmatpush1.msra.mxu0 %v2472
            %3162 = vmatprep.subr.mxu0 0.0
            %3163 = vmatpush1.msra.mxu0 %v2471
            %3164 = vmatprep.subr.mxu0 0.0
            %3165 = vmatpush1.msra.mxu0 %v2470
            %3166 = vmatprep.subr.mxu0 0.0
            %3167 = vmatpush1.msra.mxu0 %v2469
            %3168 = vmatprep.subr.mxu0 0.0
            %3169 = vmatpush1.msra.mxu0 %v2468
            %3170 = vmatprep.subr.mxu0 0.0
            %3171 = vmatpush1.msra.mxu0 %v2467
            %3172 = vmatprep.subr.mxu0 0.0
            %3173 = vmatpush1.msra.mxu0 %v2466
            %3174 = vmatprep.subr.mxu0 0.0
            %3175 = vmatpush1.msra.mxu0 %v2465
            %3176 = vmatprep.subr.mxu0 0.0
            %3177 = vmatpush1.msra.mxu0 %v2464
            %3178 = vmatprep.subr.mxu0 0.0
            %3179 = vmatpush1.msra.mxu0 %v2463
            %3180 = vmatprep.subr.mxu0 0.0
            %3181 = vmatpush1.msra.mxu0 %v2462
            %3182 = vmatprep.subr.mxu0 0.0
            %3183 = vmatpush1.msra.mxu0 %v2461
            %3184 = vmatprep.subr.mxu0 0.0
            %3185 = vmatpush1.msra.mxu0 %v2460
            %3186 = vmatprep.subr.mxu0 0.0
            %3187 = vmatpush1.msra.mxu0 %v2459
            %3188 = vmatprep.subr.mxu0 0.0
            %3189 = vmatpush2.msra.mxu0 %v2490
            %3190 = vmatprep.subr.mxu0 0.0
            %3191 = vmatpush2.msra.mxu0 %v2489
            %3192 = vmatprep.subr.mxu0 0.0
            %3193 = vmatpush2.msra.mxu0 %v2488
            %3194 = vmatprep.subr.mxu0 0.0
            %3195 = vmatpush2.msra.mxu0 %v2487
            %3196 = vmatprep.subr.mxu0 0.0
            %3197 = vmatpush2.msra.mxu0 %v2486
            %3198 = vmatprep.subr.mxu0 0.0
            %3199 = vmatpush2.msra.mxu0 %v2485
            %3200 = vmatprep.subr.mxu0 0.0
            %3201 = vmatpush2.msra.mxu0 %v2484
            %3202 = vmatprep.subr.mxu0 0.0
            %3203 = vmatpush2.msra.mxu0 %v2483
            %3204 = vmatprep.subr.mxu0 0.0
            %3205 = vmatpush2.msra.mxu0 %v2482
            %3206 = vmatprep.subr.mxu0 0.0
            %3207 = vmatpush2.msra.mxu0 %v2481
            %3208 = vmatprep.subr.mxu0 0.0
            %3209 = vmatpush2.msra.mxu0 %v2480
            %3210 = vmatprep.subr.mxu0 0.0
            %3211 = vmatpush2.msra.mxu0 %v2479
            %3212 = vmatprep.subr.mxu0 0.0
            %3213 = vmatpush2.msra.mxu0 %v2478
            %3214 = vmatprep.subr.mxu0 0.0
            %3215 = vmatpush2.msra.mxu0 %v2477
            %3216 = vmatprep.subr.mxu0 0.0
            %3217 = vmatpush2.msra.mxu0 %v2476
            %3218 = vmatprep.subr.mxu0 0.0
            %3219 = vmatpush2.msra.mxu0 %v2475
            %3220 = vmatprep.mubr.f32.mxu0 %v2334
            %3221 = vmatmul.mubr.f32.gmra.mxu0 %v2333
            %v3222 = vpop.f32.mrf.mxu0
            %v3223 = vadd.f32 %v3153, %v3222
            %v3224 = vpop.f32.mrf.mxu0
            %3225 = vdwg.mxu0
            %3226 = vmatprep.subr.mxu0 0.0
            %3227 = vmatpush1.msra.mxu0 %v2506
            %3228 = vmatprep.subr.mxu0 0.0
            %3229 = vmatpush1.msra.mxu0 %v2505
            %3230 = vmatprep.subr.mxu0 0.0
            %3231 = vmatpush1.msra.mxu0 %v2504
            %3232 = vmatprep.subr.mxu0 0.0
            %3233 = vmatpush1.msra.mxu0 %v2503
            %3234 = vmatprep.subr.mxu0 0.0
            %3235 = vmatpush1.msra.mxu0 %v2502
            %3236 = vmatprep.subr.mxu0 0.0
            %3237 = vmatpush1.msra.mxu0 %v2501
            %3238 = vmatprep.subr.mxu0 0.0
            %3239 = vmatpush1.msra.mxu0 %v2500
            %3240 = vmatprep.subr.mxu0 0.0
            %3241 = vmatpush1.msra.mxu0 %v2499
            %3242 = vmatprep.subr.mxu0 0.0
            %3243 = vmatpush1.msra.mxu0 %v2498
            %3244 = vmatprep.subr.mxu0 0.0
            %3245 = vmatpush1.msra.mxu0 %v2497
            %3246 = vmatprep.subr.mxu0 0.0
            %3247 = vmatpush1.msra.mxu0 %v2496
            %3248 = vmatprep.subr.mxu0 0.0
            %3249 = vmatpush1.msra.mxu0 %v2495
            %3250 = vmatprep.subr.mxu0 0.0
            %3251 = vmatpush1.msra.mxu0 %v2494
            %3252 = vmatprep.subr.mxu0 0.0
            %3253 = vmatpush1.msra.mxu0 %v2493
            %3254 = vmatprep.subr.mxu0 0.0
            %3255 = vmatpush1.msra.mxu0 %v2492
            %3256 = vmatprep.subr.mxu0 0.0
            %3257 = vmatpush1.msra.mxu0 %v2491
            %3258 = vmatprep.subr.mxu0 0.0
            %3259 = vmatpush2.msra.mxu0 %v2522
            %3260 = vmatprep.subr.mxu0 0.0
            %3261 = vmatpush2.msra.mxu0 %v2521
            %3262 = vmatprep.subr.mxu0 0.0
            %3263 = vmatpush2.msra.mxu0 %v2520
            %3264 = vmatprep.subr.mxu0 0.0
            %3265 = vmatpush2.msra.mxu0 %v2519
            %3266 = vmatprep.subr.mxu0 0.0
            %3267 = vmatpush2.msra.mxu0 %v2518
            %3268 = vmatprep.subr.mxu0 0.0
            %3269 = vmatpush2.msra.mxu0 %v2517
            %3270 = vmatprep.subr.mxu0 0.0
            %3271 = vmatpush2.msra.mxu0 %v2516
            %3272 = vmatprep.subr.mxu0 0.0
            %3273 = vmatpush2.msra.mxu0 %v2515
            %3274 = vmatprep.subr.mxu0 0.0
            %3275 = vmatpush2.msra.mxu0 %v2514
            %3276 = vmatprep.subr.mxu0 0.0
            %3277 = vmatpush2.msra.mxu0 %v2513
            %3278 = vmatprep.subr.mxu0 0.0
            %3279 = vmatpush2.msra.mxu0 %v2512
            %3280 = vmatprep.subr.mxu0 0.0
            %3281 = vmatpush2.msra.mxu0 %v2511
            %3282 = vmatprep.subr.mxu0 0.0
            %3283 = vmatpush2.msra.mxu0 %v2510
            %3284 = vmatprep.subr.mxu0 0.0
            %3285 = vmatpush2.msra.mxu0 %v2509
            %3286 = vmatprep.subr.mxu0 0.0
            %3287 = vmatpush2.msra.mxu0 %v2508
            %3288 = vmatprep.subr.mxu0 0.0
            %3289 = vmatpush2.msra.mxu0 %v2507
            %3290 = vmatprep.mubr.f32.mxu0 %v2336
            %3291 = vmatmul.mubr.f32.gmra.mxu0 %v2335
            %v3292 = vpop.f32.mrf.mxu0
            %v3293 = vadd.f32 %v3223, %v3292
            %v3294 = vpop.f32.mrf.mxu0
            %3295 = vdwg.mxu0
            %3296 = vmatprep.subr.mxu0 0.0
            %3297 = vmatpush1.msra.mxu0 %v2538
            %3298 = vmatprep.subr.mxu0 0.0
            %3299 = vmatpush1.msra.mxu0 %v2537
            %3300 = vmatprep.subr.mxu0 0.0
            %3301 = vmatpush1.msra.mxu0 %v2536
            %3302 = vmatprep.subr.mxu0 0.0
            %3303 = vmatpush1.msra.mxu0 %v2535
            %3304 = vmatprep.subr.mxu0 0.0
            %3305 = vmatpush1.msra.mxu0 %v2534
            %3306 = vmatprep.subr.mxu0 0.0
            %3307 = vmatpush1.msra.mxu0 %v2533
            %3308 = vmatprep.subr.mxu0 0.0
            %3309 = vmatpush1.msra.mxu0 %v2532
            %3310 = vmatprep.subr.mxu0 0.0
            %3311 = vmatpush1.msra.mxu0 %v2531
            %3312 = vmatprep.subr.mxu0 0.0
            %3313 = vmatpush1.msra.mxu0 %v2530
            %3314 = vmatprep.subr.mxu0 0.0
            %3315 = vmatpush1.msra.mxu0 %v2529
            %3316 = vmatprep.subr.mxu0 0.0
            %3317 = vmatpush1.msra.mxu0 %v2528
            %3318 = vmatprep.subr.mxu0 0.0
            %3319 = vmatpush1.msra.mxu0 %v2527
            %3320 = vmatprep.subr.mxu0 0.0
            %3321 = vmatpush1.msra.mxu0 %v2526
            %3322 = vmatprep.subr.mxu0 0.0
            %3323 = vmatpush1.msra.mxu0 %v2525
            %3324 = vmatprep.subr.mxu0 0.0
            %3325 = vmatpush1.msra.mxu0 %v2524
            %3326 = vmatprep.subr.mxu0 0.0
            %3327 = vmatpush1.msra.mxu0 %v2523
            %3328 = vmatprep.subr.mxu0 0.0
            %3329 = vmatpush2.msra.mxu0 %v2554
            %3330 = vmatprep.subr.mxu0 0.0
            %3331 = vmatpush2.msra.mxu0 %v2553
            %3332 = vmatprep.subr.mxu0 0.0
            %3333 = vmatpush2.msra.mxu0 %v2552
            %3334 = vmatprep.subr.mxu0 0.0
            %3335 = vmatpush2.msra.mxu0 %v2551
            %3336 = vmatprep.subr.mxu0 0.0
            %3337 = vmatpush2.msra.mxu0 %v2550
            %3338 = vmatprep.subr.mxu0 0.0
            %3339 = vmatpush2.msra.mxu0 %v2549
            %3340 = vmatprep.subr.mxu0 0.0
            %3341 = vmatpush2.msra.mxu0 %v2548
            %3342 = vmatprep.subr.mxu0 0.0
            %3343 = vmatpush2.msra.mxu0 %v2547
            %3344 = vmatprep.subr.mxu0 0.0
            %3345 = vmatpush2.msra.mxu0 %v2546
            %3346 = vmatprep.subr.mxu0 0.0
            %3347 = vmatpush2.msra.mxu0 %v2545
            %3348 = vmatprep.subr.mxu0 0.0
            %3349 = vmatpush2.msra.mxu0 %v2544
            %3350 = vmatprep.subr.mxu0 0.0
            %3351 = vmatpush2.msra.mxu0 %v2543
            %3352 = vmatprep.subr.mxu0 0.0
            %3353 = vmatpush2.msra.mxu0 %v2542
            %3354 = vmatprep.subr.mxu0 0.0
            %3355 = vmatpush2.msra.mxu0 %v2541
            %3356 = vmatprep.subr.mxu0 0.0
            %3357 = vmatpush2.msra.mxu0 %v2540
            %3358 = vmatprep.subr.mxu0 0.0
            %3359 = vmatpush2.msra.mxu0 %v2539
            %3360 = vmatprep.mubr.f32.mxu0 %v2338
            %3361 = vmatmul.mubr.f32.gmra.mxu0 %v2337
            %v3362 = vpop.f32.mrf.mxu0
            %v3363 = vadd.f32 %v3293, %v3362
            %v3364 = vpop.f32.mrf.mxu0
            %3365 = vdwg.mxu0
            %3366 = vmatprep.subr.mxu0 0.0
            %3367 = vmatpush1.msra.mxu0 %v2570
            %3368 = vmatprep.subr.mxu0 0.0
            %3369 = vmatpush1.msra.mxu0 %v2569
            %3370 = vmatprep.subr.mxu0 0.0
            %3371 = vmatpush1.msra.mxu0 %v2568
            %3372 = vmatprep.subr.mxu0 0.0
            %3373 = vmatpush1.msra.mxu0 %v2567
            %3374 = vmatprep.subr.mxu0 0.0
            %3375 = vmatpush1.msra.mxu0 %v2566
            %3376 = vmatprep.subr.mxu0 0.0
            %3377 = vmatpush1.msra.mxu0 %v2565
            %3378 = vmatprep.subr.mxu0 0.0
            %3379 = vmatpush1.msra.mxu0 %v2564
            %3380 = vmatprep.subr.mxu0 0.0
            %3381 = vmatpush1.msra.mxu0 %v2563
            %3382 = vmatprep.subr.mxu0 0.0
            %3383 = vmatpush1.msra.mxu0 %v2562
            %3384 = vmatprep.subr.mxu0 0.0
            %3385 = vmatpush1.msra.mxu0 %v2561
            %3386 = vmatprep.subr.mxu0 0.0
            %3387 = vmatpush1.msra.mxu0 %v2560
            %3388 = vmatprep.subr.mxu0 0.0
            %3389 = vmatpush1.msra.mxu0 %v2559
            %3390 = vmatprep.subr.mxu0 0.0
            %3391 = vmatpush1.msra.mxu0 %v2558
            %3392 = vmatprep.subr.mxu0 0.0
            %3393 = vmatpush1.msra.mxu0 %v2557
            %3394 = vmatprep.subr.mxu0 0.0
            %3395 = vmatpush1.msra.mxu0 %v2556
            %3396 = vmatprep.subr.mxu0 0.0
            %3397 = vmatpush1.msra.mxu0 %v2555
            %3398 = vmatprep.subr.mxu0 0.0
            %3399 = vmatpush2.msra.mxu0 %v2586
            %3400 = vmatprep.subr.mxu0 0.0
            %3401 = vmatpush2.msra.mxu0 %v2585
            %3402 = vmatprep.subr.mxu0 0.0
            %3403 = vmatpush2.msra.mxu0 %v2584
            %3404 = vmatprep.subr.mxu0 0.0
            %3405 = vmatpush2.msra.mxu0 %v2583
            %3406 = vmatprep.subr.mxu0 0.0
            %3407 = vmatpush2.msra.mxu0 %v2582
            %3408 = vmatprep.subr.mxu0 0.0
            %3409 = vmatpush2.msra.mxu0 %v2581
            %3410 = vmatprep.subr.mxu0 0.0
            %3411 = vmatpush2.msra.mxu0 %v2580
            %3412 = vmatprep.subr.mxu0 0.0
            %3413 = vmatpush2.msra.mxu0 %v2579
            %3414 = vmatprep.subr.mxu0 0.0
            %3415 = vmatpush2.msra.mxu0 %v2578
            %3416 = vmatprep.subr.mxu0 0.0
            %3417 = vmatpush2.msra.mxu0 %v2577
            %3418 = vmatprep.subr.mxu0 0.0
            %3419 = vmatpush2.msra.mxu0 %v2576
            %3420 = vmatprep.subr.mxu0 0.0
            %3421 = vmatpush2.msra.mxu0 %v2575
            %3422 = vmatprep.subr.mxu0 0.0
            %3423 = vmatpush2.msra.mxu0 %v2574
            %3424 = vmatprep.subr.mxu0 0.0
            %3425 = vmatpush2.msra.mxu0 %v2573
            %3426 = vmatprep.subr.mxu0 0.0
            %3427 = vmatpush2.msra.mxu0 %v2572
            %3428 = vmatprep.subr.mxu0 0.0
            %3429 = vmatpush2.msra.mxu0 %v2571
            %3430 = vmatprep.mubr.f32.mxu0 %v2340
            %3431 = vmatmul.mubr.f32.gmra.mxu0 %v2339
            %v3432 = vpop.f32.mrf.mxu0
            %v3433 = vadd.f32 %v3363, %v3432
            %v3434 = vpop.f32.mrf.mxu0
            %3435 = vdwg.mxu0
            %3436 = vmatprep.subr.mxu0 0.0
            %3437 = vmatpush1.msra.mxu0 %v2602
            %3438 = vmatprep.subr.mxu0 0.0
            %3439 = vmatpush1.msra.mxu0 %v2601
            %3440 = vmatprep.subr.mxu0 0.0
            %3441 = vmatpush1.msra.mxu0 %v2600
            %3442 = vmatprep.subr.mxu0 0.0
            %3443 = vmatpush1.msra.mxu0 %v2599
            %3444 = vmatprep.subr.mxu0 0.0
            %3445 = vmatpush1.msra.mxu0 %v2598
            %3446 = vmatprep.subr.mxu0 0.0
            %3447 = vmatpush1.msra.mxu0 %v2597
            %3448 = vmatprep.subr.mxu0 0.0
            %3449 = vmatpush1.msra.mxu0 %v2596
            %3450 = vmatprep.subr.mxu0 0.0
            %3451 = vmatpush1.msra.mxu0 %v2595
            %3452 = vmatprep.subr.mxu0 0.0
            %3453 = vmatpush1.msra.mxu0 %v2594
            %3454 = vmatprep.subr.mxu0 0.0
            %3455 = vmatpush1.msra.mxu0 %v2593
            %3456 = vmatprep.subr.mxu0 0.0
            %3457 = vmatpush1.msra.mxu0 %v2592
            %3458 = vmatprep.subr.mxu0 0.0
            %3459 = vmatpush1.msra.mxu0 %v2591
            %3460 = vmatprep.subr.mxu0 0.0
            %3461 = vmatpush1.msra.mxu0 %v2590
            %3462 = vmatprep.subr.mxu0 0.0
            %3463 = vmatpush1.msra.mxu0 %v2589
            %3464 = vmatprep.subr.mxu0 0.0
            %3465 = vmatpush1.msra.mxu0 %v2588
            %3466 = vmatprep.subr.mxu0 0.0
            %3467 = vmatpush1.msra.mxu0 %v2587
            %3468 = vmatprep.subr.mxu0 0.0
            %3469 = vmatpush2.msra.mxu0 %v2618
            %3470 = vmatprep.subr.mxu0 0.0
            %3471 = vmatpush2.msra.mxu0 %v2617
            %3472 = vmatprep.subr.mxu0 0.0
            %3473 = vmatpush2.msra.mxu0 %v2616
            %3474 = vmatprep.subr.mxu0 0.0
            %3475 = vmatpush2.msra.mxu0 %v2615
            %3476 = vmatprep.subr.mxu0 0.0
            %3477 = vmatpush2.msra.mxu0 %v2614
            %3478 = vmatprep.subr.mxu0 0.0
            %3479 = vmatpush2.msra.mxu0 %v2613
            %3480 = vmatprep.subr.mxu0 0.0
            %3481 = vmatpush2.msra.mxu0 %v2612
            %3482 = vmatprep.subr.mxu0 0.0
            %3483 = vmatpush2.msra.mxu0 %v2611
            %3484 = vmatprep.subr.mxu0 0.0
            %3485 = vmatpush2.msra.mxu0 %v2610
            %3486 = vmatprep.subr.mxu0 0.0
            %3487 = vmatpush2.msra.mxu0 %v2609
            %3488 = vmatprep.subr.mxu0 0.0
            %3489 = vmatpush2.msra.mxu0 %v2608
            %3490 = vmatprep.subr.mxu0 0.0
            %3491 = vmatpush2.msra.mxu0 %v2607
            %3492 = vmatprep.subr.mxu0 0.0
            %3493 = vmatpush2.msra.mxu0 %v2606
            %3494 = vmatprep.subr.mxu0 0.0
            %3495 = vmatpush2.msra.mxu0 %v2605
            %3496 = vmatprep.subr.mxu0 0.0
            %3497 = vmatpush2.msra.mxu0 %v2604
            %3498 = vmatprep.subr.mxu0 0.0
            %3499 = vmatpush2.msra.mxu0 %v2603
            %3500 = vmatprep.mubr.f32.mxu0 %v2342
            %3501 = vmatmul.mubr.f32.gmra.mxu0 %v2341
            %v3502 = vpop.f32.mrf.mxu0
            %v3503 = vadd.f32 %v3433, %v3502
            %v3504 = vpop.f32.mrf.mxu0
            %3505 = vdwg.mxu0
            %3506 = vmatprep.subr.mxu0 0.0
            %3507 = vmatpush1.msra.mxu0 %v2634
            %3508 = vmatprep.subr.mxu0 0.0
            %3509 = vmatpush1.msra.mxu0 %v2633
            %3510 = vmatprep.subr.mxu0 0.0
            %3511 = vmatpush1.msra.mxu0 %v2632
            %3512 = vmatprep.subr.mxu0 0.0
            %3513 = vmatpush1.msra.mxu0 %v2631
            %3514 = vmatprep.subr.mxu0 0.0
            %3515 = vmatpush1.msra.mxu0 %v2630
            %3516 = vmatprep.subr.mxu0 0.0
            %3517 = vmatpush1.msra.mxu0 %v2629
            %3518 = vmatprep.subr.mxu0 0.0
            %3519 = vmatpush1.msra.mxu0 %v2628
            %3520 = vmatprep.subr.mxu0 0.0
            %3521 = vmatpush1.msra.mxu0 %v2627
            %3522 = vmatprep.subr.mxu0 0.0
            %3523 = vmatpush1.msra.mxu0 %v2626
            %3524 = vmatprep.subr.mxu0 0.0
            %3525 = vmatpush1.msra.mxu0 %v2625
            %3526 = vmatprep.subr.mxu0 0.0
            %3527 = vmatpush1.msra.mxu0 %v2624
            %3528 = vmatprep.subr.mxu0 0.0
            %3529 = vmatpush1.msra.mxu0 %v2623
            %3530 = vmatprep.subr.mxu0 0.0
            %3531 = vmatpush1.msra.mxu0 %v2622
            %3532 = vmatprep.subr.mxu0 0.0
            %3533 = vmatpush1.msra.mxu0 %v2621
            %3534 = vmatprep.subr.mxu0 0.0
            %3535 = vmatpush1.msra.mxu0 %v2620
            %3536 = vmatprep.subr.mxu0 0.0
            %3537 = vmatpush1.msra.mxu0 %v2619
            %3538 = vmatprep.subr.mxu0 0.0
            %3539 = vmatpush2.msra.mxu0 %v2650
            %3540 = vmatprep.subr.mxu0 0.0
            %3541 = vmatpush2.msra.mxu0 %v2649
            %3542 = vmatprep.subr.mxu0 0.0
            %3543 = vmatpush2.msra.mxu0 %v2648
            %3544 = vmatprep.subr.mxu0 0.0
            %3545 = vmatpush2.msra.mxu0 %v2647
            %3546 = vmatprep.subr.mxu0 0.0
            %3547 = vmatpush2.msra.mxu0 %v2646
            %3548 = vmatprep.subr.mxu0 0.0
            %3549 = vmatpush2.msra.mxu0 %v2645
            %3550 = vmatprep.subr.mxu0 0.0
            %3551 = vmatpush2.msra.mxu0 %v2644
            %3552 = vmatprep.subr.mxu0 0.0
            %3553 = vmatpush2.msra.mxu0 %v2643
            %3554 = vmatprep.subr.mxu0 0.0
            %3555 = vmatpush2.msra.mxu0 %v2642
            %3556 = vmatprep.subr.mxu0 0.0
            %3557 = vmatpush2.msra.mxu0 %v2641
            %3558 = vmatprep.subr.mxu0 0.0
            %3559 = vmatpush2.msra.mxu0 %v2640
            %3560 = vmatprep.subr.mxu0 0.0
            %3561 = vmatpush2.msra.mxu0 %v2639
            %3562 = vmatprep.subr.mxu0 0.0
            %3563 = vmatpush2.msra.mxu0 %v2638
            %3564 = vmatprep.subr.mxu0 0.0
            %3565 = vmatpush2.msra.mxu0 %v2637
            %3566 = vmatprep.subr.mxu0 0.0
            %3567 = vmatpush2.msra.mxu0 %v2636
            %3568 = vmatprep.subr.mxu0 0.0
            %3569 = vmatpush2.msra.mxu0 %v2635
            %3570 = vmatprep.mubr.f32.mxu0 %v2344
            %3571 = vmatmul.mubr.f32.gmra.mxu0 %v2343
            %v3572 = vpop.f32.mrf.mxu0
            %v3573 = vadd.f32 %v3503, %v3572
            %v3574 = vpop.f32.mrf.mxu0
            %3575 = vdwg.mxu0
            %3576 = vmatprep.subr.mxu0 0.0
            %3577 = vmatpush1.msra.mxu0 %v2666
            %3578 = vmatprep.subr.mxu0 0.0
            %3579 = vmatpush1.msra.mxu0 %v2665
            %3580 = vmatprep.subr.mxu0 0.0
            %3581 = vmatpush1.msra.mxu0 %v2664
            %3582 = vmatprep.subr.mxu0 0.0
            %3583 = vmatpush1.msra.mxu0 %v2663
            %3584 = vmatprep.subr.mxu0 0.0
            %3585 = vmatpush1.msra.mxu0 %v2662
            %3586 = vmatprep.subr.mxu0 0.0
            %3587 = vmatpush1.msra.mxu0 %v2661
            %3588 = vmatprep.subr.mxu0 0.0
            %3589 = vmatpush1.msra.mxu0 %v2660
            %3590 = vmatprep.subr.mxu0 0.0
            %3591 = vmatpush1.msra.mxu0 %v2659
            %3592 = vmatprep.subr.mxu0 0.0
            %3593 = vmatpush1.msra.mxu0 %v2658
            %3594 = vmatprep.subr.mxu0 0.0
            %3595 = vmatpush1.msra.mxu0 %v2657
            %3596 = vmatprep.subr.mxu0 0.0
            %3597 = vmatpush1.msra.mxu0 %v2656
            %3598 = vmatprep.subr.mxu0 0.0
            %3599 = vmatpush1.msra.mxu0 %v2655
            %3600 = vmatprep.subr.mxu0 0.0
            %3601 = vmatpush1.msra.mxu0 %v2654
            %3602 = vmatprep.subr.mxu0 0.0
            %3603 = vmatpush1.msra.mxu0 %v2653
            %3604 = vmatprep.subr.mxu0 0.0
            %3605 = vmatpush1.msra.mxu0 %v2652
            %3606 = vmatprep.subr.mxu0 0.0
            %3607 = vmatpush1.msra.mxu0 %v2651
            %3608 = vmatprep.subr.mxu0 0.0
            %3609 = vmatpush2.msra.mxu0 %v2682
            %3610 = vmatprep.subr.mxu0 0.0
            %3611 = vmatpush2.msra.mxu0 %v2681
            %3612 = vmatprep.subr.mxu0 0.0
            %3613 = vmatpush2.msra.mxu0 %v2680
            %3614 = vmatprep.subr.mxu0 0.0
            %3615 = vmatpush2.msra.mxu0 %v2679
            %3616 = vmatprep.subr.mxu0 0.0
            %3617 = vmatpush2.msra.mxu0 %v2678
            %3618 = vmatprep.subr.mxu0 0.0
            %3619 = vmatpush2.msra.mxu0 %v2677
            %3620 = vmatprep.subr.mxu0 0.0
            %3621 = vmatpush2.msra.mxu0 %v2676
            %3622 = vmatprep.subr.mxu0 0.0
            %3623 = vmatpush2.msra.mxu0 %v2675
            %3624 = vmatprep.subr.mxu0 0.0
            %3625 = vmatpush2.msra.mxu0 %v2674
            %3626 = vmatprep.subr.mxu0 0.0
            %3627 = vmatpush2.msra.mxu0 %v2673
            %3628 = vmatprep.subr.mxu0 0.0
            %3629 = vmatpush2.msra.mxu0 %v2672
            %3630 = vmatprep.subr.mxu0 0.0
            %3631 = vmatpush2.msra.mxu0 %v2671
            %3632 = vmatprep.subr.mxu0 0.0
            %3633 = vmatpush2.msra.mxu0 %v2670
            %3634 = vmatprep.subr.mxu0 0.0
            %3635 = vmatpush2.msra.mxu0 %v2669
            %3636 = vmatprep.subr.mxu0 0.0
            %3637 = vmatpush2.msra.mxu0 %v2668
            %3638 = vmatprep.subr.mxu0 0.0
            %3639 = vmatpush2.msra.mxu0 %v2667
            %3640 = vmatprep.mubr.f32.mxu0 %v2346
            %3641 = vmatmul.mubr.f32.gmra.mxu0 %v2345
            %v3642 = vpop.f32.mrf.mxu0
            %v3643 = vadd.f32 %v3573, %v3642
            %v3644 = vpop.f32.mrf.mxu0
            %3645 = vdwg.mxu0
            %3646 = vmatprep.subr.mxu0 0.0
            %3647 = vmatpush1.msra.mxu0 %v2698
            %3648 = vmatprep.subr.mxu0 0.0
            %3649 = vmatpush1.msra.mxu0 %v2697
            %3650 = vmatprep.subr.mxu0 0.0
            %3651 = vmatpush1.msra.mxu0 %v2696
            %3652 = vmatprep.subr.mxu0 0.0
            %3653 = vmatpush1.msra.mxu0 %v2695
            %3654 = vmatprep.subr.mxu0 0.0
            %3655 = vmatpush1.msra.mxu0 %v2694
            %3656 = vmatprep.subr.mxu0 0.0
            %3657 = vmatpush1.msra.mxu0 %v2693
            %3658 = vmatprep.subr.mxu0 0.0
            %3659 = vmatpush1.msra.mxu0 %v2692
            %3660 = vmatprep.subr.mxu0 0.0
            %3661 = vmatpush1.msra.mxu0 %v2691
            %3662 = vmatprep.subr.mxu0 0.0
            %3663 = vmatpush1.msra.mxu0 %v2690
            %3664 = vmatprep.subr.mxu0 0.0
            %3665 = vmatpush1.msra.mxu0 %v2689
            %3666 = vmatprep.subr.mxu0 0.0
            %3667 = vmatpush1.msra.mxu0 %v2688
            %3668 = vmatprep.subr.mxu0 0.0
            %3669 = vmatpush1.msra.mxu0 %v2687
            %3670 = vmatprep.subr.mxu0 0.0
            %3671 = vmatpush1.msra.mxu0 %v2686
            %3672 = vmatprep.subr.mxu0 0.0
            %3673 = vmatpush1.msra.mxu0 %v2685
            %3674 = vmatprep.subr.mxu0 0.0
            %3675 = vmatpush1.msra.mxu0 %v2684
            %3676 = vmatprep.subr.mxu0 0.0
            %3677 = vmatpush1.msra.mxu0 %v2683
            %3678 = vmatprep.subr.mxu0 0.0
            %3679 = vmatpush2.msra.mxu0 %v2714
            %3680 = vmatprep.subr.mxu0 0.0
            %3681 = vmatpush2.msra.mxu0 %v2713
            %3682 = vmatprep.subr.mxu0 0.0
            %3683 = vmatpush2.msra.mxu0 %v2712
            %3684 = vmatprep.subr.mxu0 0.0
            %3685 = vmatpush2.msra.mxu0 %v2711
            %3686 = vmatprep.subr.mxu0 0.0
            %3687 = vmatpush2.msra.mxu0 %v2710
            %3688 = vmatprep.subr.mxu0 0.0
            %3689 = vmatpush2.msra.mxu0 %v2709
            %3690 = vmatprep.subr.mxu0 0.0
            %3691 = vmatpush2.msra.mxu0 %v2708
            %3692 = vmatprep.subr.mxu0 0.0
            %3693 = vmatpush2.msra.mxu0 %v2707
            %3694 = vmatprep.subr.mxu0 0.0
            %3695 = vmatpush2.msra.mxu0 %v2706
            %3696 = vmatprep.subr.mxu0 0.0
            %3697 = vmatpush2.msra.mxu0 %v2705
            %3698 = vmatprep.subr.mxu0 0.0
            %3699 = vmatpush2.msra.mxu0 %v2704
            %3700 = vmatprep.subr.mxu0 0.0
            %3701 = vmatpush2.msra.mxu0 %v2703
            %3702 = vmatprep.subr.mxu0 0.0
            %3703 = vmatpush2.msra.mxu0 %v2702
            %3704 = vmatprep.subr.mxu0 0.0
            %3705 = vmatpush2.msra.mxu0 %v2701
            %3706 = vmatprep.subr.mxu0 0.0
            %3707 = vmatpush2.msra.mxu0 %v2700
            %3708 = vmatprep.subr.mxu0 0.0
            %3709 = vmatpush2.msra.mxu0 %v2699
            %3710 = vmatprep.mubr.f32.mxu0 %v2348
            %3711 = vmatmul.mubr.f32.gmra.mxu0 %v2347
            %v3712 = vpop.f32.mrf.mxu0
            %v3713 = vadd.f32 %v3643, %v3712
            %v3714 = vpop.f32.mrf.mxu0
            %3715 = vdwg.mxu0
            %3716 = vmatprep.subr.mxu0 0.0
            %3717 = vmatpush1.msra.mxu0 %v2730
            %3718 = vmatprep.subr.mxu0 0.0
            %3719 = vmatpush1.msra.mxu0 %v2729
            %3720 = vmatprep.subr.mxu0 0.0
            %3721 = vmatpush1.msra.mxu0 %v2728
            %3722 = vmatprep.subr.mxu0 0.0
            %3723 = vmatpush1.msra.mxu0 %v2727
            %3724 = vmatprep.subr.mxu0 0.0
            %3725 = vmatpush1.msra.mxu0 %v2726
            %3726 = vmatprep.subr.mxu0 0.0
            %3727 = vmatpush1.msra.mxu0 %v2725
            %3728 = vmatprep.subr.mxu0 0.0
            %3729 = vmatpush1.msra.mxu0 %v2724
            %3730 = vmatprep.subr.mxu0 0.0
            %3731 = vmatpush1.msra.mxu0 %v2723
            %3732 = vmatprep.subr.mxu0 0.0
            %3733 = vmatpush1.msra.mxu0 %v2722
            %3734 = vmatprep.subr.mxu0 0.0
            %3735 = vmatpush1.msra.mxu0 %v2721
            %3736 = vmatprep.subr.mxu0 0.0
            %3737 = vmatpush1.msra.mxu0 %v2720
            %3738 = vmatprep.subr.mxu0 0.0
            %3739 = vmatpush1.msra.mxu0 %v2719
            %3740 = vmatprep.subr.mxu0 0.0
            %3741 = vmatpush1.msra.mxu0 %v2718
            %3742 = vmatprep.subr.mxu0 0.0
            %3743 = vmatpush1.msra.mxu0 %v2717
            %3744 = vmatprep.subr.mxu0 0.0
            %3745 = vmatpush1.msra.mxu0 %v2716
            %3746 = vmatprep.subr.mxu0 0.0
            %3747 = vmatpush1.msra.mxu0 %v2715
            %3748 = vmatprep.subr.mxu0 0.0
            %3749 = vmatpush2.msra.mxu0 %v2746
            %3750 = vmatprep.subr.mxu0 0.0
            %3751 = vmatpush2.msra.mxu0 %v2745
            %3752 = vmatprep.subr.mxu0 0.0
            %3753 = vmatpush2.msra.mxu0 %v2744
            %3754 = vmatprep.subr.mxu0 0.0
            %3755 = vmatpush2.msra.mxu0 %v2743
            %3756 = vmatprep.subr.mxu0 0.0
            %3757 = vmatpush2.msra.mxu0 %v2742
            %3758 = vmatprep.subr.mxu0 0.0
            %3759 = vmatpush2.msra.mxu0 %v2741
            %3760 = vmatprep.subr.mxu0 0.0
            %3761 = vmatpush2.msra.mxu0 %v2740
            %3762 = vmatprep.subr.mxu0 0.0
            %3763 = vmatpush2.msra.mxu0 %v2739
            %3764 = vmatprep.subr.mxu0 0.0
            %3765 = vmatpush2.msra.mxu0 %v2738
            %3766 = vmatprep.subr.mxu0 0.0
            %3767 = vmatpush2.msra.mxu0 %v2737
            %3768 = vmatprep.subr.mxu0 0.0
            %3769 = vmatpush2.msra.mxu0 %v2736
            %3770 = vmatprep.subr.mxu0 0.0
            %3771 = vmatpush2.msra.mxu0 %v2735
            %3772 = vmatprep.subr.mxu0 0.0
            %3773 = vmatpush2.msra.mxu0 %v2734
            %3774 = vmatprep.subr.mxu0 0.0
            %3775 = vmatpush2.msra.mxu0 %v2733
            %3776 = vmatprep.subr.mxu0 0.0
            %3777 = vmatpush2.msra.mxu0 %v2732
            %3778 = vmatprep.subr.mxu0 0.0
            %3779 = vmatpush2.msra.mxu0 %v2731
            %3780 = vmatprep.mubr.f32.mxu0 %v2350
            %3781 = vmatmul.mubr.f32.gmra.mxu0 %v2349
            %v3782 = vpop.f32.mrf.mxu0
            %v3783 = vadd.f32 %v3713, %v3782
            %v3784 = vpop.f32.mrf.mxu0
            %3785 = vdwg.mxu0
            %3786 = vmatprep.subr.mxu0 0.0
            %3787 = vmatpush1.msra.mxu0 %v2762
            %3788 = vmatprep.subr.mxu0 0.0
            %3789 = vmatpush1.msra.mxu0 %v2761
            %3790 = vmatprep.subr.mxu0 0.0
            %3791 = vmatpush1.msra.mxu0 %v2760
            %3792 = vmatprep.subr.mxu0 0.0
            %3793 = vmatpush1.msra.mxu0 %v2759
            %3794 = vmatprep.subr.mxu0 0.0
            %3795 = vmatpush1.msra.mxu0 %v2758
            %3796 = vmatprep.subr.mxu0 0.0
            %3797 = vmatpush1.msra.mxu0 %v2757
            %3798 = vmatprep.subr.mxu0 0.0
            %3799 = vmatpush1.msra.mxu0 %v2756
            %3800 = vmatprep.subr.mxu0 0.0
            %3801 = vmatpush1.msra.mxu0 %v2755
            %3802 = vmatprep.subr.mxu0 0.0
            %3803 = vmatpush1.msra.mxu0 %v2754
            %3804 = vmatprep.subr.mxu0 0.0
            %3805 = vmatpush1.msra.mxu0 %v2753
            %3806 = vmatprep.subr.mxu0 0.0
            %3807 = vmatpush1.msra.mxu0 %v2752
            %3808 = vmatprep.subr.mxu0 0.0
            %3809 = vmatpush1.msra.mxu0 %v2751
            %3810 = vmatprep.subr.mxu0 0.0
            %3811 = vmatpush1.msra.mxu0 %v2750
            %3812 = vmatprep.subr.mxu0 0.0
            %3813 = vmatpush1.msra.mxu0 %v2749
            %3814 = vmatprep.subr.mxu0 0.0
            %3815 = vmatpush1.msra.mxu0 %v2748
            %3816 = vmatprep.subr.mxu0 0.0
            %3817 = vmatpush1.msra.mxu0 %v2747
            %3818 = vmatprep.subr.mxu0 0.0
            %3819 = vmatpush2.msra.mxu0 %v2778
            %3820 = vmatprep.subr.mxu0 0.0
            %3821 = vmatpush2.msra.mxu0 %v2777
            %3822 = vmatprep.subr.mxu0 0.0
            %3823 = vmatpush2.msra.mxu0 %v2776
            %3824 = vmatprep.subr.mxu0 0.0
            %3825 = vmatpush2.msra.mxu0 %v2775
            %3826 = vmatprep.subr.mxu0 0.0
            %3827 = vmatpush2.msra.mxu0 %v2774
            %3828 = vmatprep.subr.mxu0 0.0
            %3829 = vmatpush2.msra.mxu0 %v2773
            %3830 = vmatprep.subr.mxu0 0.0
            %3831 = vmatpush2.msra.mxu0 %v2772
            %3832 = vmatprep.subr.mxu0 0.0
            %3833 = vmatpush2.msra.mxu0 %v2771
            %3834 = vmatprep.subr.mxu0 0.0
            %3835 = vmatpush2.msra.mxu0 %v2770
            %3836 = vmatprep.subr.mxu0 0.0
            %3837 = vmatpush2.msra.mxu0 %v2769
            %3838 = vmatprep.subr.mxu0 0.0
            %3839 = vmatpush2.msra.mxu0 %v2768
            %3840 = vmatprep.subr.mxu0 0.0
            %3841 = vmatpush2.msra.mxu0 %v2767
            %3842 = vmatprep.subr.mxu0 0.0
            %3843 = vmatpush2.msra.mxu0 %v2766
            %3844 = vmatprep.subr.mxu0 0.0
            %3845 = vmatpush2.msra.mxu0 %v2765
            %3846 = vmatprep.subr.mxu0 0.0
            %3847 = vmatpush2.msra.mxu0 %v2764
            %3848 = vmatprep.subr.mxu0 0.0
            %3849 = vmatpush2.msra.mxu0 %v2763
            %3850 = vmatprep.mubr.f32.mxu0 %v2352
            %3851 = vmatmul.mubr.f32.gmra.mxu0 %v2351
            %v3852 = vpop.f32.mrf.mxu0
            %v3853 = vadd.f32 %v3783, %v3852
            %v3854 = vpop.f32.mrf.mxu0
            %3855 = vdwg.mxu0
            %3856 = vmatprep.subr.mxu0 0.0
            %3857 = vmatpush1.msra.mxu0 %v2794
            %3858 = vmatprep.subr.mxu0 0.0
            %3859 = vmatpush1.msra.mxu0 %v2793
            %3860 = vmatprep.subr.mxu0 0.0
            %3861 = vmatpush1.msra.mxu0 %v2792
            %3862 = vmatprep.subr.mxu0 0.0
            %3863 = vmatpush1.msra.mxu0 %v2791
            %3864 = vmatprep.subr.mxu0 0.0
            %3865 = vmatpush1.msra.mxu0 %v2790
            %3866 = vmatprep.subr.mxu0 0.0
            %3867 = vmatpush1.msra.mxu0 %v2789
            %3868 = vmatprep.subr.mxu0 0.0
            %3869 = vmatpush1.msra.mxu0 %v2788
            %3870 = vmatprep.subr.mxu0 0.0
            %3871 = vmatpush1.msra.mxu0 %v2787
            %3872 = vmatprep.subr.mxu0 0.0
            %3873 = vmatpush1.msra.mxu0 %v2786
            %3874 = vmatprep.subr.mxu0 0.0
            %3875 = vmatpush1.msra.mxu0 %v2785
            %3876 = vmatprep.subr.mxu0 0.0
            %3877 = vmatpush1.msra.mxu0 %v2784
            %3878 = vmatprep.subr.mxu0 0.0
            %3879 = vmatpush1.msra.mxu0 %v2783
            %3880 = vmatprep.subr.mxu0 0.0
            %3881 = vmatpush1.msra.mxu0 %v2782
            %3882 = vmatprep.subr.mxu0 0.0
            %3883 = vmatpush1.msra.mxu0 %v2781
            %3884 = vmatprep.subr.mxu0 0.0
            %3885 = vmatpush1.msra.mxu0 %v2780
            %3886 = vmatprep.subr.mxu0 0.0
            %3887 = vmatpush1.msra.mxu0 %v2779
            %3888 = vmatprep.subr.mxu0 0.0
            %3889 = vmatpush2.msra.mxu0 %v2810
            %3890 = vmatprep.subr.mxu0 0.0
            %3891 = vmatpush2.msra.mxu0 %v2809
            %3892 = vmatprep.subr.mxu0 0.0
            %3893 = vmatpush2.msra.mxu0 %v2808
            %3894 = vmatprep.subr.mxu0 0.0
            %3895 = vmatpush2.msra.mxu0 %v2807
            %3896 = vmatprep.subr.mxu0 0.0
            %3897 = vmatpush2.msra.mxu0 %v2806
            %3898 = vmatprep.subr.mxu0 0.0
            %3899 = vmatpush2.msra.mxu0 %v2805
            %3900 = vmatprep.subr.mxu0 0.0
            %3901 = vmatpush2.msra.mxu0 %v2804
            %3902 = vmatprep.subr.mxu0 0.0
            %3903 = vmatpush2.msra.mxu0 %v2803
            %3904 = vmatprep.subr.mxu0 0.0
            %3905 = vmatpush2.msra.mxu0 %v2802
            %3906 = vmatprep.subr.mxu0 0.0
            %3907 = vmatpush2.msra.mxu0 %v2801
            %3908 = vmatprep.subr.mxu0 0.0
            %3909 = vmatpush2.msra.mxu0 %v2800
            %3910 = vmatprep.subr.mxu0 0.0
            %3911 = vmatpush2.msra.mxu0 %v2799
            %3912 = vmatprep.subr.mxu0 0.0
            %3913 = vmatpush2.msra.mxu0 %v2798
            %3914 = vmatprep.subr.mxu0 0.0
            %3915 = vmatpush2.msra.mxu0 %v2797
            %3916 = vmatprep.subr.mxu0 0.0
            %3917 = vmatpush2.msra.mxu0 %v2796
            %3918 = vmatprep.subr.mxu0 0.0
            %3919 = vmatpush2.msra.mxu0 %v2795
            %3920 = vmatprep.mubr.f32.mxu0 %v2354
            %3921 = vmatmul.mubr.f32.gmra.mxu0 %v2353
            %v3922 = vpop.f32.mrf.mxu0
            %v3923 = vadd.f32 %v3853, %v3922
            %v3924 = vpop.f32.mrf.mxu0
            %3925 = vdwg.mxu0
            %3926 = vmatprep.subr.mxu0 0.0
            %3927 = vmatpush1.msra.mxu0 %v2826
            %3928 = vmatprep.subr.mxu0 0.0
            %3929 = vmatpush1.msra.mxu0 %v2825
            %3930 = vmatprep.subr.mxu0 0.0
            %3931 = vmatpush1.msra.mxu0 %v2824
            %3932 = vmatprep.subr.mxu0 0.0
            %3933 = vmatpush1.msra.mxu0 %v2823
            %3934 = vmatprep.subr.mxu0 0.0
            %3935 = vmatpush1.msra.mxu0 %v2822
            %3936 = vmatprep.subr.mxu0 0.0
            %3937 = vmatpush1.msra.mxu0 %v2821
            %3938 = vmatprep.subr.mxu0 0.0
            %3939 = vmatpush1.msra.mxu0 %v2820
            %3940 = vmatprep.subr.mxu0 0.0
            %3941 = vmatpush1.msra.mxu0 %v2819
            %3942 = vmatprep.subr.mxu0 0.0
            %3943 = vmatpush1.msra.mxu0 %v2818
            %3944 = vmatprep.subr.mxu0 0.0
            %3945 = vmatpush1.msra.mxu0 %v2817
            %3946 = vmatprep.subr.mxu0 0.0
            %3947 = vmatpush1.msra.mxu0 %v2816
            %3948 = vmatprep.subr.mxu0 0.0
            %3949 = vmatpush1.msra.mxu0 %v2815
            %3950 = vmatprep.subr.mxu0 0.0
            %3951 = vmatpush1.msra.mxu0 %v2814
            %3952 = vmatprep.subr.mxu0 0.0
            %3953 = vmatpush1.msra.mxu0 %v2813
            %3954 = vmatprep.subr.mxu0 0.0
            %3955 = vmatpush1.msra.mxu0 %v2812
            %3956 = vmatprep.subr.mxu0 0.0
            %3957 = vmatpush1.msra.mxu0 %v2811
            %3958 = vmatprep.subr.mxu0 0.0
            %3959 = vmatpush2.msra.mxu0 %v2842
            %3960 = vmatprep.subr.mxu0 0.0
            %3961 = vmatpush2.msra.mxu0 %v2841
            %3962 = vmatprep.subr.mxu0 0.0
            %3963 = vmatpush2.msra.mxu0 %v2840
            %3964 = vmatprep.subr.mxu0 0.0
            %3965 = vmatpush2.msra.mxu0 %v2839
            %3966 = vmatprep.subr.mxu0 0.0
            %3967 = vmatpush2.msra.mxu0 %v2838
            %3968 = vmatprep.subr.mxu0 0.0
            %3969 = vmatpush2.msra.mxu0 %v2837
            %3970 = vmatprep.subr.mxu0 0.0
            %3971 = vmatpush2.msra.mxu0 %v2836
            %3972 = vmatprep.subr.mxu0 0.0
            %3973 = vmatpush2.msra.mxu0 %v2835
            %3974 = vmatprep.subr.mxu0 0.0
            %3975 = vmatpush2.msra.mxu0 %v2834
            %3976 = vmatprep.subr.mxu0 0.0
            %3977 = vmatpush2.msra.mxu0 %v2833
            %3978 = vmatprep.subr.mxu0 0.0
            %3979 = vmatpush2.msra.mxu0 %v2832
            %3980 = vmatprep.subr.mxu0 0.0
            %3981 = vmatpush2.msra.mxu0 %v2831
            %3982 = vmatprep.subr.mxu0 0.0
            %3983 = vmatpush2.msra.mxu0 %v2830
            %3984 = vmatprep.subr.mxu0 0.0
            %3985 = vmatpush2.msra.mxu0 %v2829
            %3986 = vmatprep.subr.mxu0 0.0
            %3987 = vmatpush2.msra.mxu0 %v2828
            %3988 = vmatprep.subr.mxu0 0.0
            %3989 = vmatpush2.msra.mxu0 %v2827
            %3990 = vmatprep.mubr.f32.mxu0 %v2356
            %3991 = vmatmul.mubr.f32.gmra.mxu0 %v2355
            %v3992 = vpop.f32.mrf.mxu0
            %v3993 = vadd.f32 %v3923, %v3992
            %v3994 = vpop.f32.mrf.mxu0
            %3995 = vdwg.mxu0
            %3996 = vmatprep.subr.mxu0 0.0
            %3997 = vmatpush1.msra.mxu0 %v2858
            %3998 = vmatprep.subr.mxu0 0.0
            %3999 = vmatpush1.msra.mxu0 %v2857
            %4000 = vmatprep.subr.mxu0 0.0
            %4001 = vmatpush1.msra.mxu0 %v2856
            %4002 = vmatprep.subr.mxu0 0.0
            %4003 = vmatpush1.msra.mxu0 %v2855
            %4004 = vmatprep.subr.mxu0 0.0
            %4005 = vmatpush1.msra.mxu0 %v2854
            %4006 = vmatprep.subr.mxu0 0.0
            %4007 = vmatpush1.msra.mxu0 %v2853
            %4008 = vmatprep.subr.mxu0 0.0
            %4009 = vmatpush1.msra.mxu0 %v2852
            %4010 = vmatprep.subr.mxu0 0.0
            %4011 = vmatpush1.msra.mxu0 %v2851
            %4012 = vmatprep.subr.mxu0 0.0
            %4013 = vmatpush1.msra.mxu0 %v2850
            %4014 = vmatprep.subr.mxu0 0.0
            %4015 = vmatpush1.msra.mxu0 %v2849
            %4016 = vmatprep.subr.mxu0 0.0
            %4017 = vmatpush1.msra.mxu0 %v2848
            %4018 = vmatprep.subr.mxu0 0.0
            %4019 = vmatpush1.msra.mxu0 %v2847
            %4020 = vmatprep.subr.mxu0 0.0
            %4021 = vmatpush1.msra.mxu0 %v2846
            %4022 = vmatprep.subr.mxu0 0.0
            %4023 = vmatpush1.msra.mxu0 %v2845
            %4024 = vmatprep.subr.mxu0 0.0
            %4025 = vmatpush1.msra.mxu0 %v2844
            %4026 = vmatprep.subr.mxu0 0.0
            %4027 = vmatpush1.msra.mxu0 %v2843
            %4028 = vmatprep.subr.mxu0 0.0
            %4029 = vmatpush2.msra.mxu0 %v2874
            %4030 = vmatprep.subr.mxu0 0.0
            %4031 = vmatpush2.msra.mxu0 %v2873
            %4032 = vmatprep.subr.mxu0 0.0
            %4033 = vmatpush2.msra.mxu0 %v2872
            %4034 = vmatprep.subr.mxu0 0.0
            %4035 = vmatpush2.msra.mxu0 %v2871
            %4036 = vmatprep.subr.mxu0 0.0
            %4037 = vmatpush2.msra.mxu0 %v2870
            %4038 = vmatprep.subr.mxu0 0.0
            %4039 = vmatpush2.msra.mxu0 %v2869
            %4040 = vmatprep.subr.mxu0 0.0
            %4041 = vmatpush2.msra.mxu0 %v2868
            %4042 = vmatprep.subr.mxu0 0.0
            %4043 = vmatpush2.msra.mxu0 %v2867
            %4044 = vmatprep.subr.mxu0 0.0
            %4045 = vmatpush2.msra.mxu0 %v2866
            %4046 = vmatprep.subr.mxu0 0.0
            %4047 = vmatpush2.msra.mxu0 %v2865
            %4048 = vmatprep.subr.mxu0 0.0
            %4049 = vmatpush2.msra.mxu0 %v2864
            %4050 = vmatprep.subr.mxu0 0.0
            %4051 = vmatpush2.msra.mxu0 %v2863
            %4052 = vmatprep.subr.mxu0 0.0
            %4053 = vmatpush2.msra.mxu0 %v2862
            %4054 = vmatprep.subr.mxu0 0.0
            %4055 = vmatpush2.msra.mxu0 %v2861
            %4056 = vmatprep.subr.mxu0 0.0
            %4057 = vmatpush2.msra.mxu0 %v2860
            %4058 = vmatprep.subr.mxu0 0.0
            %4059 = vmatpush2.msra.mxu0 %v2859
            %4060 = vmatprep.mubr.f32.mxu0 %v2358
            %4061 = vmatmul.mubr.f32.gmra.mxu0 %v2357
            %v4062 = vpop.f32.mrf.mxu0
            %v4063 = vadd.f32 %v3993, %v4062
            %v4064 = vpop.f32.mrf.mxu0
            %4065 = vdwg.mxu0
            %4066 = vmatprep.subr.mxu0 0.0
            %4067 = vmatpush1.msra.mxu0 %v2890
            %4068 = vmatprep.subr.mxu0 0.0
            %4069 = vmatpush1.msra.mxu0 %v2889
            %4070 = vmatprep.subr.mxu0 0.0
            %4071 = vmatpush1.msra.mxu0 %v2888
            %4072 = vmatprep.subr.mxu0 0.0
            %4073 = vmatpush1.msra.mxu0 %v2887
            %4074 = vmatprep.subr.mxu0 0.0
            %4075 = vmatpush1.msra.mxu0 %v2886
            %4076 = vmatprep.subr.mxu0 0.0
            %4077 = vmatpush1.msra.mxu0 %v2885
            %4078 = vmatprep.subr.mxu0 0.0
            %4079 = vmatpush1.msra.mxu0 %v2884
            %4080 = vmatprep.subr.mxu0 0.0
            %4081 = vmatpush1.msra.mxu0 %v2883
            %4082 = vmatprep.subr.mxu0 0.0
            %4083 = vmatpush1.msra.mxu0 %v2882
            %4084 = vmatprep.subr.mxu0 0.0
            %4085 = vmatpush1.msra.mxu0 %v2881
            %4086 = vmatprep.subr.mxu0 0.0
            %4087 = vmatpush1.msra.mxu0 %v2880
            %4088 = vmatprep.subr.mxu0 0.0
            %4089 = vmatpush1.msra.mxu0 %v2879
            %4090 = vmatprep.subr.mxu0 0.0
            %4091 = vmatpush1.msra.mxu0 %v2878
            %4092 = vmatprep.subr.mxu0 0.0
            %4093 = vmatpush1.msra.mxu0 %v2877
            %4094 = vmatprep.subr.mxu0 0.0
            %4095 = vmatpush1.msra.mxu0 %v2876
            %4096 = vmatprep.subr.mxu0 0.0
            %4097 = vmatpush1.msra.mxu0 %v2875
            %4098 = vmatprep.subr.mxu0 0.0
            %4099 = vmatpush2.msra.mxu0 %v2906
            %4100 = vmatprep.subr.mxu0 0.0
            %4101 = vmatpush2.msra.mxu0 %v2905
            %4102 = vmatprep.subr.mxu0 0.0
            %4103 = vmatpush2.msra.mxu0 %v2904
            %4104 = vmatprep.subr.mxu0 0.0
            %4105 = vmatpush2.msra.mxu0 %v2903
            %4106 = vmatprep.subr.mxu0 0.0
            %4107 = vmatpush2.msra.mxu0 %v2902
            %4108 = vmatprep.subr.mxu0 0.0
            %4109 = vmatpush2.msra.mxu0 %v2901
            %4110 = vmatprep.subr.mxu0 0.0
            %4111 = vmatpush2.msra.mxu0 %v2900
            %4112 = vmatprep.subr.mxu0 0.0
            %4113 = vmatpush2.msra.mxu0 %v2899
            %4114 = vmatprep.subr.mxu0 0.0
            %4115 = vmatpush2.msra.mxu0 %v2898
            %4116 = vmatprep.subr.mxu0 0.0
            %4117 = vmatpush2.msra.mxu0 %v2897
            %4118 = vmatprep.subr.mxu0 0.0
            %4119 = vmatpush2.msra.mxu0 %v2896
            %4120 = vmatprep.subr.mxu0 0.0
            %4121 = vmatpush2.msra.mxu0 %v2895
            %4122 = vmatprep.subr.mxu0 0.0
            %4123 = vmatpush2.msra.mxu0 %v2894
            %4124 = vmatprep.subr.mxu0 0.0
            %4125 = vmatpush2.msra.mxu0 %v2893
            %4126 = vmatprep.subr.mxu0 0.0
            %4127 = vmatpush2.msra.mxu0 %v2892
            %4128 = vmatprep.subr.mxu0 0.0
            %4129 = vmatpush2.msra.mxu0 %v2891
            %4130 = vmatprep.mubr.f32.mxu0 %v2360
            %4131 = vmatmul.mubr.f32.gmra.mxu0 %v2359
            %v4132 = vpop.f32.mrf.mxu0
            %v4133 = vadd.f32 %v4063, %v4132
            %v4134 = vpop.f32.mrf.mxu0
            %4135 = vdwg.mxu0
            %4136 = vmatprep.subr.mxu0 0.0
            %4137 = vmatpush1.msra.mxu0 %v2922
            %4138 = vmatprep.subr.mxu0 0.0
            %4139 = vmatpush1.msra.mxu0 %v2921
            %4140 = vmatprep.subr.mxu0 0.0
            %4141 = vmatpush1.msra.mxu0 %v2920
            %4142 = vmatprep.subr.mxu0 0.0
            %4143 = vmatpush1.msra.mxu0 %v2919
            %4144 = vmatprep.subr.mxu0 0.0
            %4145 = vmatpush1.msra.mxu0 %v2918
            %4146 = vmatprep.subr.mxu0 0.0
            %4147 = vmatpush1.msra.mxu0 %v2917
            %4148 = vmatprep.subr.mxu0 0.0
            %4149 = vmatpush1.msra.mxu0 %v2916
            %4150 = vmatprep.subr.mxu0 0.0
            %4151 = vmatpush1.msra.mxu0 %v2915
            %4152 = vmatprep.subr.mxu0 0.0
            %4153 = vmatpush1.msra.mxu0 %v2914
            %4154 = vmatprep.subr.mxu0 0.0
            %4155 = vmatpush1.msra.mxu0 %v2913
            %4156 = vmatprep.subr.mxu0 0.0
            %4157 = vmatpush1.msra.mxu0 %v2912
            %4158 = vmatprep.subr.mxu0 0.0
            %4159 = vmatpush1.msra.mxu0 %v2911
            %4160 = vmatprep.subr.mxu0 0.0
            %4161 = vmatpush1.msra.mxu0 %v2910
            %4162 = vmatprep.subr.mxu0 0.0
            %4163 = vmatpush1.msra.mxu0 %v2909
            %4164 = vmatprep.subr.mxu0 0.0
            %4165 = vmatpush1.msra.mxu0 %v2908
            %4166 = vmatprep.subr.mxu0 0.0
            %4167 = vmatpush1.msra.mxu0 %v2907
            %4168 = vmatprep.subr.mxu0 0.0
            %4169 = vmatpush2.msra.mxu0 %v2938
            %4170 = vmatprep.subr.mxu0 0.0
            %4171 = vmatpush2.msra.mxu0 %v2937
            %4172 = vmatprep.subr.mxu0 0.0
            %4173 = vmatpush2.msra.mxu0 %v2936
            %4174 = vmatprep.subr.mxu0 0.0
            %4175 = vmatpush2.msra.mxu0 %v2935
            %4176 = vmatprep.subr.mxu0 0.0
            %4177 = vmatpush2.msra.mxu0 %v2934
            %4178 = vmatprep.subr.mxu0 0.0
            %4179 = vmatpush2.msra.mxu0 %v2933
            %4180 = vmatprep.subr.mxu0 0.0
            %4181 = vmatpush2.msra.mxu0 %v2932
            %4182 = vmatprep.subr.mxu0 0.0
            %4183 = vmatpush2.msra.mxu0 %v2931
            %4184 = vmatprep.subr.mxu0 0.0
            %4185 = vmatpush2.msra.mxu0 %v2930
            %4186 = vmatprep.subr.mxu0 0.0
            %4187 = vmatpush2.msra.mxu0 %v2929
            %4188 = vmatprep.subr.mxu0 0.0
            %4189 = vmatpush2.msra.mxu0 %v2928
            %4190 = vmatprep.subr.mxu0 0.0
            %4191 = vmatpush2.msra.mxu0 %v2927
            %4192 = vmatprep.subr.mxu0 0.0
            %4193 = vmatpush2.msra.mxu0 %v2926
            %4194 = vmatprep.subr.mxu0 0.0
            %4195 = vmatpush2.msra.mxu0 %v2925
            %4196 = vmatprep.subr.mxu0 0.0
            %4197 = vmatpush2.msra.mxu0 %v2924
            %4198 = vmatprep.subr.mxu0 0.0
            %4199 = vmatpush2.msra.mxu0 %v2923
            %4200 = vmatprep.mubr.f32.mxu0 %v2362
            %4201 = vmatmul.mubr.f32.gmra.mxu0 %v2361
            %v4202 = vpop.f32.mrf.mxu0
            %v4203 = vadd.f32 %v4133, %v4202
            %v4204 = vpop.f32.mrf.mxu0
            %4205 = vdwg.mxu0
            %v4207 = vrot.slane %v4203, 1
            %4208 = vrot.lane.b32.xlu0 %v4207, 32
            %v4209 = vpop.permute.xlu0 %4208
            %vm4211 = vcmask 261120
            %v4212 = vsel %vm4211, %v4203, %v4209
            %v4213 = vld [vmem:[%s4] sm:$0xff]
            %v4214 = vld [vmem:[%s4 + $0x8] sm:$0xff]
            %v4215 = vld [vmem:[%s4 + $0x10] sm:$0xff]
            %v4216 = vld [vmem:[%s4 + $0x18] sm:$0xff]
            %v4217 = vld [vmem:[%s4 + $0x20] sm:$0xff]
            %v4218 = vld [vmem:[%s4 + $0x28] sm:$0xff]
            %v4219 = vld [vmem:[%s4 + $0x30] sm:$0xff]
            %v4220 = vld [vmem:[%s4 + $0x38] sm:$0xff]
            %v4221 = vld [vmem:[%s4 + $0x40] sm:$0xff]
            %v4222 = vld [vmem:[%s4 + $0x48] sm:$0xff]
            %v4223 = vld [vmem:[%s4 + $0x50] sm:$0xff]
            %v4224 = vld [vmem:[%s4 + $0x58] sm:$0xff]
            %v4225 = vld [vmem:[%s4 + $0x60] sm:$0xff]
            %v4226 = vld [vmem:[%s4 + $0x68] sm:$0xff]
            %v4227 = vld [vmem:[%s4 + $0x70] sm:$0xff]
            %v4228 = vld [vmem:[%s4 + $0x78] sm:$0xff]
            %v4229 = vld [vmem:[%s4 + $0x80] sm:$0xff]
            %v4230 = vld [vmem:[%s4 + $0x88] sm:$0xff]
            %v4231 = vld [vmem:[%s4 + $0x90] sm:$0xff]
            %v4232 = vld [vmem:[%s4 + $0x98] sm:$0xff]
            %v4233 = vld [vmem:[%s4 + $0xa0] sm:$0xff]
            %v4234 = vld [vmem:[%s4 + $0xa8] sm:$0xff]
            %v4235 = vld [vmem:[%s4 + $0xb0] sm:$0xff]
            %v4236 = vld [vmem:[%s4 + $0xb8] sm:$0xff]
            %v4237 = vld [vmem:[%s4 + $0xc0] sm:$0xff]
            %v4238 = vld [vmem:[%s4 + $0xc8] sm:$0xff]
            %v4239 = vld [vmem:[%s4 + $0xd0] sm:$0xff]
            %v4240 = vld [vmem:[%s4 + $0xd8] sm:$0xff]
            %v4241 = vld [vmem:[%s4 + $0xe0] sm:$0xff]
            %v4242 = vld [vmem:[%s4 + $0xe8] sm:$0xff]
            %v4243 = vld [vmem:[%s4 + $0xf0] sm:$0xff]
            %v4244 = vld [vmem:[%s4 + $0xf8] sm:$0xff]
            %v4245 = vld [vmem:[%s4 + $0x100] sm:$0xff]
            %v4246 = vld [vmem:[%s4 + $0x108] sm:$0xff]
            %v4247 = vld [vmem:[%s4 + $0x110] sm:$0xff]
            %v4248 = vld [vmem:[%s4 + $0x118] sm:$0xff]
            %v4249 = vld [vmem:[%s4 + $0x120] sm:$0xff]
            %v4250 = vld [vmem:[%s4 + $0x128] sm:$0xff]
            %v4251 = vld [vmem:[%s4 + $0x130] sm:$0xff]
            %v4252 = vld [vmem:[%s4 + $0x138] sm:$0xff]
            %v4253 = vld [vmem:[%s4 + $0x140] sm:$0xff]
            %v4254 = vld [vmem:[%s4 + $0x148] sm:$0xff]
            %v4255 = vld [vmem:[%s4 + $0x150] sm:$0xff]
            %v4256 = vld [vmem:[%s4 + $0x158] sm:$0xff]
            %v4257 = vld [vmem:[%s4 + $0x160] sm:$0xff]
            %v4258 = vld [vmem:[%s4 + $0x168] sm:$0xff]
            %v4259 = vld [vmem:[%s4 + $0x170] sm:$0xff]
            %v4260 = vld [vmem:[%s4 + $0x178] sm:$0xff]
            %v4261 = vld [vmem:[%s4 + $0x180] sm:$0xff]
            %v4262 = vld [vmem:[%s4 + $0x188] sm:$0xff]
            %v4263 = vld [vmem:[%s4 + $0x190] sm:$0xff]
            %v4264 = vld [vmem:[%s4 + $0x198] sm:$0xff]
            %v4265 = vld [vmem:[%s4 + $0x1a0] sm:$0xff]
            %v4266 = vld [vmem:[%s4 + $0x1a8] sm:$0xff]
            %v4267 = vld [vmem:[%s4 + $0x1b0] sm:$0xff]
            %v4268 = vld [vmem:[%s4 + $0x1b8] sm:$0xff]
            %v4269 = vld [vmem:[%s4 + $0x1c0] sm:$0xff]
            %v4270 = vld [vmem:[%s4 + $0x1c8] sm:$0xff]
            %v4271 = vld [vmem:[%s4 + $0x1d0] sm:$0xff]
            %v4272 = vld [vmem:[%s4 + $0x1d8] sm:$0xff]
            %v4273 = vld [vmem:[%s4 + $0x1e0] sm:$0xff]
            %v4274 = vld [vmem:[%s4 + $0x1e8] sm:$0xff]
            %v4275 = vld [vmem:[%s4 + $0x1f0] sm:$0xff]
            %v4276 = vld [vmem:[%s4 + $0x1f8] sm:$0xff]
            %v4277 = vld [vmem:[%s5] sm:$0xff]
            %v4279 = vlaneseq
            %v4280 = vshrl.u32 %v4279, 7
            %v4281 = vsub.s32 0, %v4280
            %v4282 = vrot.slane %v4277, %v4281
            %v4283 = vlaneseq
            %v4284 = vshrl.u32 %v4283, 7
            %v4285 = vsub.s32 1, %v4284
            %v4286 = vrot.slane %v4277, %v4285
            %v4287 = vlaneseq
            %v4288 = vshrl.u32 %v4287, 7
            %v4289 = vsub.s32 2, %v4288
            %v4290 = vrot.slane %v4277, %v4289
            %v4291 = vlaneseq
            %v4292 = vshrl.u32 %v4291, 7
            %v4293 = vsub.s32 3, %v4292
            %v4294 = vrot.slane %v4277, %v4293
            %v4295 = vlaneseq
            %v4296 = vshrl.u32 %v4295, 7
            %v4297 = vsub.s32 4, %v4296
            %v4298 = vrot.slane %v4277, %v4297
            %v4299 = vlaneseq
            %v4300 = vshrl.u32 %v4299, 7
            %v4301 = vsub.s32 5, %v4300
            %v4302 = vrot.slane %v4277, %v4301
            %v4303 = vlaneseq
            %v4304 = vshrl.u32 %v4303, 7
            %v4305 = vsub.s32 6, %v4304
            %v4306 = vrot.slane %v4277, %v4305
            %v4307 = vlaneseq
            %v4308 = vshrl.u32 %v4307, 7
            %v4309 = vsub.s32 7, %v4308
            %v4310 = vrot.slane %v4277, %v4309
            %vm4319 = vcmask 523264
            %v4321 = vsel %vm4319, %v4212, 0
            %4323 = vmatprep.subr.mxu0 0.0
            %4324 = vmatpush1.msra.mxu0 0.0
            %4325 = vmatprep.subr.mxu0 0.0
            %4326 = vmatpush1.msra.mxu0 0.0
            %4327 = vmatprep.subr.mxu0 0.0
            %4328 = vmatpush1.msra.mxu0 0.0
            %4329 = vmatprep.subr.mxu0 0.0
            %4330 = vmatpush1.msra.mxu0 0.0
            %4331 = vmatprep.subr.mxu0 0.0
            %4332 = vmatpush1.msra.mxu0 0.0
            %4333 = vmatprep.subr.mxu0 0.0
            %4334 = vmatpush1.msra.mxu0 0.0
            %4335 = vmatprep.subr.mxu0 0.0
            %4336 = vmatpush1.msra.mxu0 0.0
            %4337 = vmatprep.subr.mxu0 0.0
            %4338 = vmatpush1.msra.mxu0 0.0
            %4339 = vmatprep.subr.mxu0 %v4270
            %4340 = vmatpush1.msra.mxu0 %v4269
            %4341 = vmatprep.subr.mxu0 %v4262
            %4342 = vmatpush1.msra.mxu0 %v4261
            %4343 = vmatprep.subr.mxu0 %v4254
            %4344 = vmatpush1.msra.mxu0 %v4253
            %4345 = vmatprep.subr.mxu0 %v4246
            %4346 = vmatpush1.msra.mxu0 %v4245
            %4347 = vmatprep.subr.mxu0 %v4238
            %4348 = vmatpush1.msra.mxu0 %v4237
            %4349 = vmatprep.subr.mxu0 %v4230
            %4350 = vmatpush1.msra.mxu0 %v4229
            %4351 = vmatprep.subr.mxu0 %v4222
            %4352 = vmatpush1.msra.mxu0 %v4221
            %4353 = vmatprep.subr.mxu0 %v4214
            %4354 = vmatpush1.msra.mxu0 %v4213
            %4355 = vmatprep.subr.mxu0 0.0
            %4356 = vmatpush2.msra.mxu0 0.0
            %4357 = vmatprep.subr.mxu0 0.0
            %4358 = vmatpush2.msra.mxu0 0.0
            %4359 = vmatprep.subr.mxu0 0.0
            %4360 = vmatpush2.msra.mxu0 0.0
            %4361 = vmatprep.subr.mxu0 0.0
            %4362 = vmatpush2.msra.mxu0 0.0
            %4363 = vmatprep.subr.mxu0 0.0
            %4364 = vmatpush2.msra.mxu0 0.0
            %4365 = vmatprep.subr.mxu0 0.0
            %4366 = vmatpush2.msra.mxu0 0.0
            %4367 = vmatprep.subr.mxu0 0.0
            %4368 = vmatpush2.msra.mxu0 0.0
            %4369 = vmatprep.subr.mxu0 0.0
            %4370 = vmatpush2.msra.mxu0 0.0
            %4371 = vmatprep.subr.mxu0 0.0
            %4372 = vmatpush2.msra.mxu0 0.0
            %4373 = vmatprep.subr.mxu0 0.0
            %4374 = vmatpush2.msra.mxu0 0.0
            %4375 = vmatprep.subr.mxu0 0.0
            %4376 = vmatpush2.msra.mxu0 0.0
            %4377 = vmatprep.subr.mxu0 0.0
            %4378 = vmatpush2.msra.mxu0 0.0
            %4379 = vmatprep.subr.mxu0 0.0
            %4380 = vmatpush2.msra.mxu0 0.0
            %4381 = vmatprep.subr.mxu0 0.0
            %4382 = vmatpush2.msra.mxu0 0.0
            %4383 = vmatprep.subr.mxu0 0.0
            %4384 = vmatpush2.msra.mxu0 0.0
            %4385 = vmatprep.subr.mxu0 0.0
            %4386 = vmatpush2.msra.mxu0 0.0
            %4387 = vmatprep.mubr.f32.mxu0 0.0
            %4388 = vmatmul.mubr.f32.gmra.mxu0 %v4321
            %v4389 = vpop.f32.mrf.mxu0
            %v4390 = vadd.f32 %v4282, %v4389
            %v4391 = vpop.f32.mrf.mxu0
            %v4392 = vadd.f32 %v4286, %v4391
            %4393 = vdwg.mxu0
            %4394 = vmatprep.subr.mxu0 0.0
            %4395 = vmatpush1.msra.mxu0 0.0
            %4396 = vmatprep.subr.mxu0 0.0
            %4397 = vmatpush1.msra.mxu0 0.0
            %4398 = vmatprep.subr.mxu0 0.0
            %4399 = vmatpush1.msra.mxu0 0.0
            %4400 = vmatprep.subr.mxu0 0.0
            %4401 = vmatpush1.msra.mxu0 0.0
            %4402 = vmatprep.subr.mxu0 0.0
            %4403 = vmatpush1.msra.mxu0 0.0
            %4404 = vmatprep.subr.mxu0 0.0
            %4405 = vmatpush1.msra.mxu0 0.0
            %4406 = vmatprep.subr.mxu0 0.0
            %4407 = vmatpush1.msra.mxu0 0.0
            %4408 = vmatprep.subr.mxu0 0.0
            %4409 = vmatpush1.msra.mxu0 0.0
            %4410 = vmatprep.subr.mxu0 %v4272
            %4411 = vmatpush1.msra.mxu0 %v4271
            %4412 = vmatprep.subr.mxu0 %v4264
            %4413 = vmatpush1.msra.mxu0 %v4263
            %4414 = vmatprep.subr.mxu0 %v4256
            %4415 = vmatpush1.msra.mxu0 %v4255
            %4416 = vmatprep.subr.mxu0 %v4248
            %4417 = vmatpush1.msra.mxu0 %v4247
            %4418 = vmatprep.subr.mxu0 %v4240
            %4419 = vmatpush1.msra.mxu0 %v4239
            %4420 = vmatprep.subr.mxu0 %v4232
            %4421 = vmatpush1.msra.mxu0 %v4231
            %4422 = vmatprep.subr.mxu0 %v4224
            %4423 = vmatpush1.msra.mxu0 %v4223
            %4424 = vmatprep.subr.mxu0 %v4216
            %4425 = vmatpush1.msra.mxu0 %v4215
            %4426 = vmatprep.subr.mxu0 0.0
            %4427 = vmatpush2.msra.mxu0 0.0
            %4428 = vmatprep.subr.mxu0 0.0
            %4429 = vmatpush2.msra.mxu0 0.0
            %4430 = vmatprep.subr.mxu0 0.0
            %4431 = vmatpush2.msra.mxu0 0.0
            %4432 = vmatprep.subr.mxu0 0.0
            %4433 = vmatpush2.msra.mxu0 0.0
            %4434 = vmatprep.subr.mxu0 0.0
            %4435 = vmatpush2.msra.mxu0 0.0
            %4436 = vmatprep.subr.mxu0 0.0
            %4437 = vmatpush2.msra.mxu0 0.0
            %4438 = vmatprep.subr.mxu0 0.0
            %4439 = vmatpush2.msra.mxu0 0.0
            %4440 = vmatprep.subr.mxu0 0.0
            %4441 = vmatpush2.msra.mxu0 0.0
            %4442 = vmatprep.subr.mxu0 0.0
            %4443 = vmatpush2.msra.mxu0 0.0
            %4444 = vmatprep.subr.mxu0 0.0
            %4445 = vmatpush2.msra.mxu0 0.0
            %4446 = vmatprep.subr.mxu0 0.0
            %4447 = vmatpush2.msra.mxu0 0.0
            %4448 = vmatprep.subr.mxu0 0.0
            %4449 = vmatpush2.msra.mxu0 0.0
            %4450 = vmatprep.subr.mxu0 0.0
            %4451 = vmatpush2.msra.mxu0 0.0
            %4452 = vmatprep.subr.mxu0 0.0
            %4453 = vmatpush2.msra.mxu0 0.0
            %4454 = vmatprep.subr.mxu0 0.0
            %4455 = vmatpush2.msra.mxu0 0.0
            %4456 = vmatprep.subr.mxu0 0.0
            %4457 = vmatpush2.msra.mxu0 0.0
            %4458 = vmatprep.mubr.f32.mxu0 0.0
            %4459 = vmatmul.mubr.f32.gmra.mxu0 %v4321
            %v4460 = vpop.f32.mrf.mxu0
            %v4461 = vadd.f32 %v4290, %v4460
            %v4462 = vpop.f32.mrf.mxu0
            %v4463 = vadd.f32 %v4294, %v4462
            %4464 = vdwg.mxu0
            %4465 = vmatprep.subr.mxu0 0.0
            %4466 = vmatpush1.msra.mxu0 0.0
            %4467 = vmatprep.subr.mxu0 0.0
            %4468 = vmatpush1.msra.mxu0 0.0
            %4469 = vmatprep.subr.mxu0 0.0
            %4470 = vmatpush1.msra.mxu0 0.0
            %4471 = vmatprep.subr.mxu0 0.0
            %4472 = vmatpush1.msra.mxu0 0.0
            %4473 = vmatprep.subr.mxu0 0.0
            %4474 = vmatpush1.msra.mxu0 0.0
            %4475 = vmatprep.subr.mxu0 0.0
            %4476 = vmatpush1.msra.mxu0 0.0
            %4477 = vmatprep.subr.mxu0 0.0
            %4478 = vmatpush1.msra.mxu0 0.0
            %4479 = vmatprep.subr.mxu0 0.0
            %4480 = vmatpush1.msra.mxu0 0.0
            %4481 = vmatprep.subr.mxu0 %v4274
            %4482 = vmatpush1.msra.mxu0 %v4273
            %4483 = vmatprep.subr.mxu0 %v4266
            %4484 = vmatpush1.msra.mxu0 %v4265
            %4485 = vmatprep.subr.mxu0 %v4258
            %4486 = vmatpush1.msra.mxu0 %v4257
            %4487 = vmatprep.subr.mxu0 %v4250
            %4488 = vmatpush1.msra.mxu0 %v4249
            %4489 = vmatprep.subr.mxu0 %v4242
            %4490 = vmatpush1.msra.mxu0 %v4241
            %4491 = vmatprep.subr.mxu0 %v4234
            %4492 = vmatpush1.msra.mxu0 %v4233
            %4493 = vmatprep.subr.mxu0 %v4226
            %4494 = vmatpush1.msra.mxu0 %v4225
            %4495 = vmatprep.subr.mxu0 %v4218
            %4496 = vmatpush1.msra.mxu0 %v4217
            %4497 = vmatprep.subr.mxu0 0.0
            %4498 = vmatpush2.msra.mxu0 0.0
            %4499 = vmatprep.subr.mxu0 0.0
            %4500 = vmatpush2.msra.mxu0 0.0
            %4501 = vmatprep.subr.mxu0 0.0
            %4502 = vmatpush2.msra.mxu0 0.0
            %4503 = vmatprep.subr.mxu0 0.0
            %4504 = vmatpush2.msra.mxu0 0.0
            %4505 = vmatprep.subr.mxu0 0.0
            %4506 = vmatpush2.msra.mxu0 0.0
            %4507 = vmatprep.subr.mxu0 0.0
            %4508 = vmatpush2.msra.mxu0 0.0
            %4509 = vmatprep.subr.mxu0 0.0
            %4510 = vmatpush2.msra.mxu0 0.0
            %4511 = vmatprep.subr.mxu0 0.0
            %4512 = vmatpush2.msra.mxu0 0.0
            %4513 = vmatprep.subr.mxu0 0.0
            %4514 = vmatpush2.msra.mxu0 0.0
            %4515 = vmatprep.subr.mxu0 0.0
            %4516 = vmatpush2.msra.mxu0 0.0
            %4517 = vmatprep.subr.mxu0 0.0
            %4518 = vmatpush2.msra.mxu0 0.0
            %4519 = vmatprep.subr.mxu0 0.0
            %4520 = vmatpush2.msra.mxu0 0.0
            %4521 = vmatprep.subr.mxu0 0.0
            %4522 = vmatpush2.msra.mxu0 0.0
            %4523 = vmatprep.subr.mxu0 0.0
            %4524 = vmatpush2.msra.mxu0 0.0
            %4525 = vmatprep.subr.mxu0 0.0
            %4526 = vmatpush2.msra.mxu0 0.0
            %4527 = vmatprep.subr.mxu0 0.0
            %4528 = vmatpush2.msra.mxu0 0.0
            %4529 = vmatprep.mubr.f32.mxu0 0.0
            %4530 = vmatmul.mubr.f32.gmra.mxu0 %v4321
            %v4531 = vpop.f32.mrf.mxu0
            %v4532 = vadd.f32 %v4298, %v4531
            %v4533 = vpop.f32.mrf.mxu0
            %v4534 = vadd.f32 %v4302, %v4533
            %4535 = vdwg.mxu0
            %4536 = vmatprep.subr.mxu0 0.0
            %4537 = vmatpush1.msra.mxu0 0.0
            %4538 = vmatprep.subr.mxu0 0.0
            %4539 = vmatpush1.msra.mxu0 0.0
            %4540 = vmatprep.subr.mxu0 0.0
            %4541 = vmatpush1.msra.mxu0 0.0
            %4542 = vmatprep.subr.mxu0 0.0
            %4543 = vmatpush1.msra.mxu0 0.0
            %4544 = vmatprep.subr.mxu0 0.0
            %4545 = vmatpush1.msra.mxu0 0.0
            %4546 = vmatprep.subr.mxu0 0.0
            %4547 = vmatpush1.msra.mxu0 0.0
            %4548 = vmatprep.subr.mxu0 0.0
            %4549 = vmatpush1.msra.mxu0 0.0
            %4550 = vmatprep.subr.mxu0 0.0
            %4551 = vmatpush1.msra.mxu0 0.0
            %4552 = vmatprep.subr.mxu0 %v4276
            %4553 = vmatpush1.msra.mxu0 %v4275
            %4554 = vmatprep.subr.mxu0 %v4268
            %4555 = vmatpush1.msra.mxu0 %v4267
            %4556 = vmatprep.subr.mxu0 %v4260
            %4557 = vmatpush1.msra.mxu0 %v4259
            %4558 = vmatprep.subr.mxu0 %v4252
            %4559 = vmatpush1.msra.mxu0 %v4251
            %4560 = vmatprep.subr.mxu0 %v4244
            %4561 = vmatpush1.msra.mxu0 %v4243
            %4562 = vmatprep.subr.mxu0 %v4236
            %4563 = vmatpush1.msra.mxu0 %v4235
            %4564 = vmatprep.subr.mxu0 %v4228
            %4565 = vmatpush1.msra.mxu0 %v4227
            %4566 = vmatprep.subr.mxu0 %v4220
            %4567 = vmatpush1.msra.mxu0 %v4219
            %4568 = vmatprep.subr.mxu0 0.0
            %4569 = vmatpush2.msra.mxu0 0.0
            %4570 = vmatprep.subr.mxu0 0.0
            %4571 = vmatpush2.msra.mxu0 0.0
            %4572 = vmatprep.subr.mxu0 0.0
            %4573 = vmatpush2.msra.mxu0 0.0
            %4574 = vmatprep.subr.mxu0 0.0
            %4575 = vmatpush2.msra.mxu0 0.0
            %4576 = vmatprep.subr.mxu0 0.0
            %4577 = vmatpush2.msra.mxu0 0.0
            %4578 = vmatprep.subr.mxu0 0.0
            %4579 = vmatpush2.msra.mxu0 0.0
            %4580 = vmatprep.subr.mxu0 0.0
            %4581 = vmatpush2.msra.mxu0 0.0
            %4582 = vmatprep.subr.mxu0 0.0
            %4583 = vmatpush2.msra.mxu0 0.0
            %4584 = vmatprep.subr.mxu0 0.0
            %4585 = vmatpush2.msra.mxu0 0.0
            %4586 = vmatprep.subr.mxu0 0.0
            %4587 = vmatpush2.msra.mxu0 0.0
            %4588 = vmatprep.subr.mxu0 0.0
            %4589 = vmatpush2.msra.mxu0 0.0
            %4590 = vmatprep.subr.mxu0 0.0
            %4591 = vmatpush2.msra.mxu0 0.0
            %4592 = vmatprep.subr.mxu0 0.0
            %4593 = vmatpush2.msra.mxu0 0.0
            %4594 = vmatprep.subr.mxu0 0.0
            %4595 = vmatpush2.msra.mxu0 0.0
            %4596 = vmatprep.subr.mxu0 0.0
            %4597 = vmatpush2.msra.mxu0 0.0
            %4598 = vmatprep.subr.mxu0 0.0
            %4599 = vmatpush2.msra.mxu0 0.0
            %4600 = vmatprep.mubr.f32.mxu0 0.0
            %4601 = vmatmul.mubr.f32.gmra.mxu0 %v4321
            %v4602 = vpop.f32.mrf.mxu0
            %v4603 = vadd.f32 %v4306, %v4602
            %v4604 = vpop.f32.mrf.mxu0
            %v4605 = vadd.f32 %v4310, %v4604
            %4606 = vdwg.mxu0
            %v4615 = vcombine.low %v4390, %v4392
            %v4616 = vcombine.low %v4461, %v4463
            %v4617 = vcombine.low %v4532, %v4534
            %v4618 = vcombine.low %v4603, %v4605
            %v4620 = vunpack.c.l.s4 1966171168
            %v4621 = vunpack.c.0.s8 %v4620
            %v4622 = vlaneseq
            %v4623 = vshrl.u32 %v4622, 7
            %v4624 = vsub.s32 %v4621, %v4623
            %v4625 = vrot.slane %v4615, %v4624
            %v4627 = vunpack.c.l.s4 1966171168
            %v4628 = vunpack.c.0.s8 %v4627
            %v4629 = vlaneseq
            %v4630 = vshrl.u32 %v4629, 7
            %v4631 = vsub.s32 %v4628, %v4630
            %v4632 = vrot.slane %v4616, %v4631
            %v4634 = vunpack.c.l.s4 1966171168
            %v4635 = vunpack.c.0.s8 %v4634
            %v4636 = vlaneseq
            %v4637 = vshrl.u32 %v4636, 7
            %v4638 = vsub.s32 %v4635, %v4637
            %v4639 = vrot.slane %v4617, %v4638
            %v4641 = vunpack.c.l.s4 1966171168
            %v4642 = vunpack.c.0.s8 %v4641
            %v4643 = vlaneseq
            %v4644 = vshrl.u32 %v4643, 7
            %v4645 = vsub.s32 %v4642, %v4644
            %v4646 = vrot.slane %v4618, %v4645
            %v4647 = vcombine.low %v4625, %v4632
            %v4648 = vcombine.low %v4639, %v4646
            %v4650 = vunpack.c.l.s4 1966171168
            %v4651 = vunpack.c.0.s8 %v4650
            %v4652 = vlaneseq
            %v4653 = vshrl.u32 %v4652, 7
            %v4654 = vsub.s32 %v4651, %v4653
            %v4655 = vrot.slane %v4647, %v4654
            %v4657 = vunpack.c.l.s4 1966171168
            %v4658 = vunpack.c.0.s8 %v4657
            %v4659 = vlaneseq
            %v4660 = vshrl.u32 %v4659, 7
            %v4661 = vsub.s32 %v4658, %v4660
            %v4662 = vrot.slane %v4648, %v4661
            %v4663 = vcombine.low %v4655, %v4662
            %4665 = vst [vmem:[#allocation4] sm:$0xff] %v4663
          $region88: #{tpu_custom_call.1} parent=79 // pred_fallthru
            _
        $region80: #{tpu_custom_call.1} parent=43 // pred_fallthru
          _
        // Predicated region
        $region89: #{tpu_custom_call.1} parent=43 // pred_check
          %p4666 = pneg %p193
        $region90: #{tpu_custom_call.1} parent=43 // pred_check_branch
          %4668 = sbr.rel (%p4666) target = $region92
        $region91: #{tpu_custom_call.1} parent=43 // pred_region
          %s4670 = ssub.s32 128, 128
          %4671 = vsyncadd [#allocation5], %s4670
          %s4673 = sshll.u32 [#allocation4], 4
          %s4674 = int_to_ptr.vmem [resolvable:$true] %s4673
          %4676 = dma.vmem_to_hbm [thread:$0]  %s4674, 128, %s6, [#allocation5]
        $region92: #{tpu_custom_call.1} parent=43 // pred_fallthru
          _
        // Predicated region
        $region93: #{tpu_custom_call.1} parent=43 // pred_check
          %p4677 = pneg %p193
        $region94: #{tpu_custom_call.1} parent=43 // pred_check_branch
          %4679 = sbr.rel (%p4677) target = $region96
        $region95: #{tpu_custom_call.1} parent=43 // pred_region
          %4680 = dma.done [#allocation5], 128
        $region96: #{tpu_custom_call.1} parent=43 // pred_fallthru
          _
      $region44: #{tpu_custom_call.1} parent=5 // pred_fallthru
        _
      %p4681 = scmp.le.s32.totalorder 2, %s13
      // Predicated region
      $region97: #{tpu_custom_call.1} parent=5 // pred_check
        %p4682 = pneg %p4681
      $region98: #{tpu_custom_call.1} parent=5 // pred_check_branch
        %4684 = sbr.rel (%p4682) target = $region100
      $region99: #{tpu_custom_call.1} parent=5 // pred_region
        %s4685 = ssub.s32 %s13, 2
      $region100: #{tpu_custom_call.1} parent=5 // pred_fallthru
        _
    $region6: #{tpu_custom_call.1} parent=1 // loop_footer
      %s17 = sadd.s32 1, %s13
    $region7: #{tpu_custom_call.1} parent=1 // loop_footer_branch
      %12 = sbr.rel target = $region3
    $region8: #{tpu_custom_call.1} parent=1 // loop_exit
      _
    %4686 = vsyncpa [#allocation5], 1
    %s4687 = scalar_lea.sflag [#allocation5], 1
    %4688 = vsyncpa %s4687, 1

</llo_original>
